<compile_context>
chip_gen: v6e
topology: v6e:2x2x1
jax: 0.10.0
libtpu: 0.0.40
codegen_flags: <defaults>
</compile_context>

<pallas_src>
import jax
import jax.numpy as jnp
from jax.experimental import pallas as pl
from jax.experimental.pallas import tpu as pltpu


def _silu(x):
    return x * jax.nn.sigmoid(x)


def _round_up(x, m):
    return ((x + m - 1) // m) * m


def _pad_to(a, shape):
    """Zero-pad array `a` up to `shape` (trailing padding only)."""
    if tuple(a.shape) == tuple(shape):
        return a
    widths = [(0, t - s) for s, t in zip(a.shape, shape)]
    return jnp.pad(a, widths)


def metanet_kernel(x_ref,
                   win_ref, bin_ref,
                   w11_ref, b11_ref, w12_ref, b12_ref,
                   w21_ref, b21_ref, w22_ref, b22_ref,
                   wout_ref, bout_ref,
                   out_ref):
    x = x_ref[...]  # (tile, n_pad) f32 — zero-padded lanes contribute exactly 0

    # Input projection + SiLU
    h = _silu(jnp.dot(x, win_ref[...], preferred_element_type=jnp.float32)
              + bin_ref[...])

    # Residual block 1: h = silu(h + lin2(drop(silu(lin1(h)))))   (drop = identity, eval mode)
    t = _silu(jnp.dot(h, w11_ref[...], preferred_element_type=jnp.float32)
              + b11_ref[...])
    t = jnp.dot(t, w12_ref[...], preferred_element_type=jnp.float32) + b12_ref[...]
    h = _silu(h + t)

    # Residual block 2
    t = _silu(jnp.dot(h, w21_ref[...], preferred_element_type=jnp.float32)
              + b21_ref[...])
    t = jnp.dot(t, w22_ref[...], preferred_element_type=jnp.float32) + b22_ref[...]
    h = _silu(h + t)

    # Output projection (lane-dense padded output; padded columns are exactly 0)
    out = jnp.dot(h, wout_ref[...], preferred_element_type=jnp.float32) + bout_ref[...]
    out_ref[...] = out.astype(out_ref.dtype)


def metanet_forward(p, params, *, batch_tile=256):
    """p: [B, n_props] float32. params: dict of pre-transposed weights/biases."""
    B, n_props = p.shape
    hidden = params["w_in"].shape[1]

    # Lane-dense padding targets (multiple of 128) and batch padding to a tile multiple.
    n_pad = _round_up(n_props, 128)
    B_pad = _round_up(B, batch_tile)

    # Zero-pad input features/batch and the in/out projection weights.  Zero rows of w_in and
    # zero columns of w_out/b_out make the extra lanes contribute exactly 0.
    p_pad = jnp.zeros((B_pad, n_pad), p.dtype).at[:B, :n_props].set(p)
    w_in = _pad_to(params["w_in"], (n_pad, hidden))
    w_out = _pad_to(params["w_out"], (hidden, n_pad))
    b_out = _pad_to(params["b_out"], (1, n_pad))

    weight_args = (
        w_in, params["b_in"],
        params["w11"], params["b11"], params["w12"], params["b12"],
        params["w21"], params["b21"], params["w22"], params["b22"],
        w_out, b_out,
    )

    def const_spec(a):
        # Whole-array block, same block every grid step -> fetched once, resident in VMEM.
        return pl.BlockSpec(a.shape, lambda i: (0, 0))

    grid = (B_pad // batch_tile,)   # >= 2 steps in the demo -> both v7x TCs get work

    out_pad = pl.pallas_call(
        metanet_kernel,
        out_shape=jax.ShapeDtypeStruct((B_pad, n_pad), p.dtype),
        grid_spec=pl.GridSpec(
            grid=grid,
            in_specs=[pl.BlockSpec((batch_tile, n_pad), lambda i: (i, 0))]
                     + [const_spec(a) for a in weight_args],
            out_specs=pl.BlockSpec((batch_tile, n_pad), lambda i: (i, 0)),
        ),
        compiler_params=pltpu.CompilerParams(
            dimension_semantics=("parallel",)),
    )(p_pad, *weight_args)

    return out_pad[:B, :n_props]


def init_params(key, n_props, hidden):
    """Deterministic init mimicking PyTorch Linear defaults (uniform +-1/sqrt(fan_in)).
    Weights are stored TRANSPOSED ([in, out]); biases as [1, out] for TPU-friendly bcast."""
    def linear(key, fan_in, fan_out):
        kw, kb = jax.random.split(key)
        bound = 1.0 / jnp.sqrt(fan_in)
        w = jax.random.uniform(kw, (fan_in, fan_out), jnp.float32, -bound, bound)
        b = jax.random.uniform(kb, (1, fan_out), jnp.float32, -bound, bound)
        return w, b

    keys = jax.random.split(key, 6)
    w_in, b_in = linear(keys[0], n_props, hidden)
    w11, b11 = linear(keys[1], hidden, hidden)
    w12, b12 = linear(keys[2], hidden, hidden)
    w21, b21 = linear(keys[3], hidden, hidden)
    w22, b22 = linear(keys[4], hidden, hidden)
    w_out, b_out = linear(keys[5], hidden, n_props)
    return dict(w_in=w_in, b_in=b_in,
                w11=w11, b11=b11, w12=w12, b12=b12,
                w21=w21, b21=b21, w22=w22, b22=b22,
                w_out=w_out, b_out=b_out)


def metanet_reference(p, params):
    """Pure-JAX reference matching the PyTorch forward (eval mode), on the UNPADDED params."""
    h = _silu(p @ params["w_in"] + params["b_in"])
    t = _silu(h @ params["w11"] + params["b11"])
    t = t @ params["w12"] + params["b12"]
    h = _silu(h + t)
    t = _silu(h @ params["w21"] + params["b21"])
    t = t @ params["w22"] + params["b22"]
    h = _silu(h + t)
    return h @ params["w_out"] + params["b_out"]


if __name__ == "__main__":
    # MetaNet(n_props=4) with module defaults hidden=128, depth=2.
    # B=512 with batch_tile=256 -> grid=(2,) parallel steps (keeps both v7x TensorCores busy).
    B, n_props, hidden = 512, 4, 128

    key = jax.random.PRNGKey(0)
    k_x, k_p = jax.random.split(key)
    p = jax.random.normal(k_x, (B, n_props), jnp.float32)
    params = init_params(k_p, n_props, hidden)

    out = metanet_forward(p, params, batch_tile=256)
    out = jax.block_until_ready(out)

    ref = metanet_reference(p, params)
    assert out.shape == (B, n_props)
    assert jnp.allclose(out, ref, atol=1e-4, rtol=1e-4)

    # TODO(synk): training-mode nn.Dropout (RNG masking) not implemented; eval-mode identity used.
    print("KERNEL_OK")
</pallas_src>

<mosaic_0001>
module attributes {stable_mosaic.version = 11 : i64} {
  func.func @metanet_kernel(%arg0: i32, %arg1: memref<256x128xf32, #tpu.memory_space<vmem>>, %arg2: memref<128x128xf32, #tpu.memory_space<vmem>>, %arg3: memref<1x128xf32, #tpu.memory_space<vmem>>, %arg4: memref<128x128xf32, #tpu.memory_space<vmem>>, %arg5: memref<1x128xf32, #tpu.memory_space<vmem>>, %arg6: memref<128x128xf32, #tpu.memory_space<vmem>>, %arg7: memref<1x128xf32, #tpu.memory_space<vmem>>, %arg8: memref<128x128xf32, #tpu.memory_space<vmem>>, %arg9: memref<1x128xf32, #tpu.memory_space<vmem>>, %arg10: memref<128x128xf32, #tpu.memory_space<vmem>>, %arg11: memref<1x128xf32, #tpu.memory_space<vmem>>, %arg12: memref<128x128xf32, #tpu.memory_space<vmem>>, %arg13: memref<1x128xf32, #tpu.memory_space<vmem>>, %arg14: memref<256x128xf32, #tpu.memory_space<vmem>>) attributes {dimension_semantics = [#tpu.dimension_semantics<parallel>], iteration_bounds = array<i64: 2>, scalar_prefetch = 0 : i64, scratch_operands = 0 : i64, tpu.core_type = #tpu.core_type<tc>, window_params = [{transform_indices = @transform_0, window_bounds = array<i64: 256, 128>}, {pipeline_mode = #tpu.pipeline_mode<synchronous>, transform_indices = @transform_1, window_bounds = array<i64: 128, 128>}, {pipeline_mode = #tpu.pipeline_mode<synchronous>, transform_indices = @transform_2, window_bounds = array<i64: 1, 128>}, {pipeline_mode = #tpu.pipeline_mode<synchronous>, transform_indices = @transform_3, window_bounds = array<i64: 128, 128>}, {pipeline_mode = #tpu.pipeline_mode<synchronous>, transform_indices = @transform_4, window_bounds = array<i64: 1, 128>}, {pipeline_mode = #tpu.pipeline_mode<synchronous>, transform_indices = @transform_5, window_bounds = array<i64: 128, 128>}, {pipeline_mode = #tpu.pipeline_mode<synchronous>, transform_indices = @transform_6, window_bounds = array<i64: 1, 128>}, {pipeline_mode = #tpu.pipeline_mode<synchronous>, transform_indices = @transform_7, window_bounds = array<i64: 128, 128>}, {pipeline_mode = #tpu.pipeline_mode<synchronous>, transform_indices = @transform_8, window_bounds = array<i64: 1, 128>}, {pipeline_mode = #tpu.pipeline_mode<synchronous>, transform_indices = @transform_9, window_bounds = array<i64: 128, 128>}, {pipeline_mode = #tpu.pipeline_mode<synchronous>, transform_indices = @transform_10, window_bounds = array<i64: 1, 128>}, {pipeline_mode = #tpu.pipeline_mode<synchronous>, transform_indices = @transform_11, window_bounds = array<i64: 128, 128>}, {pipeline_mode = #tpu.pipeline_mode<synchronous>, transform_indices = @transform_12, window_bounds = array<i64: 1, 128>}, {transform_indices = @transform_13, window_bounds = array<i64: 256, 128>}]} {
    %c0 = arith.constant 0 : index
    %c0_0 = arith.constant 0 : index
    %0 = vector.load %arg1[%c0, %c0_0] : memref<256x128xf32, #tpu.memory_space<vmem>>, vector<256x128xf32>
    %c0_1 = arith.constant 0 : index
    %c0_2 = arith.constant 0 : index
    %1 = vector.load %arg2[%c0_1, %c0_2] : memref<128x128xf32, #tpu.memory_space<vmem>>, vector<128x128xf32>
    %cst = arith.constant dense<0.000000e+00> : vector<256x128xf32>
    %2 = tpu.matmul %0, %1, %cst {dimension_numbers = #tpu.dot_dimension_numbers<[1], [0], [0], [1], [0, 0, 1, 1], [], []>} : vector<256x128xf32>, vector<128x128xf32>, vector<256x128xf32> -> vector<256x128xf32>
    %c0_3 = arith.constant 0 : index
    %c0_4 = arith.constant 0 : index
    %3 = vector.load %arg3[%c0_3, %c0_4] : memref<1x128xf32, #tpu.memory_space<vmem>>, vector<1x128xf32>
    %4 = vector.broadcast %3 : vector<1x128xf32> to vector<256x128xf32>
    %5 = arith.addf %2, %4 : vector<256x128xf32>
    %6 = arith.negf %5 : vector<256x128xf32>
    %7 = math.exp %6 : vector<256x128xf32>
    %cst_5 = arith.constant 1.000000e+00 : f32
    %8 = vector.broadcast %cst_5 : f32 to vector<256x128xf32>
    %9 = arith.addf %8, %7 : vector<256x128xf32>
    %10 = arith.divf %8, %9 : vector<256x128xf32>
    %11 = arith.mulf %5, %10 : vector<256x128xf32>
    %c0_6 = arith.constant 0 : index
    %c0_7 = arith.constant 0 : index
    %12 = vector.load %arg4[%c0_6, %c0_7] : memref<128x128xf32, #tpu.memory_space<vmem>>, vector<128x128xf32>
    %cst_8 = arith.constant dense<0.000000e+00> : vector<256x128xf32>
    %13 = tpu.matmul %11, %12, %cst_8 {dimension_numbers = #tpu.dot_dimension_numbers<[1], [0], [0], [1], [0, 0, 1, 1], [], []>} : vector<256x128xf32>, vector<128x128xf32>, vector<256x128xf32> -> vector<256x128xf32>
    %c0_9 = arith.constant 0 : index
    %c0_10 = arith.constant 0 : index
    %14 = vector.load %arg5[%c0_9, %c0_10] : memref<1x128xf32, #tpu.memory_space<vmem>>, vector<1x128xf32>
    %15 = vector.broadcast %14 : vector<1x128xf32> to vector<256x128xf32>
    %16 = arith.addf %13, %15 : vector<256x128xf32>
    %17 = arith.negf %16 : vector<256x128xf32>
    %18 = math.exp %17 : vector<256x128xf32>
    %cst_11 = arith.constant 1.000000e+00 : f32
    %19 = vector.broadcast %cst_11 : f32 to vector<256x128xf32>
    %20 = arith.addf %19, %18 : vector<256x128xf32>
    %21 = arith.divf %19, %20 : vector<256x128xf32>
    %22 = arith.mulf %16, %21 : vector<256x128xf32>
    %c0_12 = arith.constant 0 : index
    %c0_13 = arith.constant 0 : index
    %23 = vector.load %arg6[%c0_12, %c0_13] : memref<128x128xf32, #tpu.memory_space<vmem>>, vector<128x128xf32>
    %cst_14 = arith.constant dense<0.000000e+00> : vector<256x128xf32>
    %24 = tpu.matmul %22, %23, %cst_14 {dimension_numbers = #tpu.dot_dimension_numbers<[1], [0], [0], [1], [0, 0, 1, 1], [], []>} : vector<256x128xf32>, vector<128x128xf32>, vector<256x128xf32> -> vector<256x128xf32>
    %c0_15 = arith.constant 0 : index
    %c0_16 = arith.constant 0 : index
    %25 = vector.load %arg7[%c0_15, %c0_16] : memref<1x128xf32, #tpu.memory_space<vmem>>, vector<1x128xf32>
    %26 = vector.broadcast %25 : vector<1x128xf32> to vector<256x128xf32>
    %27 = arith.addf %24, %26 : vector<256x128xf32>
    %28 = arith.addf %11, %27 : vector<256x128xf32>
    %29 = arith.negf %28 : vector<256x128xf32>
    %30 = math.exp %29 : vector<256x128xf32>
    %cst_17 = arith.constant 1.000000e+00 : f32
    %31 = vector.broadcast %cst_17 : f32 to vector<256x128xf32>
    %32 = arith.addf %31, %30 : vector<256x128xf32>
    %33 = arith.divf %31, %32 : vector<256x128xf32>
    %34 = arith.mulf %28, %33 : vector<256x128xf32>
    %c0_18 = arith.constant 0 : index
    %c0_19 = arith.constant 0 : index
    %35 = vector.load %arg8[%c0_18, %c0_19] : memref<128x128xf32, #tpu.memory_space<vmem>>, vector<128x128xf32>
    %cst_20 = arith.constant dense<0.000000e+00> : vector<256x128xf32>
    %36 = tpu.matmul %34, %35, %cst_20 {dimension_numbers = #tpu.dot_dimension_numbers<[1], [0], [0], [1], [0, 0, 1, 1], [], []>} : vector<256x128xf32>, vector<128x128xf32>, vector<256x128xf32> -> vector<256x128xf32>
    %c0_21 = arith.constant 0 : index
    %c0_22 = arith.constant 0 : index
    %37 = vector.load %arg9[%c0_21, %c0_22] : memref<1x128xf32, #tpu.memory_space<vmem>>, vector<1x128xf32>
    %38 = vector.broadcast %37 : vector<1x128xf32> to vector<256x128xf32>
    %39 = arith.addf %36, %38 : vector<256x128xf32>
    %40 = arith.negf %39 : vector<256x128xf32>
    %41 = math.exp %40 : vector<256x128xf32>
    %cst_23 = arith.constant 1.000000e+00 : f32
    %42 = vector.broadcast %cst_23 : f32 to vector<256x128xf32>
    %43 = arith.addf %42, %41 : vector<256x128xf32>
    %44 = arith.divf %42, %43 : vector<256x128xf32>
    %45 = arith.mulf %39, %44 : vector<256x128xf32>
    %c0_24 = arith.constant 0 : index
    %c0_25 = arith.constant 0 : index
    %46 = vector.load %arg10[%c0_24, %c0_25] : memref<128x128xf32, #tpu.memory_space<vmem>>, vector<128x128xf32>
    %cst_26 = arith.constant dense<0.000000e+00> : vector<256x128xf32>
    %47 = tpu.matmul %45, %46, %cst_26 {dimension_numbers = #tpu.dot_dimension_numbers<[1], [0], [0], [1], [0, 0, 1, 1], [], []>} : vector<256x128xf32>, vector<128x128xf32>, vector<256x128xf32> -> vector<256x128xf32>
    %c0_27 = arith.constant 0 : index
    %c0_28 = arith.constant 0 : index
    %48 = vector.load %arg11[%c0_27, %c0_28] : memref<1x128xf32, #tpu.memory_space<vmem>>, vector<1x128xf32>
    %49 = vector.broadcast %48 : vector<1x128xf32> to vector<256x128xf32>
    %50 = arith.addf %47, %49 : vector<256x128xf32>
    %51 = arith.addf %34, %50 : vector<256x128xf32>
    %52 = arith.negf %51 : vector<256x128xf32>
    %53 = math.exp %52 : vector<256x128xf32>
    %cst_29 = arith.constant 1.000000e+00 : f32
    %54 = vector.broadcast %cst_29 : f32 to vector<256x128xf32>
    %55 = arith.addf %54, %53 : vector<256x128xf32>
    %56 = arith.divf %54, %55 : vector<256x128xf32>
    %57 = arith.mulf %51, %56 : vector<256x128xf32>
    %c0_30 = arith.constant 0 : index
    %c0_31 = arith.constant 0 : index
    %58 = vector.load %arg12[%c0_30, %c0_31] : memref<128x128xf32, #tpu.memory_space<vmem>>, vector<128x128xf32>
    %cst_32 = arith.constant dense<0.000000e+00> : vector<256x128xf32>
    %59 = tpu.matmul %57, %58, %cst_32 {dimension_numbers = #tpu.dot_dimension_numbers<[1], [0], [0], [1], [0, 0, 1, 1], [], []>} : vector<256x128xf32>, vector<128x128xf32>, vector<256x128xf32> -> vector<256x128xf32>
    %c0_33 = arith.constant 0 : index
    %c0_34 = arith.constant 0 : index
    %60 = vector.load %arg13[%c0_33, %c0_34] : memref<1x128xf32, #tpu.memory_space<vmem>>, vector<1x128xf32>
    %61 = vector.broadcast %60 : vector<1x128xf32> to vector<256x128xf32>
    %62 = arith.addf %59, %61 : vector<256x128xf32>
    %c0_35 = arith.constant 0 : index
    %c0_36 = arith.constant 0 : index
    %63 = vector.load %arg14[%c0_35, %c0_36] : memref<256x128xf32, #tpu.memory_space<vmem>>, vector<256x128xf32>
    tpu.vector_store %arg14[%c0_35, %c0_36], %62 {strides = array<i32>} : memref<256x128xf32, #tpu.memory_space<vmem>>, vector<256x128xf32>,
    return
  }
  func.func @transform_0(%arg0: i32) -> (i32, i32) {
    %c0_i32 = arith.constant 0 : i32
    %c0_i32_0 = arith.constant 0 : i32
    return %arg0, %c0_i32 : i32, i32
  }
  func.func @transform_1(%arg0: i32) -> (i32, i32) {
    %c0_i32 = arith.constant 0 : i32
    %c0_i32_0 = arith.constant 0 : i32
    %c0_i32_1 = arith.constant 0 : i32
    return %c0_i32, %c0_i32_0 : i32, i32
  }
  func.func @transform_2(%arg0: i32) -> (i32, i32) {
    %c0_i32 = arith.constant 0 : i32
    %c0_i32_0 = arith.constant 0 : i32
    %c0_i32_1 = arith.constant 0 : i32
    return %c0_i32, %c0_i32_0 : i32, i32
  }
  func.func @transform_3(%arg0: i32) -> (i32, i32) {
    %c0_i32 = arith.constant 0 : i32
    %c0_i32_0 = arith.constant 0 : i32
    %c0_i32_1 = arith.constant 0 : i32
    return %c0_i32, %c0_i32_0 : i32, i32
  }
  func.func @transform_4(%arg0: i32) -> (i32, i32) {
    %c0_i32 = arith.constant 0 : i32
    %c0_i32_0 = arith.constant 0 : i32
    %c0_i32_1 = arith.constant 0 : i32
    return %c0_i32, %c0_i32_0 : i32, i32
  }
  func.func @transform_5(%arg0: i32) -> (i32, i32) {
    %c0_i32 = arith.constant 0 : i32
    %c0_i32_0 = arith.constant 0 : i32
    %c0_i32_1 = arith.constant 0 : i32
    return %c0_i32, %c0_i32_0 : i32, i32
  }
  func.func @transform_6(%arg0: i32) -> (i32, i32) {
    %c0_i32 = arith.constant 0 : i32
    %c0_i32_0 = arith.constant 0 : i32
    %c0_i32_1 = arith.constant 0 : i32
    return %c0_i32, %c0_i32_0 : i32, i32
  }
  func.func @transform_7(%arg0: i32) -> (i32, i32) {
    %c0_i32 = arith.constant 0 : i32
    %c0_i32_0 = arith.constant 0 : i32
    %c0_i32_1 = arith.constant 0 : i32
    return %c0_i32, %c0_i32_0 : i32, i32
  }
  func.func @transform_8(%arg0: i32) -> (i32, i32) {
    %c0_i32 = arith.constant 0 : i32
    %c0_i32_0 = arith.constant 0 : i32
    %c0_i32_1 = arith.constant 0 : i32
    return %c0_i32, %c0_i32_0 : i32, i32
  }
  func.func @transform_9(%arg0: i32) -> (i32, i32) {
    %c0_i32 = arith.constant 0 : i32
    %c0_i32_0 = arith.constant 0 : i32
    %c0_i32_1 = arith.constant 0 : i32
    return %c0_i32, %c0_i32_0 : i32, i32
  }
  func.func @transform_10(%arg0: i32) -> (i32, i32) {
    %c0_i32 = arith.constant 0 : i32
    %c0_i32_0 = arith.constant 0 : i32
    %c0_i32_1 = arith.constant 0 : i32
    return %c0_i32, %c0_i32_0 : i32, i32
  }
  func.func @transform_11(%arg0: i32) -> (i32, i32) {
    %c0_i32 = arith.constant 0 : i32
    %c0_i32_0 = arith.constant 0 : i32
    %c0_i32_1 = arith.constant 0 : i32
    return %c0_i32, %c0_i32_0 : i32, i32
  }
  func.func @transform_12(%arg0: i32) -> (i32, i32) {
    %c0_i32 = arith.constant 0 : i32
    %c0_i32_0 = arith.constant 0 : i32
    %c0_i32_1 = arith.constant 0 : i32
    return %c0_i32, %c0_i32_0 : i32, i32
  }
  func.func @transform_13(%arg0: i32) -> (i32, i32) {
    %c0_i32 = arith.constant 0 : i32
    %c0_i32_0 = arith.constant 0 : i32
    return %arg0, %c0_i32 : i32, i32
  }
}

</mosaic_0001>

<llo_original>
// kernel: tpu_custom_call.1
$region0: #{tpu_custom_call.1}
  #allocation0 [shape = 'u32[]', space=smem, size = 0x4, offset = 0x4, fixed_abs, tag = 'smem constant byte address 0x4 - core index']
  #allocation1 [shape = 'u32[144,128]{1,0:T(1,128)}', space=vmem, size = 0x12000, scoped, tag = 'internal scratch']
  %s0 = inlined_call_operand.hbm [shape: f32[512,128], index: 0, kind: input, shape index: {}]
  %s1 = inlined_call_operand.hbm [shape: f32[128,128], index: 1, kind: input, shape index: {}]
  %s2 = inlined_call_operand.vmem [shape: f32[1,128], index: 2, kind: input, shape index: {}]
  %s3 = inlined_call_operand.hbm [shape: f32[128,128], index: 3, kind: input, shape index: {}]
  %s4 = inlined_call_operand.vmem [shape: f32[1,128], index: 4, kind: input, shape index: {}]
  %s5 = inlined_call_operand.hbm [shape: f32[128,128], index: 5, kind: input, shape index: {}]
  %s6 = inlined_call_operand.vmem [shape: f32[1,128], index: 6, kind: input, shape index: {}]
  %s7 = inlined_call_operand.hbm [shape: f32[128,128], index: 7, kind: input, shape index: {}]
  %s8 = inlined_call_operand.vmem [shape: f32[1,128], index: 8, kind: input, shape index: {}]
  %s9 = inlined_call_operand.hbm [shape: f32[128,128], index: 9, kind: input, shape index: {}]
  %s10 = inlined_call_operand.vmem [shape: f32[1,128], index: 10, kind: input, shape index: {}]
  %s11 = inlined_call_operand.hbm [shape: f32[128,128], index: 11, kind: input, shape index: {}]
  %s12 = inlined_call_operand.vmem [shape: f32[1,128], index: 12, kind: input, shape index: {}]
  %s13 = inlined_call_operand.hbm [shape: f32[512,128], index: 13, kind: output, shape index: {}]
  %s14 = sld [smem:[#allocation0]]
  $region113: #{tpu_custom_call.1} parent=0
    _
  %s16 = ssub.s32 1, %s14
  %s17 = scalar_select 0, %s16, %s14
  $region1: #{tpu_custom_call.1} parent=0
    #allocation2 [shape = 'u8[262144]{0}', space=vmem, size = 0x40000, scoped, tag = 'input window, operand 0']
    #allocation3 [shape = 's32[2]{0}', space=sflag, size = 0x8, scoped, tag = 'scoped memory for tpu_custom_call.1']
    #allocation4 [shape = 's32[2]{0}', space=sflag, size = 0x8, scoped, tag = 'scoped memory for tpu_custom_call.1']
    #allocation5 [shape = 'u8[65536]{0}', space=vmem, size = 0x10000, scoped, tag = 'input window, operand 1, single buffered']
    #allocation6 [shape = 's32[1]{0}', space=sflag, size = 0x4, scoped, tag = 'scoped memory for tpu_custom_call.1']
    #allocation7 [shape = 'u8[65536]{0}', space=vmem, size = 0x10000, scoped, tag = 'input window, operand 3, single buffered']
    #allocation8 [shape = 'u8[65536]{0}', space=vmem, size = 0x10000, scoped, tag = 'input window, operand 5, single buffered']
    #allocation9 [shape = 's32[1]{0}', space=sflag, size = 0x4, scoped, tag = 'scoped memory for tpu_custom_call.1']
    #allocation10 [shape = 'u8[65536]{0}', space=vmem, size = 0x10000, scoped, tag = 'input window, operand 7, single buffered']
    #allocation11 [shape = 'u8[65536]{0}', space=vmem, size = 0x10000, scoped, tag = 'input window, operand 9, single buffered']
    #allocation12 [shape = 's32[1]{0}', space=sflag, size = 0x4, scoped, tag = 'scoped memory for tpu_custom_call.1']
    #allocation13 [shape = 'u8[65536]{0}', space=vmem, size = 0x10000, scoped, tag = 'input window, operand 11, single buffered']
    #allocation14 [shape = 'u8[262144]{0}', space=vmem, size = 0x40000, scoped, tag = 'output window, operand 0']
    %18 = vsyncpa [#allocation3], 0
    %s19 = scalar_lea.sflag [#allocation3], 1
    %20 = vsyncpa %s19, 0
    %21 = vsyncpa [#allocation6], 0
    %22 = vsyncpa [#allocation9], 0
    %23 = vsyncpa [#allocation12], 0
    %24 = vsyncpa [#allocation4], 0
    %s25 = scalar_lea.sflag [#allocation4], 1
    %26 = vsyncpa %s25, 0
    loop: start=0, step=1, limit=4
    $region2: #{tpu_custom_call.1} parent=1 // loop_pre_header
      _
    $region3: #{tpu_custom_call.1} parent=1 // loop_header
      %s28 = sphi 0, %s32
      %p29 = scmp.ge.s32.totalorder %s28, 4
      %s38 = sphi 0, %s40
      %s41 = sphi 0, %s38
      %s42 = sphi 0, %s41
      %s58 = sphi 0, %s42
      %s62 = sphi 0, %s62
      %s64 = sphi 0, %s62
      %s65 = sphi 0, %s64
      %s79 = sphi 0, %s65
      %s83 = sphi 0, %s83
      %s85 = sphi 0, %s83
      %s86 = sphi 0, %s85
      %s100 = sphi 0, %s86
      %s104 = sphi 0, %s104
      %s106 = sphi 0, %s104
      %s107 = sphi 0, %s106
      %s121 = sphi 0, %s107
      %s125 = sphi 0, %s125
      %s127 = sphi 0, %s125
      %s128 = sphi 0, %s127
      %s142 = sphi 0, %s128
      %s146 = sphi 0, %s146
      %s148 = sphi 0, %s146
      %s149 = sphi 0, %s148
      %s163 = sphi 0, %s149
      %s167 = sphi 0, %s167
      %s169 = sphi 0, %s167
      %s170 = sphi 0, %s169
      %s184 = sphi 0, %s170
      %s188 = sphi 0, %s188
      %s190 = sphi 0, %s188
      %s191 = sphi 0, %s190
      %s205 = sphi 0, %s191
      %s209 = sphi 0, %s209
      %s211 = sphi 0, %s209
      %s212 = sphi 0, %s211
      %s226 = sphi 0, %s212
      %s230 = sphi 0, %s230
      %s232 = sphi 0, %s230
      %s233 = sphi 0, %s232
      %s247 = sphi 0, %s233
      %s251 = sphi 0, %s251
      %s253 = sphi 0, %s251
      %s254 = sphi 0, %s253
      %s268 = sphi 0, %s254
      %s272 = sphi 0, %s272
      %s274 = sphi 0, %s272
      %s275 = sphi 0, %s274
      %s289 = sphi 0, %s275
      %s293 = sphi 0, %s293
      %s295 = sphi 0, %s293
      %s296 = sphi 0, %s295
      %s310 = sphi 0, %s296
      %s316 = sphi 0, %s318
      %s319 = sphi 0, %s316
      %s320 = sphi 0, %s319
      %s336 = sphi 0, %s320
    $region4: #{tpu_custom_call.1} parent=1 // loop_header_branch
      %31 = sbr.rel (%p29) target = $region8
    $region5: #{tpu_custom_call.1} parent=1 // loop_body
      %s33 = ssub.s32 %s28, 1
      %s34 = ssub.s32 %s28, 2
      %s35 = sadd.s32 %s28, 1
      %s36 = ssub.s32 %s28, %s35
      %p37 = scmp.eq.s32.totalorder %s36, 0
      %s39 = sadd.s32 %s38, 1
      %s40 = scalar_select %p37, %s38, %s39
      %p43 = pneg %p37
      %p44 = scmp.eq.s32.totalorder %s28, 1
      %p45 = por %p43, %p44
      %p46 = scmp.ne.s32.totalorder %s38, %s41
      %p47 = scmp.eq.s32.totalorder %s28, 0
      %p48 = por %p46, %p47
      %p49 = scmp.ne.s32.totalorder %s38, %s41
      %p50 = scmp.eq.s32.totalorder %s33, 1
      %p51 = por %p49, %p50
      %p52 = scmp.ne.s32.totalorder %s41, %s42
      %p53 = scmp.eq.s32.totalorder %s33, 0
      %p54 = por %p52, %p53
      %p55 = scmp.ne.s32.totalorder %s41, %s42
      %p56 = scmp.eq.s32.totalorder %s34, 1
      %p57 = por %p55, %p56
      %p59 = scmp.ne.s32.totalorder %s42, %s58
      %p60 = scmp.eq.s32.totalorder %s34, 0
      %p61 = por %p59, %p60
      %s63 = sadd.s32 %s62, 1
      %p66 = scmp.eq.s32.totalorder %s28, 1
      %p67 = scmp.ne.s32.totalorder %s62, %s64
      %p68 = scmp.eq.s32.totalorder %s28, 0
      %p69 = por %p67, %p68
      %p70 = scmp.ne.s32.totalorder %s62, %s64
      %p71 = scmp.eq.s32.totalorder %s33, 1
      %p72 = por %p70, %p71
      %p73 = scmp.ne.s32.totalorder %s64, %s65
      %p74 = scmp.eq.s32.totalorder %s33, 0
      %p75 = por %p73, %p74
      %p76 = scmp.ne.s32.totalorder %s64, %s65
      %p77 = scmp.eq.s32.totalorder %s34, 1
      %p78 = por %p76, %p77
      %p80 = scmp.ne.s32.totalorder %s65, %s79
      %p81 = scmp.eq.s32.totalorder %s34, 0
      %p82 = por %p80, %p81
      %s84 = sadd.s32 %s83, 1
      %p87 = scmp.eq.s32.totalorder %s28, 1
      %p88 = scmp.ne.s32.totalorder %s83, %s85
      %p89 = scmp.eq.s32.totalorder %s28, 0
      %p90 = por %p88, %p89
      %p91 = scmp.ne.s32.totalorder %s83, %s85
      %p92 = scmp.eq.s32.totalorder %s33, 1
      %p93 = por %p91, %p92
      %p94 = scmp.ne.s32.totalorder %s85, %s86
      %p95 = scmp.eq.s32.totalorder %s33, 0
      %p96 = por %p94, %p95
      %p97 = scmp.ne.s32.totalorder %s85, %s86
      %p98 = scmp.eq.s32.totalorder %s34, 1
      %p99 = por %p97, %p98
      %p101 = scmp.ne.s32.totalorder %s86, %s100
      %p102 = scmp.eq.s32.totalorder %s34, 0
      %p103 = por %p101, %p102
      %s105 = sadd.s32 %s104, 1
      %p108 = scmp.eq.s32.totalorder %s28, 1
      %p109 = scmp.ne.s32.totalorder %s104, %s106
      %p110 = scmp.eq.s32.totalorder %s28, 0
      %p111 = por %p109, %p110
      %p112 = scmp.ne.s32.totalorder %s104, %s106
      %p113 = scmp.eq.s32.totalorder %s33, 1
      %p114 = por %p112, %p113
      %p115 = scmp.ne.s32.totalorder %s106, %s107
      %p116 = scmp.eq.s32.totalorder %s33, 0
      %p117 = por %p115, %p116
      %p118 = scmp.ne.s32.totalorder %s106, %s107
      %p119 = scmp.eq.s32.totalorder %s34, 1
      %p120 = por %p118, %p119
      %p122 = scmp.ne.s32.totalorder %s107, %s121
      %p123 = scmp.eq.s32.totalorder %s34, 0
      %p124 = por %p122, %p123
      %s126 = sadd.s32 %s125, 1
      %p129 = scmp.eq.s32.totalorder %s28, 1
      %p130 = scmp.ne.s32.totalorder %s125, %s127
      %p131 = scmp.eq.s32.totalorder %s28, 0
      %p132 = por %p130, %p131
      %p133 = scmp.ne.s32.totalorder %s125, %s127
      %p134 = scmp.eq.s32.totalorder %s33, 1
      %p135 = por %p133, %p134
      %p136 = scmp.ne.s32.totalorder %s127, %s128
      %p137 = scmp.eq.s32.totalorder %s33, 0
      %p138 = por %p136, %p137
      %p139 = scmp.ne.s32.totalorder %s127, %s128
      %p140 = scmp.eq.s32.totalorder %s34, 1
      %p141 = por %p139, %p140
      %p143 = scmp.ne.s32.totalorder %s128, %s142
      %p144 = scmp.eq.s32.totalorder %s34, 0
      %p145 = por %p143, %p144
      %s147 = sadd.s32 %s146, 1
      %p150 = scmp.eq.s32.totalorder %s28, 1
      %p151 = scmp.ne.s32.totalorder %s146, %s148
      %p152 = scmp.eq.s32.totalorder %s28, 0
      %p153 = por %p151, %p152
      %p154 = scmp.ne.s32.totalorder %s146, %s148
      %p155 = scmp.eq.s32.totalorder %s33, 1
      %p156 = por %p154, %p155
      %p157 = scmp.ne.s32.totalorder %s148, %s149
      %p158 = scmp.eq.s32.totalorder %s33, 0
      %p159 = por %p157, %p158
      %p160 = scmp.ne.s32.totalorder %s148, %s149
      %p161 = scmp.eq.s32.totalorder %s34, 1
      %p162 = por %p160, %p161
      %p164 = scmp.ne.s32.totalorder %s149, %s163
      %p165 = scmp.eq.s32.totalorder %s34, 0
      %p166 = por %p164, %p165
      %s168 = sadd.s32 %s167, 1
      %p171 = scmp.eq.s32.totalorder %s28, 1
      %p172 = scmp.ne.s32.totalorder %s167, %s169
      %p173 = scmp.eq.s32.totalorder %s28, 0
      %p174 = por %p172, %p173
      %p175 = scmp.ne.s32.totalorder %s167, %s169
      %p176 = scmp.eq.s32.totalorder %s33, 1
      %p177 = por %p175, %p176
      %p178 = scmp.ne.s32.totalorder %s169, %s170
      %p179 = scmp.eq.s32.totalorder %s33, 0
      %p180 = por %p178, %p179
      %p181 = scmp.ne.s32.totalorder %s169, %s170
      %p182 = scmp.eq.s32.totalorder %s34, 1
      %p183 = por %p181, %p182
      %p185 = scmp.ne.s32.totalorder %s170, %s184
      %p186 = scmp.eq.s32.totalorder %s34, 0
      %p187 = por %p185, %p186
      %s189 = sadd.s32 %s188, 1
      %p192 = scmp.eq.s32.totalorder %s28, 1
      %p193 = scmp.ne.s32.totalorder %s188, %s190
      %p194 = scmp.eq.s32.totalorder %s28, 0
      %p195 = por %p193, %p194
      %p196 = scmp.ne.s32.totalorder %s188, %s190
      %p197 = scmp.eq.s32.totalorder %s33, 1
      %p198 = por %p196, %p197
      %p199 = scmp.ne.s32.totalorder %s190, %s191
      %p200 = scmp.eq.s32.totalorder %s33, 0
      %p201 = por %p199, %p200
      %p202 = scmp.ne.s32.totalorder %s190, %s191
      %p203 = scmp.eq.s32.totalorder %s34, 1
      %p204 = por %p202, %p203
      %p206 = scmp.ne.s32.totalorder %s191, %s205
      %p207 = scmp.eq.s32.totalorder %s34, 0
      %p208 = por %p206, %p207
      %s210 = sadd.s32 %s209, 1
      %p213 = scmp.eq.s32.totalorder %s28, 1
      %p214 = scmp.ne.s32.totalorder %s209, %s211
      %p215 = scmp.eq.s32.totalorder %s28, 0
      %p216 = por %p214, %p215
      %p217 = scmp.ne.s32.totalorder %s209, %s211
      %p218 = scmp.eq.s32.totalorder %s33, 1
      %p219 = por %p217, %p218
      %p220 = scmp.ne.s32.totalorder %s211, %s212
      %p221 = scmp.eq.s32.totalorder %s33, 0
      %p222 = por %p220, %p221
      %p223 = scmp.ne.s32.totalorder %s211, %s212
      %p224 = scmp.eq.s32.totalorder %s34, 1
      %p225 = por %p223, %p224
      %p227 = scmp.ne.s32.totalorder %s212, %s226
      %p228 = scmp.eq.s32.totalorder %s34, 0
      %p229 = por %p227, %p228
      %s231 = sadd.s32 %s230, 1
      %p234 = scmp.eq.s32.totalorder %s28, 1
      %p235 = scmp.ne.s32.totalorder %s230, %s232
      %p236 = scmp.eq.s32.totalorder %s28, 0
      %p237 = por %p235, %p236
      %p238 = scmp.ne.s32.totalorder %s230, %s232
      %p239 = scmp.eq.s32.totalorder %s33, 1
      %p240 = por %p238, %p239
      %p241 = scmp.ne.s32.totalorder %s232, %s233
      %p242 = scmp.eq.s32.totalorder %s33, 0
      %p243 = por %p241, %p242
      %p244 = scmp.ne.s32.totalorder %s232, %s233
      %p245 = scmp.eq.s32.totalorder %s34, 1
      %p246 = por %p244, %p245
      %p248 = scmp.ne.s32.totalorder %s233, %s247
      %p249 = scmp.eq.s32.totalorder %s34, 0
      %p250 = por %p248, %p249
      %s252 = sadd.s32 %s251, 1
      %p255 = scmp.eq.s32.totalorder %s28, 1
      %p256 = scmp.ne.s32.totalorder %s251, %s253
      %p257 = scmp.eq.s32.totalorder %s28, 0
      %p258 = por %p256, %p257
      %p259 = scmp.ne.s32.totalorder %s251, %s253
      %p260 = scmp.eq.s32.totalorder %s33, 1
      %p261 = por %p259, %p260
      %p262 = scmp.ne.s32.totalorder %s253, %s254
      %p263 = scmp.eq.s32.totalorder %s33, 0
      %p264 = por %p262, %p263
      %p265 = scmp.ne.s32.totalorder %s253, %s254
      %p266 = scmp.eq.s32.totalorder %s34, 1
      %p267 = por %p265, %p266
      %p269 = scmp.ne.s32.totalorder %s254, %s268
      %p270 = scmp.eq.s32.totalorder %s34, 0
      %p271 = por %p269, %p270
      %s273 = sadd.s32 %s272, 1
      %p276 = scmp.eq.s32.totalorder %s28, 1
      %p277 = scmp.ne.s32.totalorder %s272, %s274
      %p278 = scmp.eq.s32.totalorder %s28, 0
      %p279 = por %p277, %p278
      %p280 = scmp.ne.s32.totalorder %s272, %s274
      %p281 = scmp.eq.s32.totalorder %s33, 1
      %p282 = por %p280, %p281
      %p283 = scmp.ne.s32.totalorder %s274, %s275
      %p284 = scmp.eq.s32.totalorder %s33, 0
      %p285 = por %p283, %p284
      %p286 = scmp.ne.s32.totalorder %s274, %s275
      %p287 = scmp.eq.s32.totalorder %s34, 1
      %p288 = por %p286, %p287
      %p290 = scmp.ne.s32.totalorder %s275, %s289
      %p291 = scmp.eq.s32.totalorder %s34, 0
      %p292 = por %p290, %p291
      %s294 = sadd.s32 %s293, 1
      %p297 = scmp.eq.s32.totalorder %s28, 1
      %p298 = scmp.ne.s32.totalorder %s293, %s295
      %p299 = scmp.eq.s32.totalorder %s28, 0
      %p300 = por %p298, %p299
      %p301 = scmp.ne.s32.totalorder %s293, %s295
      %p302 = scmp.eq.s32.totalorder %s33, 1
      %p303 = por %p301, %p302
      %p304 = scmp.ne.s32.totalorder %s295, %s296
      %p305 = scmp.eq.s32.totalorder %s33, 0
      %p306 = por %p304, %p305
      %p307 = scmp.ne.s32.totalorder %s295, %s296
      %p308 = scmp.eq.s32.totalorder %s34, 1
      %p309 = por %p307, %p308
      %p311 = scmp.ne.s32.totalorder %s296, %s310
      %p312 = scmp.eq.s32.totalorder %s34, 0
      %p313 = por %p311, %p312
      %s314 = ssub.s32 %s28, %s35
      %p315 = scmp.eq.s32.totalorder %s314, 0
      %s317 = sadd.s32 %s316, 1
      %s318 = scalar_select %p315, %s316, %s317
      %p321 = pneg %p315
      %p322 = scmp.eq.s32.totalorder %s28, 1
      %p323 = por %p321, %p322
      %p324 = scmp.ne.s32.totalorder %s316, %s319
      %p325 = scmp.eq.s32.totalorder %s28, 0
      %p326 = por %p324, %p325
      %p327 = scmp.ne.s32.totalorder %s316, %s319
      %p328 = scmp.eq.s32.totalorder %s33, 1
      %p329 = por %p327, %p328
      %p330 = scmp.ne.s32.totalorder %s319, %s320
      %p331 = scmp.eq.s32.totalorder %s33, 0
      %p332 = por %p330, %p331
      %p333 = scmp.ne.s32.totalorder %s319, %s320
      %p334 = scmp.eq.s32.totalorder %s34, 1
      %p335 = por %p333, %p334
      %p337 = scmp.ne.s32.totalorder %s320, %s336
      %p338 = scmp.eq.s32.totalorder %s34, 0
      %p339 = por %p337, %p338
      %p340 = scmp.le.s32.totalorder 1, %s28
      %p341 = scmp.lt.s32.totalorder %s28, 3
      %p342 = pnand %p340, %p341
      %p343 = pneg %p342
      // Predicated region
      $region9: #{tpu_custom_call.1} parent=5 // pred_check
        _
      $region10: #{tpu_custom_call.1} parent=5 // pred_check_branch
        %345 = sbr.rel (%p342) target = $region12
      $region11: #{tpu_custom_call.1} parent=5 // pred_region
        %s346 = ssub.s32 %s28, 1
        // Predicated region
        $region13: #{tpu_custom_call.1} parent=11 // pred_check
          %p347 = pneg %p75
        $region14: #{tpu_custom_call.1} parent=11 // pred_check_branch
          %349 = sbr.rel (%p347) target = $region16
        $region15: #{tpu_custom_call.1} parent=11 // pred_region
          %s351 = ssub.s32 2048, 2048
          %352 = vsyncadd [#allocation6], %s351
          %s353 = sshll.u32 [#allocation5], 4
          %s354 = int_to_ptr.vmem [resolvable:$true] %s353
          %359 = dma.hbm_to_vmem [thread:$0]  %s1, 2048, %s354, [#allocation6], 128, 128, 8
        $region16: #{tpu_custom_call.1} parent=11 // pred_fallthru
          _
        // Predicated region
        $region17: #{tpu_custom_call.1} parent=11 // pred_check
          %p360 = pneg %p96
        $region18: #{tpu_custom_call.1} parent=11 // pred_check_branch
          %362 = sbr.rel (%p360) target = $region20
        $region19: #{tpu_custom_call.1} parent=11 // pred_region
          _
        $region20: #{tpu_custom_call.1} parent=11 // pred_fallthru
          _
        // Predicated region
        $region21: #{tpu_custom_call.1} parent=11 // pred_check
          %p363 = pneg %p117
        $region22: #{tpu_custom_call.1} parent=11 // pred_check_branch
          %365 = sbr.rel (%p363) target = $region24
        $region23: #{tpu_custom_call.1} parent=11 // pred_region
          %s367 = ssub.s32 2048, 2048
          %368 = vsyncadd [#allocation6], %s367
          %s369 = sshll.u32 [#allocation7], 4
          %s370 = int_to_ptr.vmem [resolvable:$true] %s369
          %375 = dma.hbm_to_vmem [thread:$0]  %s3, 2048, %s370, [#allocation6], 128, 128, 8
        $region24: #{tpu_custom_call.1} parent=11 // pred_fallthru
          _
        // Predicated region
        $region25: #{tpu_custom_call.1} parent=11 // pred_check
          %p376 = pneg %p138
        $region26: #{tpu_custom_call.1} parent=11 // pred_check_branch
          %378 = sbr.rel (%p376) target = $region28
        $region27: #{tpu_custom_call.1} parent=11 // pred_region
          _
        $region28: #{tpu_custom_call.1} parent=11 // pred_fallthru
          _
        // Predicated region
        $region29: #{tpu_custom_call.1} parent=11 // pred_check
          %p379 = pneg %p159
        $region30: #{tpu_custom_call.1} parent=11 // pred_check_branch
          %381 = sbr.rel (%p379) target = $region32
        $region31: #{tpu_custom_call.1} parent=11 // pred_region
          %s383 = ssub.s32 2048, 2048
          %384 = vsyncadd [#allocation9], %s383
          %s385 = sshll.u32 [#allocation8], 4
          %s386 = int_to_ptr.vmem [resolvable:$true] %s385
          %391 = dma.hbm_to_vmem [thread:$0]  %s5, 2048, %s386, [#allocation9], 128, 128, 8
        $region32: #{tpu_custom_call.1} parent=11 // pred_fallthru
          _
        // Predicated region
        $region33: #{tpu_custom_call.1} parent=11 // pred_check
          %p392 = pneg %p180
        $region34: #{tpu_custom_call.1} parent=11 // pred_check_branch
          %394 = sbr.rel (%p392) target = $region36
        $region35: #{tpu_custom_call.1} parent=11 // pred_region
          _
        $region36: #{tpu_custom_call.1} parent=11 // pred_fallthru
          _
        // Predicated region
        $region37: #{tpu_custom_call.1} parent=11 // pred_check
          %p395 = pneg %p201
        $region38: #{tpu_custom_call.1} parent=11 // pred_check_branch
          %397 = sbr.rel (%p395) target = $region40
        $region39: #{tpu_custom_call.1} parent=11 // pred_region
          %s399 = ssub.s32 2048, 2048
          %400 = vsyncadd [#allocation9], %s399
          %s401 = sshll.u32 [#allocation10], 4
          %s402 = int_to_ptr.vmem [resolvable:$true] %s401
          %407 = dma.hbm_to_vmem [thread:$0]  %s7, 2048, %s402, [#allocation9], 128, 128, 8
        $region40: #{tpu_custom_call.1} parent=11 // pred_fallthru
          _
        // Predicated region
        $region41: #{tpu_custom_call.1} parent=11 // pred_check
          %p408 = pneg %p222
        $region42: #{tpu_custom_call.1} parent=11 // pred_check_branch
          %410 = sbr.rel (%p408) target = $region44
        $region43: #{tpu_custom_call.1} parent=11 // pred_region
          _
        $region44: #{tpu_custom_call.1} parent=11 // pred_fallthru
          _
        // Predicated region
        $region45: #{tpu_custom_call.1} parent=11 // pred_check
          %p411 = pneg %p243
        $region46: #{tpu_custom_call.1} parent=11 // pred_check_branch
          %413 = sbr.rel (%p411) target = $region48
        $region47: #{tpu_custom_call.1} parent=11 // pred_region
          %s415 = ssub.s32 2048, 2048
          %416 = vsyncadd [#allocation12], %s415
          %s417 = sshll.u32 [#allocation11], 4
          %s418 = int_to_ptr.vmem [resolvable:$true] %s417
          %423 = dma.hbm_to_vmem [thread:$0]  %s9, 2048, %s418, [#allocation12], 128, 128, 8
        $region48: #{tpu_custom_call.1} parent=11 // pred_fallthru
          _
        // Predicated region
        $region49: #{tpu_custom_call.1} parent=11 // pred_check
          %p424 = pneg %p264
        $region50: #{tpu_custom_call.1} parent=11 // pred_check_branch
          %426 = sbr.rel (%p424) target = $region52
        $region51: #{tpu_custom_call.1} parent=11 // pred_region
          _
        $region52: #{tpu_custom_call.1} parent=11 // pred_fallthru
          _
        // Predicated region
        $region53: #{tpu_custom_call.1} parent=11 // pred_check
          %p427 = pneg %p285
        $region54: #{tpu_custom_call.1} parent=11 // pred_check_branch
          %429 = sbr.rel (%p427) target = $region56
        $region55: #{tpu_custom_call.1} parent=11 // pred_region
          %s431 = ssub.s32 2048, 2048
          %432 = vsyncadd [#allocation12], %s431
          %s433 = sshll.u32 [#allocation13], 4
          %s434 = int_to_ptr.vmem [resolvable:$true] %s433
          %439 = dma.hbm_to_vmem [thread:$0]  %s11, 2048, %s434, [#allocation12], 128, 128, 8
        $region56: #{tpu_custom_call.1} parent=11 // pred_fallthru
          _
        // Predicated region
        $region57: #{tpu_custom_call.1} parent=11 // pred_check
          %p440 = pneg %p306
        $region58: #{tpu_custom_call.1} parent=11 // pred_check_branch
          %442 = sbr.rel (%p440) target = $region60
        $region59: #{tpu_custom_call.1} parent=11 // pred_region
          _
        $region60: #{tpu_custom_call.1} parent=11 // pred_fallthru
          _
      $region12: #{tpu_custom_call.1} parent=5 // pred_fallthru
        _
      %p443 = scmp.lt.s32.totalorder %s28, 2
      // Predicated region
      $region61: #{tpu_custom_call.1} parent=5 // pred_check
        %p444 = pneg %p443
      $region62: #{tpu_custom_call.1} parent=5 // pred_check_branch
        %446 = sbr.rel (%p444) target = $region64
      $region63: #{tpu_custom_call.1} parent=5 // pred_region
        // Predicated region
        $region65: #{tpu_custom_call.1} parent=63 // pred_check
          %p447 = pneg %p48
        $region66: #{tpu_custom_call.1} parent=63 // pred_check_branch
          %449 = sbr.rel (%p447) target = $region68
        $region67: #{tpu_custom_call.1} parent=63 // pred_region
          %s450 = sand.u32 %s38, 1
          %s451 = scalar_lea.sflag [#allocation3], %s450
          %s452 = sand.u32 %s38, 1
          %s453 = smul.addr %s452, 256
          %s454 = scalar_lea.vmem [#allocation2], %s453
          %s455 = smul.u32 32, %s28
          %s457 = ssub.s32 4096, 4096
          %458 = vsyncadd %s451, %s457
          %s459 = smul.addr %s455, 128
          %s460 = scalar_lea.hbm %s0, %s459
          %s461 = sshll.u32 %s454, 4
          %s462 = int_to_ptr.vmem [resolvable:$true] %s461
          %467 = dma.hbm_to_vmem [thread:$0]  %s460, 4096, %s462, %s451, 128, 128, 8
        $region68: #{tpu_custom_call.1} parent=63 // pred_fallthru
          _
      $region64: #{tpu_custom_call.1} parent=5 // pred_fallthru
        _
      %p468 = scmp.le.s32.totalorder 1, %s28
      %p469 = scmp.lt.s32.totalorder %s28, 3
      %p470 = pnand %p468, %p469
      %p471 = pneg %p470
      // Predicated region
      $region69: #{tpu_custom_call.1} parent=5 // pred_check
        _
      $region70: #{tpu_custom_call.1} parent=5 // pred_check_branch
        %473 = sbr.rel (%p470) target = $region72
      $region71: #{tpu_custom_call.1} parent=5 // pred_region
        %s474 = ssub.s32 %s28, 1
        %s475 = sand.u32 %s41, 1
        %s476 = scalar_lea.sflag [#allocation3], %s475
        %s477 = sand.u32 %s41, 1
        %s478 = smul.addr %s477, 256
        %s479 = scalar_lea.vmem [#allocation2], %s478
        // Predicated region
        $region73: #{tpu_custom_call.1} parent=71 // pred_check
          %p480 = pneg %p54
        $region74: #{tpu_custom_call.1} parent=71 // pred_check_branch
          %482 = sbr.rel (%p480) target = $region76
        $region75: #{tpu_custom_call.1} parent=71 // pred_region
          %483 = dma.done %s476, 4096
        $region76: #{tpu_custom_call.1} parent=71 // pred_fallthru
          _
        // Predicated region
        $region77: #{tpu_custom_call.1} parent=71 // pred_check
          %p484 = pneg %p75
        $region78: #{tpu_custom_call.1} parent=71 // pred_check_branch
          %486 = sbr.rel (%p484) target = $region80
        $region79: #{tpu_custom_call.1} parent=71 // pred_region
          %487 = dma.done [#allocation6], 2048
        $region80: #{tpu_custom_call.1} parent=71 // pred_fallthru
          _
        // Predicated region
        $region81: #{tpu_custom_call.1} parent=71 // pred_check
          %p488 = pneg %p117
        $region82: #{tpu_custom_call.1} parent=71 // pred_check_branch
          %490 = sbr.rel (%p488) target = $region84
        $region83: #{tpu_custom_call.1} parent=71 // pred_region
          %491 = dma.done [#allocation6], 2048
        $region84: #{tpu_custom_call.1} parent=71 // pred_fallthru
          _
        // Predicated region
        $region85: #{tpu_custom_call.1} parent=71 // pred_check
          %p492 = pneg %p159
        $region86: #{tpu_custom_call.1} parent=71 // pred_check_branch
          %494 = sbr.rel (%p492) target = $region88
        $region87: #{tpu_custom_call.1} parent=71 // pred_region
          %495 = dma.done [#allocation9], 2048
        $region88: #{tpu_custom_call.1} parent=71 // pred_fallthru
          _
        // Predicated region
        $region89: #{tpu_custom_call.1} parent=71 // pred_check
          %p496 = pneg %p201
        $region90: #{tpu_custom_call.1} parent=71 // pred_check_branch
          %498 = sbr.rel (%p496) target = $region92
        $region91: #{tpu_custom_call.1} parent=71 // pred_region
          %499 = dma.done [#allocation9], 2048
        $region92: #{tpu_custom_call.1} parent=71 // pred_fallthru
          _
        // Predicated region
        $region93: #{tpu_custom_call.1} parent=71 // pred_check
          %p500 = pneg %p243
        $region94: #{tpu_custom_call.1} parent=71 // pred_check_branch
          %502 = sbr.rel (%p500) target = $region96
        $region95: #{tpu_custom_call.1} parent=71 // pred_region
          %503 = dma.done [#allocation12], 2048
        $region96: #{tpu_custom_call.1} parent=71 // pred_fallthru
          _
        // Predicated region
        $region97: #{tpu_custom_call.1} parent=71 // pred_check
          %p504 = pneg %p285
        $region98: #{tpu_custom_call.1} parent=71 // pred_check_branch
          %506 = sbr.rel (%p504) target = $region100
        $region99: #{tpu_custom_call.1} parent=71 // pred_region
          %507 = dma.done [#allocation12], 2048
        $region100: #{tpu_custom_call.1} parent=71 // pred_fallthru
          _
        %s508 = sand.u32 %s41, 1
        %s509 = scalar_lea.sflag [#allocation3], %s508
        %s510 = sand.u32 %s41, 1
        %s511 = smul.addr %s510, 256
        %s512 = scalar_lea.vmem [#allocation2], %s511
        %p513 = pneg %p54
        %p514 = pneg %p51
        %p515 = pneg %p75
        %p516 = pneg %p72
        %p517 = pneg %p96
        %p518 = pneg %p93
        %p519 = pneg %p117
        %p520 = pneg %p114
        %p521 = pneg %p138
        %p522 = pneg %p135
        %p523 = pneg %p159
        %p524 = pneg %p156
        %p525 = pneg %p180
        %p526 = pneg %p177
        %p527 = pneg %p201
        %p528 = pneg %p198
        %p529 = pneg %p222
        %p530 = pneg %p219
        %p531 = pneg %p243
        %p532 = pneg %p240
        %p533 = pneg %p264
        %p534 = pneg %p261
        %p535 = pneg %p285
        %p536 = pneg %p282
        %p537 = pneg %p306
        %p538 = pneg %p303
        %p539 = pneg %p332
        %p540 = pneg %p329
        %s541 = sand.u32 %s319, 1
        %s542 = scalar_lea.sflag [#allocation4], %s541
        %s543 = sand.u32 %s319, 1
        %s544 = smul.addr %s543, 256
        %s545 = scalar_lea.vmem [#allocation14], %s544
        %s546 = smul.u32 32, %s33
        %s547 = smul.u32 32, %s33
        %v548 = vld [vmem:[%s479] sm:$0xff]
        %v549 = vld [vmem:[%s479 + $0x8] sm:$0xff]
        %v550 = vld [vmem:[%s479 + $0x10] sm:$0xff]
        %v551 = vld [vmem:[%s479 + $0x18] sm:$0xff]
        %v552 = vld [vmem:[%s479 + $0x20] sm:$0xff]
        %v553 = vld [vmem:[%s479 + $0x28] sm:$0xff]
        %v554 = vld [vmem:[%s479 + $0x30] sm:$0xff]
        %v555 = vld [vmem:[%s479 + $0x38] sm:$0xff]
        %v556 = vld [vmem:[%s479 + $0x40] sm:$0xff]
        %v557 = vld [vmem:[%s479 + $0x48] sm:$0xff]
        %v558 = vld [vmem:[%s479 + $0x50] sm:$0xff]
        %v559 = vld [vmem:[%s479 + $0x58] sm:$0xff]
        %v560 = vld [vmem:[%s479 + $0x60] sm:$0xff]
        %v561 = vld [vmem:[%s479 + $0x68] sm:$0xff]
        %v562 = vld [vmem:[%s479 + $0x70] sm:$0xff]
        %v563 = vld [vmem:[%s479 + $0x78] sm:$0xff]
        %v564 = vld [vmem:[%s479 + $0x80] sm:$0xff]
        %v565 = vld [vmem:[%s479 + $0x88] sm:$0xff]
        %v566 = vld [vmem:[%s479 + $0x90] sm:$0xff]
        %v567 = vld [vmem:[%s479 + $0x98] sm:$0xff]
        %v568 = vld [vmem:[%s479 + $0xa0] sm:$0xff]
        %v569 = vld [vmem:[%s479 + $0xa8] sm:$0xff]
        %v570 = vld [vmem:[%s479 + $0xb0] sm:$0xff]
        %v571 = vld [vmem:[%s479 + $0xb8] sm:$0xff]
        %v572 = vld [vmem:[%s479 + $0xc0] sm:$0xff]
        %v573 = vld [vmem:[%s479 + $0xc8] sm:$0xff]
        %v574 = vld [vmem:[%s479 + $0xd0] sm:$0xff]
        %v575 = vld [vmem:[%s479 + $0xd8] sm:$0xff]
        %v576 = vld [vmem:[%s479 + $0xe0] sm:$0xff]
        %v577 = vld [vmem:[%s479 + $0xe8] sm:$0xff]
        %v578 = vld [vmem:[%s479 + $0xf0] sm:$0xff]
        %v579 = vld [vmem:[%s479 + $0xf8] sm:$0xff]
        %v580 = vld [vmem:[#allocation5] sm:$0xff]
        %v581 = vld [vmem:[#allocation5 + $0x8] sm:$0xff]
        %v582 = vld [vmem:[#allocation5 + $0x10] sm:$0xff]
        %v583 = vld [vmem:[#allocation5 + $0x18] sm:$0xff]
        %v584 = vld [vmem:[#allocation5 + $0x20] sm:$0xff]
        %v585 = vld [vmem:[#allocation5 + $0x28] sm:$0xff]
        %v586 = vld [vmem:[#allocation5 + $0x30] sm:$0xff]
        %v587 = vld [vmem:[#allocation5 + $0x38] sm:$0xff]
        %v588 = vld [vmem:[#allocation5 + $0x40] sm:$0xff]
        %v589 = vld [vmem:[#allocation5 + $0x48] sm:$0xff]
        %v590 = vld [vmem:[#allocation5 + $0x50] sm:$0xff]
        %v591 = vld [vmem:[#allocation5 + $0x58] sm:$0xff]
        %v592 = vld [vmem:[#allocation5 + $0x60] sm:$0xff]
        %v593 = vld [vmem:[#allocation5 + $0x68] sm:$0xff]
        %v594 = vld [vmem:[#allocation5 + $0x70] sm:$0xff]
        %v595 = vld [vmem:[#allocation5 + $0x78] sm:$0xff]
        %v596 = vld [vmem:[%s2] sm:$0x1]
        %v598 = vlaneseq
        %v599 = vshrl.u32 %v598, 7
        %v600 = vsub.s32 0, %v599
        %v601 = vrot.slane %v596, %v600
        %603 = vmatprep.subr.mxu0 0.0
        %604 = vmatpush1.msra.mxu0 %v595
        %605 = vmatprep.subr.mxu0 0.0
        %606 = vmatpush1.msra.mxu0 %v594
        %607 = vmatprep.subr.mxu0 0.0
        %608 = vmatpush1.msra.mxu0 %v593
        %609 = vmatprep.subr.mxu0 0.0
        %610 = vmatpush1.msra.mxu0 %v592
        %611 = vmatprep.subr.mxu0 0.0
        %612 = vmatpush1.msra.mxu0 %v591
        %613 = vmatprep.subr.mxu0 0.0
        %614 = vmatpush1.msra.mxu0 %v590
        %615 = vmatprep.subr.mxu0 0.0
        %616 = vmatpush1.msra.mxu0 %v589
        %617 = vmatprep.subr.mxu0 0.0
        %618 = vmatpush1.msra.mxu0 %v588
        %619 = vmatprep.subr.mxu0 0.0
        %620 = vmatpush1.msra.mxu0 %v587
        %621 = vmatprep.subr.mxu0 0.0
        %622 = vmatpush1.msra.mxu0 %v586
        %623 = vmatprep.subr.mxu0 0.0
        %624 = vmatpush1.msra.mxu0 %v585
        %625 = vmatprep.subr.mxu0 0.0
        %626 = vmatpush1.msra.mxu0 %v584
        %627 = vmatprep.subr.mxu0 0.0
        %628 = vmatpush1.msra.mxu0 %v583
        %629 = vmatprep.subr.mxu0 0.0
        %630 = vmatpush1.msra.mxu0 %v582
        %631 = vmatprep.subr.mxu0 0.0
        %632 = vmatpush1.msra.mxu0 %v581
        %633 = vmatprep.subr.mxu0 0.0
        %634 = vmatpush1.msra.mxu0 %v580
        %635 = vmatprep.subr.mxu0 0.0
        %636 = vmatpush2.msra.mxu0 0.0
        %637 = vmatprep.subr.mxu0 0.0
        %638 = vmatpush2.msra.mxu0 0.0
        %639 = vmatprep.subr.mxu0 0.0
        %640 = vmatpush2.msra.mxu0 0.0
        %641 = vmatprep.subr.mxu0 0.0
        %642 = vmatpush2.msra.mxu0 0.0
        %643 = vmatprep.subr.mxu0 0.0
        %644 = vmatpush2.msra.mxu0 0.0
        %645 = vmatprep.subr.mxu0 0.0
        %646 = vmatpush2.msra.mxu0 0.0
        %647 = vmatprep.subr.mxu0 0.0
        %648 = vmatpush2.msra.mxu0 0.0
        %649 = vmatprep.subr.mxu0 0.0
        %650 = vmatpush2.msra.mxu0 0.0
        %651 = vmatprep.subr.mxu0 0.0
        %652 = vmatpush2.msra.mxu0 0.0
        %653 = vmatprep.subr.mxu0 0.0
        %654 = vmatpush2.msra.mxu0 0.0
        %655 = vmatprep.subr.mxu0 0.0
        %656 = vmatpush2.msra.mxu0 0.0
        %657 = vmatprep.subr.mxu0 0.0
        %658 = vmatpush2.msra.mxu0 0.0
        %659 = vmatprep.subr.mxu0 0.0
        %660 = vmatpush2.msra.mxu0 0.0
        %661 = vmatprep.subr.mxu0 0.0
        %662 = vmatpush2.msra.mxu0 0.0
        %663 = vmatprep.subr.mxu0 0.0
        %664 = vmatpush2.msra.mxu0 0.0
        %665 = vmatprep.subr.mxu0 0.0
        %666 = vmatpush2.msra.mxu0 0.0
        %667 = vmatprep.mubr.f32.mxu0 0.0
        %668 = vmatmul.mubr.f32.gmra.mxu0 %v548
        %v669 = vpop.f32.mrf.mxu0
        %v670 = vadd.f32 %v601, %v669
        %v671 = vpop.f32.mrf.mxu0
        %672 = vmatprep.mubr.f32.mxu0 0.0
        %673 = vmatmul.mubr.f32.gmra.mxu0 %v549
        %v674 = vpop.f32.mrf.mxu0
        %v675 = vadd.f32 %v601, %v674
        %v676 = vpop.f32.mrf.mxu0
        %677 = vmatprep.mubr.f32.mxu0 0.0
        %678 = vmatmul.mubr.f32.gmra.mxu0 %v550
        %v679 = vpop.f32.mrf.mxu0
        %v680 = vadd.f32 %v601, %v679
        %v681 = vpop.f32.mrf.mxu0
        %682 = vmatprep.mubr.f32.mxu0 0.0
        %683 = vmatmul.mubr.f32.gmra.mxu0 %v551
        %v684 = vpop.f32.mrf.mxu0
        %v685 = vadd.f32 %v601, %v684
        %v686 = vpop.f32.mrf.mxu0
        %687 = vmatprep.mubr.f32.mxu0 0.0
        %688 = vmatmul.mubr.f32.gmra.mxu0 %v552
        %v689 = vpop.f32.mrf.mxu0
        %v690 = vadd.f32 %v601, %v689
        %v691 = vpop.f32.mrf.mxu0
        %692 = vmatprep.mubr.f32.mxu0 0.0
        %693 = vmatmul.mubr.f32.gmra.mxu0 %v553
        %v694 = vpop.f32.mrf.mxu0
        %v695 = vadd.f32 %v601, %v694
        %v696 = vpop.f32.mrf.mxu0
        %697 = vmatprep.mubr.f32.mxu0 0.0
        %698 = vmatmul.mubr.f32.gmra.mxu0 %v554
        %v699 = vpop.f32.mrf.mxu0
        %v700 = vadd.f32 %v601, %v699
        %v701 = vpop.f32.mrf.mxu0
        %702 = vmatprep.mubr.f32.mxu0 0.0
        %703 = vmatmul.mubr.f32.gmra.mxu0 %v555
        %v704 = vpop.f32.mrf.mxu0
        %v705 = vadd.f32 %v601, %v704
        %v706 = vpop.f32.mrf.mxu0
        %707 = vmatprep.mubr.f32.mxu0 0.0
        %708 = vmatmul.mubr.f32.gmra.mxu0 %v556
        %v709 = vpop.f32.mrf.mxu0
        %v710 = vadd.f32 %v601, %v709
        %v711 = vpop.f32.mrf.mxu0
        %712 = vmatprep.mubr.f32.mxu0 0.0
        %713 = vmatmul.mubr.f32.gmra.mxu0 %v557
        %v714 = vpop.f32.mrf.mxu0
        %v715 = vadd.f32 %v601, %v714
        %v716 = vpop.f32.mrf.mxu0
        %717 = vmatprep.mubr.f32.mxu0 0.0
        %718 = vmatmul.mubr.f32.gmra.mxu0 %v558
        %v719 = vpop.f32.mrf.mxu0
        %v720 = vadd.f32 %v601, %v719
        %v721 = vpop.f32.mrf.mxu0
        %722 = vmatprep.mubr.f32.mxu0 0.0
        %723 = vmatmul.mubr.f32.gmra.mxu0 %v559
        %v724 = vpop.f32.mrf.mxu0
        %v725 = vadd.f32 %v601, %v724
        %v726 = vpop.f32.mrf.mxu0
        %727 = vmatprep.mubr.f32.mxu0 0.0
        %728 = vmatmul.mubr.f32.gmra.mxu0 %v560
        %v729 = vpop.f32.mrf.mxu0
        %v730 = vadd.f32 %v601, %v729
        %v731 = vpop.f32.mrf.mxu0
        %732 = vmatprep.mubr.f32.mxu0 0.0
        %733 = vmatmul.mubr.f32.gmra.mxu0 %v561
        %v734 = vpop.f32.mrf.mxu0
        %v735 = vadd.f32 %v601, %v734
        %v736 = vpop.f32.mrf.mxu0
        %737 = vmatprep.mubr.f32.mxu0 0.0
        %738 = vmatmul.mubr.f32.gmra.mxu0 %v562
        %v739 = vpop.f32.mrf.mxu0
        %v740 = vadd.f32 %v601, %v739
        %v741 = vpop.f32.mrf.mxu0
        %742 = vmatprep.mubr.f32.mxu0 0.0
        %743 = vmatmul.mubr.f32.gmra.mxu0 %v563
        %v744 = vpop.f32.mrf.mxu0
        %v745 = vadd.f32 %v601, %v744
        %v746 = vpop.f32.mrf.mxu0
        %747 = vmatprep.mubr.f32.mxu0 0.0
        %748 = vmatmul.mubr.f32.gmra.mxu0 %v564
        %v749 = vpop.f32.mrf.mxu0
        %v750 = vadd.f32 %v601, %v749
        %v751 = vpop.f32.mrf.mxu0
        %752 = vmatprep.mubr.f32.mxu0 0.0
        %753 = vmatmul.mubr.f32.gmra.mxu0 %v565
        %v754 = vpop.f32.mrf.mxu0
        %v755 = vadd.f32 %v601, %v754
        %v756 = vpop.f32.mrf.mxu0
        %757 = vmatprep.mubr.f32.mxu0 0.0
        %758 = vmatmul.mubr.f32.gmra.mxu0 %v566
        %v759 = vpop.f32.mrf.mxu0
        %v760 = vadd.f32 %v601, %v759
        %v761 = vpop.f32.mrf.mxu0
        %762 = vmatprep.mubr.f32.mxu0 0.0
        %763 = vmatmul.mubr.f32.gmra.mxu0 %v567
        %v764 = vpop.f32.mrf.mxu0
        %v765 = vadd.f32 %v601, %v764
        %v766 = vpop.f32.mrf.mxu0
        %767 = vmatprep.mubr.f32.mxu0 0.0
        %768 = vmatmul.mubr.f32.gmra.mxu0 %v568
        %v769 = vpop.f32.mrf.mxu0
        %v770 = vadd.f32 %v601, %v769
        %v771 = vpop.f32.mrf.mxu0
        %772 = vmatprep.mubr.f32.mxu0 0.0
        %773 = vmatmul.mubr.f32.gmra.mxu0 %v569
        %v774 = vpop.f32.mrf.mxu0
        %v775 = vadd.f32 %v601, %v774
        %v776 = vpop.f32.mrf.mxu0
        %777 = vmatprep.mubr.f32.mxu0 0.0
        %778 = vmatmul.mubr.f32.gmra.mxu0 %v570
        %v779 = vpop.f32.mrf.mxu0
        %v780 = vadd.f32 %v601, %v779
        %v781 = vpop.f32.mrf.mxu0
        %782 = vmatprep.mubr.f32.mxu0 0.0
        %783 = vmatmul.mubr.f32.gmra.mxu0 %v571
        %v784 = vpop.f32.mrf.mxu0
        %v785 = vadd.f32 %v601, %v784
        %v786 = vpop.f32.mrf.mxu0
        %787 = vmatprep.mubr.f32.mxu0 0.0
        %788 = vmatmul.mubr.f32.gmra.mxu0 %v572
        %v789 = vpop.f32.mrf.mxu0
        %v790 = vadd.f32 %v601, %v789
        %v791 = vpop.f32.mrf.mxu0
        %792 = vmatprep.mubr.f32.mxu0 0.0
        %793 = vmatmul.mubr.f32.gmra.mxu0 %v573
        %v794 = vpop.f32.mrf.mxu0
        %v795 = vadd.f32 %v601, %v794
        %v796 = vpop.f32.mrf.mxu0
        %797 = vmatprep.mubr.f32.mxu0 0.0
        %798 = vmatmul.mubr.f32.gmra.mxu0 %v574
        %v799 = vpop.f32.mrf.mxu0
        %v800 = vadd.f32 %v601, %v799
        %v801 = vpop.f32.mrf.mxu0
        %802 = vmatprep.mubr.f32.mxu0 0.0
        %803 = vmatmul.mubr.f32.gmra.mxu0 %v575
        %v804 = vpop.f32.mrf.mxu0
        %v805 = vadd.f32 %v601, %v804
        %v806 = vpop.f32.mrf.mxu0
        %807 = vmatprep.mubr.f32.mxu0 0.0
        %808 = vmatmul.mubr.f32.gmra.mxu0 %v576
        %v809 = vpop.f32.mrf.mxu0
        %v810 = vadd.f32 %v601, %v809
        %v811 = vpop.f32.mrf.mxu0
        %812 = vmatprep.mubr.f32.mxu0 0.0
        %813 = vmatmul.mubr.f32.gmra.mxu0 %v577
        %v814 = vpop.f32.mrf.mxu0
        %v815 = vadd.f32 %v601, %v814
        %v816 = vpop.f32.mrf.mxu0
        %817 = vmatprep.mubr.f32.mxu0 0.0
        %818 = vmatmul.mubr.f32.gmra.mxu0 %v578
        %v819 = vpop.f32.mrf.mxu0
        %v820 = vadd.f32 %v601, %v819
        %v821 = vpop.f32.mrf.mxu0
        %822 = vmatprep.mubr.f32.mxu0 0.0
        %823 = vmatmul.mubr.f32.gmra.mxu0 %v579
        %v824 = vpop.f32.mrf.mxu0
        %v825 = vadd.f32 %v601, %v824
        %v826 = vpop.f32.mrf.mxu0
        %827 = vdwg.mxu0
        %v828 = vxor.u32 %v670, 2147483648
        %v829 = vxor.u32 %v675, 2147483648
        %v830 = vxor.u32 %v680, 2147483648
        %v831 = vxor.u32 %v685, 2147483648
        %v832 = vxor.u32 %v690, 2147483648
        %v833 = vxor.u32 %v695, 2147483648
        %v834 = vxor.u32 %v700, 2147483648
        %v835 = vxor.u32 %v705, 2147483648
        %v836 = vxor.u32 %v710, 2147483648
        %v837 = vxor.u32 %v715, 2147483648
        %v838 = vxor.u32 %v720, 2147483648
        %v839 = vxor.u32 %v725, 2147483648
        %v840 = vxor.u32 %v730, 2147483648
        %v841 = vxor.u32 %v735, 2147483648
        %v842 = vxor.u32 %v740, 2147483648
        %v843 = vxor.u32 %v745, 2147483648
        %v844 = vxor.u32 %v750, 2147483648
        %v845 = vxor.u32 %v755, 2147483648
        %v846 = vxor.u32 %v760, 2147483648
        %v847 = vxor.u32 %v765, 2147483648
        %v848 = vxor.u32 %v770, 2147483648
        %v849 = vxor.u32 %v775, 2147483648
        %v850 = vxor.u32 %v780, 2147483648
        %v851 = vxor.u32 %v785, 2147483648
        %v852 = vxor.u32 %v790, 2147483648
        %v853 = vxor.u32 %v795, 2147483648
        %v854 = vxor.u32 %v800, 2147483648
        %v855 = vxor.u32 %v805, 2147483648
        %v856 = vxor.u32 %v810, 2147483648
        %v857 = vxor.u32 %v815, 2147483648
        %v858 = vxor.u32 %v820, 2147483648
        %v859 = vxor.u32 %v825, 2147483648
        %v860 = vmul.f32 %v828, 1.442695
        %v861 = vpow.pop %v860
        %v862 = vmul.f32 %v829, 1.442695
        %v863 = vpow.pop %v862
        %v864 = vmul.f32 %v830, 1.442695
        %v865 = vpow.pop %v864
        %v866 = vmul.f32 %v831, 1.442695
        %v867 = vpow.pop %v866
        %v868 = vmul.f32 %v832, 1.442695
        %v869 = vpow.pop %v868
        %v870 = vmul.f32 %v833, 1.442695
        %v871 = vpow.pop %v870
        %v872 = vmul.f32 %v834, 1.442695
        %v873 = vpow.pop %v872
        %v874 = vmul.f32 %v835, 1.442695
        %v875 = vpow.pop %v874
        %v876 = vmul.f32 %v836, 1.442695
        %v877 = vpow.pop %v876
        %v878 = vmul.f32 %v837, 1.442695
        %v879 = vpow.pop %v878
        %v880 = vmul.f32 %v838, 1.442695
        %v881 = vpow.pop %v880
        %v882 = vmul.f32 %v839, 1.442695
        %v883 = vpow.pop %v882
        %v884 = vmul.f32 %v840, 1.442695
        %v885 = vpow.pop %v884
        %v886 = vmul.f32 %v841, 1.442695
        %v887 = vpow.pop %v886
        %v888 = vmul.f32 %v842, 1.442695
        %v889 = vpow.pop %v888
        %v890 = vmul.f32 %v843, 1.442695
        %v891 = vpow.pop %v890
        %v892 = vmul.f32 %v844, 1.442695
        %v893 = vpow.pop %v892
        %v894 = vmul.f32 %v845, 1.442695
        %v895 = vpow.pop %v894
        %v896 = vmul.f32 %v846, 1.442695
        %v897 = vpow.pop %v896
        %v898 = vmul.f32 %v847, 1.442695
        %v899 = vpow.pop %v898
        %v900 = vmul.f32 %v848, 1.442695
        %v901 = vpow.pop %v900
        %v902 = vmul.f32 %v849, 1.442695
        %v903 = vpow.pop %v902
        %v904 = vmul.f32 %v850, 1.442695
        %v905 = vpow.pop %v904
        %v906 = vmul.f32 %v851, 1.442695
        %v907 = vpow.pop %v906
        %v908 = vmul.f32 %v852, 1.442695
        %v909 = vpow.pop %v908
        %v910 = vmul.f32 %v853, 1.442695
        %v911 = vpow.pop %v910
        %v912 = vmul.f32 %v854, 1.442695
        %v913 = vpow.pop %v912
        %v914 = vmul.f32 %v855, 1.442695
        %v915 = vpow.pop %v914
        %v916 = vmul.f32 %v856, 1.442695
        %v917 = vpow.pop %v916
        %v918 = vmul.f32 %v857, 1.442695
        %v919 = vpow.pop %v918
        %v920 = vmul.f32 %v858, 1.442695
        %v921 = vpow.pop %v920
        %v922 = vmul.f32 %v859, 1.442695
        %v923 = vpow.pop %v922
        %v924 = vadd.f32 %v861, 1.0
        %v925 = vadd.f32 %v863, 1.0
        %v926 = vadd.f32 %v865, 1.0
        %v927 = vadd.f32 %v867, 1.0
        %v928 = vadd.f32 %v869, 1.0
        %v929 = vadd.f32 %v871, 1.0
        %v930 = vadd.f32 %v873, 1.0
        %v931 = vadd.f32 %v875, 1.0
        %v932 = vadd.f32 %v877, 1.0
        %v933 = vadd.f32 %v879, 1.0
        %v934 = vadd.f32 %v881, 1.0
        %v935 = vadd.f32 %v883, 1.0
        %v936 = vadd.f32 %v885, 1.0
        %v937 = vadd.f32 %v887, 1.0
        %v938 = vadd.f32 %v889, 1.0
        %v939 = vadd.f32 %v891, 1.0
        %v940 = vadd.f32 %v893, 1.0
        %v941 = vadd.f32 %v895, 1.0
        %v942 = vadd.f32 %v897, 1.0
        %v943 = vadd.f32 %v899, 1.0
        %v944 = vadd.f32 %v901, 1.0
        %v945 = vadd.f32 %v903, 1.0
        %v946 = vadd.f32 %v905, 1.0
        %v947 = vadd.f32 %v907, 1.0
        %v948 = vadd.f32 %v909, 1.0
        %v949 = vadd.f32 %v911, 1.0
        %v950 = vadd.f32 %v913, 1.0
        %v951 = vadd.f32 %v915, 1.0
        %v952 = vadd.f32 %v917, 1.0
        %v953 = vadd.f32 %v919, 1.0
        %v954 = vadd.f32 %v921, 1.0
        %v955 = vadd.f32 %v923, 1.0
        %v956 = vrcp.pop %v924
        %v957 = vmul.f32 1.0, %v956
        %v958 = vrcp.pop %v925
        %v959 = vmul.f32 1.0, %v958
        %v960 = vrcp.pop %v926
        %v961 = vmul.f32 1.0, %v960
        %v962 = vrcp.pop %v927
        %v963 = vmul.f32 1.0, %v962
        %v964 = vrcp.pop %v928
        %v965 = vmul.f32 1.0, %v964
        %v966 = vrcp.pop %v929
        %v967 = vmul.f32 1.0, %v966
        %v968 = vrcp.pop %v930
        %v969 = vmul.f32 1.0, %v968
        %v970 = vrcp.pop %v931
        %v971 = vmul.f32 1.0, %v970
        %v972 = vrcp.pop %v932
        %v973 = vmul.f32 1.0, %v972
        %v974 = vrcp.pop %v933
        %v975 = vmul.f32 1.0, %v974
        %v976 = vrcp.pop %v934
        %v977 = vmul.f32 1.0, %v976
        %v978 = vrcp.pop %v935
        %v979 = vmul.f32 1.0, %v978
        %v980 = vrcp.pop %v936
        %v981 = vmul.f32 1.0, %v980
        %v982 = vrcp.pop %v937
        %v983 = vmul.f32 1.0, %v982
        %v984 = vrcp.pop %v938
        %v985 = vmul.f32 1.0, %v984
        %v986 = vrcp.pop %v939
        %v987 = vmul.f32 1.0, %v986
        %v988 = vrcp.pop %v940
        %v989 = vmul.f32 1.0, %v988
        %v990 = vrcp.pop %v941
        %v991 = vmul.f32 1.0, %v990
        %v992 = vrcp.pop %v942
        %v993 = vmul.f32 1.0, %v992
        %v994 = vrcp.pop %v943
        %v995 = vmul.f32 1.0, %v994
        %v996 = vrcp.pop %v944
        %v997 = vmul.f32 1.0, %v996
        %v998 = vrcp.pop %v945
        %v999 = vmul.f32 1.0, %v998
        %v1000 = vrcp.pop %v946
        %v1001 = vmul.f32 1.0, %v1000
        %v1002 = vrcp.pop %v947
        %v1003 = vmul.f32 1.0, %v1002
        %v1004 = vrcp.pop %v948
        %v1005 = vmul.f32 1.0, %v1004
        %v1006 = vrcp.pop %v949
        %v1007 = vmul.f32 1.0, %v1006
        %v1008 = vrcp.pop %v950
        %v1009 = vmul.f32 1.0, %v1008
        %v1010 = vrcp.pop %v951
        %v1011 = vmul.f32 1.0, %v1010
        %v1012 = vrcp.pop %v952
        %v1013 = vmul.f32 1.0, %v1012
        %v1014 = vrcp.pop %v953
        %v1015 = vmul.f32 1.0, %v1014
        %v1016 = vrcp.pop %v954
        %v1017 = vmul.f32 1.0, %v1016
        %v1018 = vrcp.pop %v955
        %v1019 = vmul.f32 1.0, %v1018
        %v1020 = vmul.f32 %v670, %v957
        %v1021 = vmul.f32 %v675, %v959
        %v1022 = vmul.f32 %v680, %v961
        %v1023 = vmul.f32 %v685, %v963
        %v1024 = vmul.f32 %v690, %v965
        %v1025 = vmul.f32 %v695, %v967
        %v1026 = vmul.f32 %v700, %v969
        %v1027 = vmul.f32 %v705, %v971
        %v1028 = vmul.f32 %v710, %v973
        %v1029 = vmul.f32 %v715, %v975
        %v1030 = vmul.f32 %v720, %v977
        %v1031 = vmul.f32 %v725, %v979
        %v1032 = vmul.f32 %v730, %v981
        %v1033 = vmul.f32 %v735, %v983
        %v1034 = vmul.f32 %v740, %v985
        %v1035 = vmul.f32 %v745, %v987
        %v1036 = vmul.f32 %v750, %v989
        %v1037 = vmul.f32 %v755, %v991
        %v1038 = vmul.f32 %v760, %v993
        %v1039 = vmul.f32 %v765, %v995
        %v1040 = vmul.f32 %v770, %v997
        %v1041 = vmul.f32 %v775, %v999
        %v1042 = vmul.f32 %v780, %v1001
        %v1043 = vmul.f32 %v785, %v1003
        %v1044 = vmul.f32 %v790, %v1005
        %v1045 = vmul.f32 %v795, %v1007
        %v1046 = vmul.f32 %v800, %v1009
        %v1047 = vmul.f32 %v805, %v1011
        %v1048 = vmul.f32 %v810, %v1013
        %v1049 = vmul.f32 %v815, %v1015
        %v1050 = vmul.f32 %v820, %v1017
        %v1051 = vmul.f32 %v825, %v1019
        %v1052 = vld [vmem:[#allocation7] sm:$0xff]
        %v1053 = vld [vmem:[#allocation7 + $0x8] sm:$0xff]
        %v1054 = vld [vmem:[#allocation7 + $0x10] sm:$0xff]
        %v1055 = vld [vmem:[#allocation7 + $0x18] sm:$0xff]
        %v1056 = vld [vmem:[#allocation7 + $0x20] sm:$0xff]
        %v1057 = vld [vmem:[#allocation7 + $0x28] sm:$0xff]
        %v1058 = vld [vmem:[#allocation7 + $0x30] sm:$0xff]
        %v1059 = vld [vmem:[#allocation7 + $0x38] sm:$0xff]
        %v1060 = vld [vmem:[#allocation7 + $0x40] sm:$0xff]
        %v1061 = vld [vmem:[#allocation7 + $0x48] sm:$0xff]
        %v1062 = vld [vmem:[#allocation7 + $0x50] sm:$0xff]
        %v1063 = vld [vmem:[#allocation7 + $0x58] sm:$0xff]
        %v1064 = vld [vmem:[#allocation7 + $0x60] sm:$0xff]
        %v1065 = vld [vmem:[#allocation7 + $0x68] sm:$0xff]
        %v1066 = vld [vmem:[#allocation7 + $0x70] sm:$0xff]
        %v1067 = vld [vmem:[#allocation7 + $0x78] sm:$0xff]
        %v1068 = vld [vmem:[%s4] sm:$0x1]
        %v1070 = vlaneseq
        %v1071 = vshrl.u32 %v1070, 7
        %v1072 = vsub.s32 0, %v1071
        %v1073 = vrot.slane %v1068, %v1072
        %1075 = vmatprep.subr.mxu0 0.0
        %1076 = vmatpush1.msra.mxu0 %v1067
        %1077 = vmatprep.subr.mxu0 0.0
        %1078 = vmatpush1.msra.mxu0 %v1066
        %1079 = vmatprep.subr.mxu0 0.0
        %1080 = vmatpush1.msra.mxu0 %v1065
        %1081 = vmatprep.subr.mxu0 0.0
        %1082 = vmatpush1.msra.mxu0 %v1064
        %1083 = vmatprep.subr.mxu0 0.0
        %1084 = vmatpush1.msra.mxu0 %v1063
        %1085 = vmatprep.subr.mxu0 0.0
        %1086 = vmatpush1.msra.mxu0 %v1062
        %1087 = vmatprep.subr.mxu0 0.0
        %1088 = vmatpush1.msra.mxu0 %v1061
        %1089 = vmatprep.subr.mxu0 0.0
        %1090 = vmatpush1.msra.mxu0 %v1060
        %1091 = vmatprep.subr.mxu0 0.0
        %1092 = vmatpush1.msra.mxu0 %v1059
        %1093 = vmatprep.subr.mxu0 0.0
        %1094 = vmatpush1.msra.mxu0 %v1058
        %1095 = vmatprep.subr.mxu0 0.0
        %1096 = vmatpush1.msra.mxu0 %v1057
        %1097 = vmatprep.subr.mxu0 0.0
        %1098 = vmatpush1.msra.mxu0 %v1056
        %1099 = vmatprep.subr.mxu0 0.0
        %1100 = vmatpush1.msra.mxu0 %v1055
        %1101 = vmatprep.subr.mxu0 0.0
        %1102 = vmatpush1.msra.mxu0 %v1054
        %1103 = vmatprep.subr.mxu0 0.0
        %1104 = vmatpush1.msra.mxu0 %v1053
        %1105 = vmatprep.subr.mxu0 0.0
        %1106 = vmatpush1.msra.mxu0 %v1052
        %1107 = vmatprep.subr.mxu0 0.0
        %1108 = vmatpush2.msra.mxu0 0.0
        %1109 = vmatprep.subr.mxu0 0.0
        %1110 = vmatpush2.msra.mxu0 0.0
        %1111 = vmatprep.subr.mxu0 0.0
        %1112 = vmatpush2.msra.mxu0 0.0
        %1113 = vmatprep.subr.mxu0 0.0
        %1114 = vmatpush2.msra.mxu0 0.0
        %1115 = vmatprep.subr.mxu0 0.0
        %1116 = vmatpush2.msra.mxu0 0.0
        %1117 = vmatprep.subr.mxu0 0.0
        %1118 = vmatpush2.msra.mxu0 0.0
        %1119 = vmatprep.subr.mxu0 0.0
        %1120 = vmatpush2.msra.mxu0 0.0
        %1121 = vmatprep.subr.mxu0 0.0
        %1122 = vmatpush2.msra.mxu0 0.0
        %1123 = vmatprep.subr.mxu0 0.0
        %1124 = vmatpush2.msra.mxu0 0.0
        %1125 = vmatprep.subr.mxu0 0.0
        %1126 = vmatpush2.msra.mxu0 0.0
        %1127 = vmatprep.subr.mxu0 0.0
        %1128 = vmatpush2.msra.mxu0 0.0
        %1129 = vmatprep.subr.mxu0 0.0
        %1130 = vmatpush2.msra.mxu0 0.0
        %1131 = vmatprep.subr.mxu0 0.0
        %1132 = vmatpush2.msra.mxu0 0.0
        %1133 = vmatprep.subr.mxu0 0.0
        %1134 = vmatpush2.msra.mxu0 0.0
        %1135 = vmatprep.subr.mxu0 0.0
        %1136 = vmatpush2.msra.mxu0 0.0
        %1137 = vmatprep.subr.mxu0 0.0
        %1138 = vmatpush2.msra.mxu0 0.0
        %1139 = vmatprep.mubr.f32.mxu0 0.0
        %1140 = vmatmul.mubr.f32.gmra.mxu0 %v1020
        %v1141 = vpop.f32.mrf.mxu0
        %v1142 = vadd.f32 %v1073, %v1141
        %v1143 = vpop.f32.mrf.mxu0
        %1144 = vmatprep.mubr.f32.mxu0 0.0
        %1145 = vmatmul.mubr.f32.gmra.mxu0 %v1021
        %v1146 = vpop.f32.mrf.mxu0
        %v1147 = vadd.f32 %v1073, %v1146
        %v1148 = vpop.f32.mrf.mxu0
        %1149 = vmatprep.mubr.f32.mxu0 0.0
        %1150 = vmatmul.mubr.f32.gmra.mxu0 %v1022
        %v1151 = vpop.f32.mrf.mxu0
        %v1152 = vadd.f32 %v1073, %v1151
        %v1153 = vpop.f32.mrf.mxu0
        %1154 = vmatprep.mubr.f32.mxu0 0.0
        %1155 = vmatmul.mubr.f32.gmra.mxu0 %v1023
        %v1156 = vpop.f32.mrf.mxu0
        %v1157 = vadd.f32 %v1073, %v1156
        %v1158 = vpop.f32.mrf.mxu0
        %1159 = vmatprep.mubr.f32.mxu0 0.0
        %1160 = vmatmul.mubr.f32.gmra.mxu0 %v1024
        %v1161 = vpop.f32.mrf.mxu0
        %v1162 = vadd.f32 %v1073, %v1161
        %v1163 = vpop.f32.mrf.mxu0
        %1164 = vmatprep.mubr.f32.mxu0 0.0
        %1165 = vmatmul.mubr.f32.gmra.mxu0 %v1025
        %v1166 = vpop.f32.mrf.mxu0
        %v1167 = vadd.f32 %v1073, %v1166
        %v1168 = vpop.f32.mrf.mxu0
        %1169 = vmatprep.mubr.f32.mxu0 0.0
        %1170 = vmatmul.mubr.f32.gmra.mxu0 %v1026
        %v1171 = vpop.f32.mrf.mxu0
        %v1172 = vadd.f32 %v1073, %v1171
        %v1173 = vpop.f32.mrf.mxu0
        %1174 = vmatprep.mubr.f32.mxu0 0.0
        %1175 = vmatmul.mubr.f32.gmra.mxu0 %v1027
        %v1176 = vpop.f32.mrf.mxu0
        %v1177 = vadd.f32 %v1073, %v1176
        %v1178 = vpop.f32.mrf.mxu0
        %1179 = vmatprep.mubr.f32.mxu0 0.0
        %1180 = vmatmul.mubr.f32.gmra.mxu0 %v1028
        %v1181 = vpop.f32.mrf.mxu0
        %v1182 = vadd.f32 %v1073, %v1181
        %v1183 = vpop.f32.mrf.mxu0
        %1184 = vmatprep.mubr.f32.mxu0 0.0
        %1185 = vmatmul.mubr.f32.gmra.mxu0 %v1029
        %v1186 = vpop.f32.mrf.mxu0
        %v1187 = vadd.f32 %v1073, %v1186
        %v1188 = vpop.f32.mrf.mxu0
        %1189 = vmatprep.mubr.f32.mxu0 0.0
        %1190 = vmatmul.mubr.f32.gmra.mxu0 %v1030
        %v1191 = vpop.f32.mrf.mxu0
        %v1192 = vadd.f32 %v1073, %v1191
        %v1193 = vpop.f32.mrf.mxu0
        %1194 = vmatprep.mubr.f32.mxu0 0.0
        %1195 = vmatmul.mubr.f32.gmra.mxu0 %v1031
        %v1196 = vpop.f32.mrf.mxu0
        %v1197 = vadd.f32 %v1073, %v1196
        %v1198 = vpop.f32.mrf.mxu0
        %1199 = vmatprep.mubr.f32.mxu0 0.0
        %1200 = vmatmul.mubr.f32.gmra.mxu0 %v1032
        %v1201 = vpop.f32.mrf.mxu0
        %v1202 = vadd.f32 %v1073, %v1201
        %v1203 = vpop.f32.mrf.mxu0
        %1204 = vmatprep.mubr.f32.mxu0 0.0
        %1205 = vmatmul.mubr.f32.gmra.mxu0 %v1033
        %v1206 = vpop.f32.mrf.mxu0
        %v1207 = vadd.f32 %v1073, %v1206
        %v1208 = vpop.f32.mrf.mxu0
        %1209 = vmatprep.mubr.f32.mxu0 0.0
        %1210 = vmatmul.mubr.f32.gmra.mxu0 %v1034
        %v1211 = vpop.f32.mrf.mxu0
        %v1212 = vadd.f32 %v1073, %v1211
        %v1213 = vpop.f32.mrf.mxu0
        %1214 = vmatprep.mubr.f32.mxu0 0.0
        %1215 = vmatmul.mubr.f32.gmra.mxu0 %v1035
        %v1216 = vpop.f32.mrf.mxu0
        %v1217 = vadd.f32 %v1073, %v1216
        %v1218 = vpop.f32.mrf.mxu0
        %1219 = vmatprep.mubr.f32.mxu0 0.0
        %1220 = vmatmul.mubr.f32.gmra.mxu0 %v1036
        %v1221 = vpop.f32.mrf.mxu0
        %v1222 = vadd.f32 %v1073, %v1221
        %v1223 = vpop.f32.mrf.mxu0
        %1224 = vmatprep.mubr.f32.mxu0 0.0
        %1225 = vmatmul.mubr.f32.gmra.mxu0 %v1037
        %v1226 = vpop.f32.mrf.mxu0
        %v1227 = vadd.f32 %v1073, %v1226
        %v1228 = vpop.f32.mrf.mxu0
        %1229 = vmatprep.mubr.f32.mxu0 0.0
        %1230 = vmatmul.mubr.f32.gmra.mxu0 %v1038
        %v1231 = vpop.f32.mrf.mxu0
        %v1232 = vadd.f32 %v1073, %v1231
        %v1233 = vpop.f32.mrf.mxu0
        %1234 = vmatprep.mubr.f32.mxu0 0.0
        %1235 = vmatmul.mubr.f32.gmra.mxu0 %v1039
        %v1236 = vpop.f32.mrf.mxu0
        %v1237 = vadd.f32 %v1073, %v1236
        %v1238 = vpop.f32.mrf.mxu0
        %1239 = vmatprep.mubr.f32.mxu0 0.0
        %1240 = vmatmul.mubr.f32.gmra.mxu0 %v1040
        %v1241 = vpop.f32.mrf.mxu0
        %v1242 = vadd.f32 %v1073, %v1241
        %v1243 = vpop.f32.mrf.mxu0
        %1244 = vmatprep.mubr.f32.mxu0 0.0
        %1245 = vmatmul.mubr.f32.gmra.mxu0 %v1041
        %v1246 = vpop.f32.mrf.mxu0
        %v1247 = vadd.f32 %v1073, %v1246
        %v1248 = vpop.f32.mrf.mxu0
        %1249 = vmatprep.mubr.f32.mxu0 0.0
        %1250 = vmatmul.mubr.f32.gmra.mxu0 %v1042
        %v1251 = vpop.f32.mrf.mxu0
        %v1252 = vadd.f32 %v1073, %v1251
        %v1253 = vpop.f32.mrf.mxu0
        %1254 = vmatprep.mubr.f32.mxu0 0.0
        %1255 = vmatmul.mubr.f32.gmra.mxu0 %v1043
        %v1256 = vpop.f32.mrf.mxu0
        %v1257 = vadd.f32 %v1073, %v1256
        %v1258 = vpop.f32.mrf.mxu0
        %1259 = vmatprep.mubr.f32.mxu0 0.0
        %1260 = vmatmul.mubr.f32.gmra.mxu0 %v1044
        %v1261 = vpop.f32.mrf.mxu0
        %v1262 = vadd.f32 %v1073, %v1261
        %v1263 = vpop.f32.mrf.mxu0
        %1264 = vmatprep.mubr.f32.mxu0 0.0
        %1265 = vmatmul.mubr.f32.gmra.mxu0 %v1045
        %v1266 = vpop.f32.mrf.mxu0
        %v1267 = vadd.f32 %v1073, %v1266
        %v1268 = vpop.f32.mrf.mxu0
        %1269 = vmatprep.mubr.f32.mxu0 0.0
        %1270 = vmatmul.mubr.f32.gmra.mxu0 %v1046
        %v1271 = vpop.f32.mrf.mxu0
        %v1272 = vadd.f32 %v1073, %v1271
        %v1273 = vpop.f32.mrf.mxu0
        %1274 = vmatprep.mubr.f32.mxu0 0.0
        %1275 = vmatmul.mubr.f32.gmra.mxu0 %v1047
        %v1276 = vpop.f32.mrf.mxu0
        %v1277 = vadd.f32 %v1073, %v1276
        %v1278 = vpop.f32.mrf.mxu0
        %1279 = vmatprep.mubr.f32.mxu0 0.0
        %1280 = vmatmul.mubr.f32.gmra.mxu0 %v1048
        %v1281 = vpop.f32.mrf.mxu0
        %v1282 = vadd.f32 %v1073, %v1281
        %v1283 = vpop.f32.mrf.mxu0
        %1284 = vmatprep.mubr.f32.mxu0 0.0
        %1285 = vmatmul.mubr.f32.gmra.mxu0 %v1049
        %v1286 = vpop.f32.mrf.mxu0
        %v1287 = vadd.f32 %v1073, %v1286
        %v1288 = vpop.f32.mrf.mxu0
        %1289 = vmatprep.mubr.f32.mxu0 0.0
        %1290 = vmatmul.mubr.f32.gmra.mxu0 %v1050
        %v1291 = vpop.f32.mrf.mxu0
        %v1292 = vadd.f32 %v1073, %v1291
        %v1293 = vpop.f32.mrf.mxu0
        %1294 = vmatprep.mubr.f32.mxu0 0.0
        %1295 = vmatmul.mubr.f32.gmra.mxu0 %v1051
        %v1296 = vpop.f32.mrf.mxu0
        %v1297 = vadd.f32 %v1073, %v1296
        %v1298 = vpop.f32.mrf.mxu0
        %1299 = vdwg.mxu0
        %v1300 = vxor.u32 %v1142, 2147483648
        %v1301 = vxor.u32 %v1147, 2147483648
        %v1302 = vxor.u32 %v1152, 2147483648
        %v1303 = vxor.u32 %v1157, 2147483648
        %v1304 = vxor.u32 %v1162, 2147483648
        %v1305 = vxor.u32 %v1167, 2147483648
        %v1306 = vxor.u32 %v1172, 2147483648
        %v1307 = vxor.u32 %v1177, 2147483648
        %v1308 = vxor.u32 %v1182, 2147483648
        %v1309 = vxor.u32 %v1187, 2147483648
        %v1310 = vxor.u32 %v1192, 2147483648
        %v1311 = vxor.u32 %v1197, 2147483648
        %v1312 = vxor.u32 %v1202, 2147483648
        %v1313 = vxor.u32 %v1207, 2147483648
        %v1314 = vxor.u32 %v1212, 2147483648
        %v1315 = vxor.u32 %v1217, 2147483648
        %v1316 = vxor.u32 %v1222, 2147483648
        %v1317 = vxor.u32 %v1227, 2147483648
        %v1318 = vxor.u32 %v1232, 2147483648
        %v1319 = vxor.u32 %v1237, 2147483648
        %v1320 = vxor.u32 %v1242, 2147483648
        %v1321 = vxor.u32 %v1247, 2147483648
        %v1322 = vxor.u32 %v1252, 2147483648
        %v1323 = vxor.u32 %v1257, 2147483648
        %v1324 = vxor.u32 %v1262, 2147483648
        %v1325 = vxor.u32 %v1267, 2147483648
        %v1326 = vxor.u32 %v1272, 2147483648
        %v1327 = vxor.u32 %v1277, 2147483648
        %v1328 = vxor.u32 %v1282, 2147483648
        %v1329 = vxor.u32 %v1287, 2147483648
        %v1330 = vxor.u32 %v1292, 2147483648
        %v1331 = vxor.u32 %v1297, 2147483648
        %v1332 = vmul.f32 %v1300, 1.442695
        %v1333 = vpow.pop %v1332
        %v1334 = vmul.f32 %v1301, 1.442695
        %v1335 = vpow.pop %v1334
        %v1336 = vmul.f32 %v1302, 1.442695
        %v1337 = vpow.pop %v1336
        %v1338 = vmul.f32 %v1303, 1.442695
        %v1339 = vpow.pop %v1338
        %v1340 = vmul.f32 %v1304, 1.442695
        %v1341 = vpow.pop %v1340
        %v1342 = vmul.f32 %v1305, 1.442695
        %v1343 = vpow.pop %v1342
        %v1344 = vmul.f32 %v1306, 1.442695
        %v1345 = vpow.pop %v1344
        %v1346 = vmul.f32 %v1307, 1.442695
        %v1347 = vpow.pop %v1346
        %v1348 = vmul.f32 %v1308, 1.442695
        %v1349 = vpow.pop %v1348
        %v1350 = vmul.f32 %v1309, 1.442695
        %v1351 = vpow.pop %v1350
        %v1352 = vmul.f32 %v1310, 1.442695
        %v1353 = vpow.pop %v1352
        %v1354 = vmul.f32 %v1311, 1.442695
        %v1355 = vpow.pop %v1354
        %v1356 = vmul.f32 %v1312, 1.442695
        %v1357 = vpow.pop %v1356
        %v1358 = vmul.f32 %v1313, 1.442695
        %v1359 = vpow.pop %v1358
        %v1360 = vmul.f32 %v1314, 1.442695
        %v1361 = vpow.pop %v1360
        %v1362 = vmul.f32 %v1315, 1.442695
        %v1363 = vpow.pop %v1362
        %v1364 = vmul.f32 %v1316, 1.442695
        %v1365 = vpow.pop %v1364
        %v1366 = vmul.f32 %v1317, 1.442695
        %v1367 = vpow.pop %v1366
        %v1368 = vmul.f32 %v1318, 1.442695
        %v1369 = vpow.pop %v1368
        %v1370 = vmul.f32 %v1319, 1.442695
        %v1371 = vpow.pop %v1370
        %v1372 = vmul.f32 %v1320, 1.442695
        %v1373 = vpow.pop %v1372
        %v1374 = vmul.f32 %v1321, 1.442695
        %v1375 = vpow.pop %v1374
        %v1376 = vmul.f32 %v1322, 1.442695
        %v1377 = vpow.pop %v1376
        %v1378 = vmul.f32 %v1323, 1.442695
        %v1379 = vpow.pop %v1378
        %v1380 = vmul.f32 %v1324, 1.442695
        %v1381 = vpow.pop %v1380
        %v1382 = vmul.f32 %v1325, 1.442695
        %v1383 = vpow.pop %v1382
        %v1384 = vmul.f32 %v1326, 1.442695
        %v1385 = vpow.pop %v1384
        %v1386 = vmul.f32 %v1327, 1.442695
        %v1387 = vpow.pop %v1386
        %v1388 = vmul.f32 %v1328, 1.442695
        %v1389 = vpow.pop %v1388
        %v1390 = vmul.f32 %v1329, 1.442695
        %v1391 = vpow.pop %v1390
        %v1392 = vmul.f32 %v1330, 1.442695
        %v1393 = vpow.pop %v1392
        %v1394 = vmul.f32 %v1331, 1.442695
        %v1395 = vpow.pop %v1394
        %v1396 = vadd.f32 %v1333, 1.0
        %v1397 = vadd.f32 %v1335, 1.0
        %v1398 = vadd.f32 %v1337, 1.0
        %v1399 = vadd.f32 %v1339, 1.0
        %v1400 = vadd.f32 %v1341, 1.0
        %v1401 = vadd.f32 %v1343, 1.0
        %v1402 = vadd.f32 %v1345, 1.0
        %v1403 = vadd.f32 %v1347, 1.0
        %v1404 = vadd.f32 %v1349, 1.0
        %v1405 = vadd.f32 %v1351, 1.0
        %v1406 = vadd.f32 %v1353, 1.0
        %v1407 = vadd.f32 %v1355, 1.0
        %v1408 = vadd.f32 %v1357, 1.0
        %v1409 = vadd.f32 %v1359, 1.0
        %v1410 = vadd.f32 %v1361, 1.0
        %v1411 = vadd.f32 %v1363, 1.0
        %v1412 = vadd.f32 %v1365, 1.0
        %v1413 = vadd.f32 %v1367, 1.0
        %v1414 = vadd.f32 %v1369, 1.0
        %v1415 = vadd.f32 %v1371, 1.0
        %v1416 = vadd.f32 %v1373, 1.0
        %v1417 = vadd.f32 %v1375, 1.0
        %v1418 = vadd.f32 %v1377, 1.0
        %v1419 = vadd.f32 %v1379, 1.0
        %v1420 = vadd.f32 %v1381, 1.0
        %v1421 = vadd.f32 %v1383, 1.0
        %v1422 = vadd.f32 %v1385, 1.0
        %v1423 = vadd.f32 %v1387, 1.0
        %v1424 = vadd.f32 %v1389, 1.0
        %v1425 = vadd.f32 %v1391, 1.0
        %v1426 = vadd.f32 %v1393, 1.0
        %v1427 = vadd.f32 %v1395, 1.0
        %v1428 = vrcp.pop %v1396
        %v1429 = vmul.f32 1.0, %v1428
        %v1430 = vrcp.pop %v1397
        %v1431 = vmul.f32 1.0, %v1430
        %v1432 = vrcp.pop %v1398
        %v1433 = vmul.f32 1.0, %v1432
        %v1434 = vrcp.pop %v1399
        %v1435 = vmul.f32 1.0, %v1434
        %v1436 = vrcp.pop %v1400
        %v1437 = vmul.f32 1.0, %v1436
        %v1438 = vrcp.pop %v1401
        %v1439 = vmul.f32 1.0, %v1438
        %v1440 = vrcp.pop %v1402
        %v1441 = vmul.f32 1.0, %v1440
        %v1442 = vrcp.pop %v1403
        %v1443 = vmul.f32 1.0, %v1442
        %v1444 = vrcp.pop %v1404
        %v1445 = vmul.f32 1.0, %v1444
        %v1446 = vrcp.pop %v1405
        %v1447 = vmul.f32 1.0, %v1446
        %v1448 = vrcp.pop %v1406
        %v1449 = vmul.f32 1.0, %v1448
        %v1450 = vrcp.pop %v1407
        %v1451 = vmul.f32 1.0, %v1450
        %v1452 = vrcp.pop %v1408
        %v1453 = vmul.f32 1.0, %v1452
        %v1454 = vrcp.pop %v1409
        %v1455 = vmul.f32 1.0, %v1454
        %v1456 = vrcp.pop %v1410
        %v1457 = vmul.f32 1.0, %v1456
        %v1458 = vrcp.pop %v1411
        %v1459 = vmul.f32 1.0, %v1458
        %v1460 = vrcp.pop %v1412
        %v1461 = vmul.f32 1.0, %v1460
        %v1462 = vrcp.pop %v1413
        %v1463 = vmul.f32 1.0, %v1462
        %v1464 = vrcp.pop %v1414
        %v1465 = vmul.f32 1.0, %v1464
        %v1466 = vrcp.pop %v1415
        %v1467 = vmul.f32 1.0, %v1466
        %v1468 = vrcp.pop %v1416
        %v1469 = vmul.f32 1.0, %v1468
        %v1470 = vrcp.pop %v1417
        %v1471 = vmul.f32 1.0, %v1470
        %v1472 = vrcp.pop %v1418
        %v1473 = vmul.f32 1.0, %v1472
        %v1474 = vrcp.pop %v1419
        %v1475 = vmul.f32 1.0, %v1474
        %v1476 = vrcp.pop %v1420
        %v1477 = vmul.f32 1.0, %v1476
        %v1478 = vrcp.pop %v1421
        %v1479 = vmul.f32 1.0, %v1478
        %v1480 = vrcp.pop %v1422
        %v1481 = vmul.f32 1.0, %v1480
        %v1482 = vrcp.pop %v1423
        %v1483 = vmul.f32 1.0, %v1482
        %v1484 = vrcp.pop %v1424
        %v1485 = vmul.f32 1.0, %v1484
        %v1486 = vrcp.pop %v1425
        %v1487 = vmul.f32 1.0, %v1486
        %v1488 = vrcp.pop %v1426
        %v1489 = vmul.f32 1.0, %v1488
        %v1490 = vrcp.pop %v1427
        %v1491 = vmul.f32 1.0, %v1490
        %v1492 = vmul.f32 %v1142, %v1429
        %v1493 = vmul.f32 %v1147, %v1431
        %v1494 = vmul.f32 %v1152, %v1433
        %v1495 = vmul.f32 %v1157, %v1435
        %v1496 = vmul.f32 %v1162, %v1437
        %v1497 = vmul.f32 %v1167, %v1439
        %v1498 = vmul.f32 %v1172, %v1441
        %v1499 = vmul.f32 %v1177, %v1443
        %v1500 = vmul.f32 %v1182, %v1445
        %v1501 = vmul.f32 %v1187, %v1447
        %v1502 = vmul.f32 %v1192, %v1449
        %v1503 = vmul.f32 %v1197, %v1451
        %v1504 = vmul.f32 %v1202, %v1453
        %v1505 = vmul.f32 %v1207, %v1455
        %v1506 = vmul.f32 %v1212, %v1457
        %v1507 = vmul.f32 %v1217, %v1459
        %v1508 = vmul.f32 %v1222, %v1461
        %v1509 = vmul.f32 %v1227, %v1463
        %v1510 = vmul.f32 %v1232, %v1465
        %v1511 = vmul.f32 %v1237, %v1467
        %v1512 = vmul.f32 %v1242, %v1469
        %v1513 = vmul.f32 %v1247, %v1471
        %v1514 = vmul.f32 %v1252, %v1473
        %v1515 = vmul.f32 %v1257, %v1475
        %v1516 = vmul.f32 %v1262, %v1477
        %v1517 = vmul.f32 %v1267, %v1479
        %v1518 = vmul.f32 %v1272, %v1481
        %v1519 = vmul.f32 %v1277, %v1483
        %v1520 = vmul.f32 %v1282, %v1485
        %v1521 = vmul.f32 %v1287, %v1487
        %v1522 = vmul.f32 %v1292, %v1489
        %v1523 = vmul.f32 %v1297, %v1491
        %v1524 = vld [vmem:[#allocation8] sm:$0xff]
        %v1525 = vld [vmem:[#allocation8 + $0x8] sm:$0xff]
        %v1526 = vld [vmem:[#allocation8 + $0x10] sm:$0xff]
        %v1527 = vld [vmem:[#allocation8 + $0x18] sm:$0xff]
        %v1528 = vld [vmem:[#allocation8 + $0x20] sm:$0xff]
        %v1529 = vld [vmem:[#allocation8 + $0x28] sm:$0xff]
        %v1530 = vld [vmem:[#allocation8 + $0x30] sm:$0xff]
        %v1531 = vld [vmem:[#allocation8 + $0x38] sm:$0xff]
        %v1532 = vld [vmem:[#allocation8 + $0x40] sm:$0xff]
        %v1533 = vld [vmem:[#allocation8 + $0x48] sm:$0xff]
        %v1534 = vld [vmem:[#allocation8 + $0x50] sm:$0xff]
        %v1535 = vld [vmem:[#allocation8 + $0x58] sm:$0xff]
        %v1536 = vld [vmem:[#allocation8 + $0x60] sm:$0xff]
        %v1537 = vld [vmem:[#allocation8 + $0x68] sm:$0xff]
        %v1538 = vld [vmem:[#allocation8 + $0x70] sm:$0xff]
        %v1539 = vld [vmem:[#allocation8 + $0x78] sm:$0xff]
        %v1540 = vld [vmem:[%s6] sm:$0x1]
        %v1542 = vlaneseq
        %v1543 = vshrl.u32 %v1542, 7
        %v1544 = vsub.s32 0, %v1543
        %v1545 = vrot.slane %v1540, %v1544
        %1547 = vmatprep.subr.mxu0 0.0
        %1548 = vmatpush1.msra.mxu0 %v1539
        %1549 = vmatprep.subr.mxu0 0.0
        %1550 = vmatpush1.msra.mxu0 %v1538
        %1551 = vmatprep.subr.mxu0 0.0
        %1552 = vmatpush1.msra.mxu0 %v1537
        %1553 = vmatprep.subr.mxu0 0.0
        %1554 = vmatpush1.msra.mxu0 %v1536
        %1555 = vmatprep.subr.mxu0 0.0
        %1556 = vmatpush1.msra.mxu0 %v1535
        %1557 = vmatprep.subr.mxu0 0.0
        %1558 = vmatpush1.msra.mxu0 %v1534
        %1559 = vmatprep.subr.mxu0 0.0
        %1560 = vmatpush1.msra.mxu0 %v1533
        %1561 = vmatprep.subr.mxu0 0.0
        %1562 = vmatpush1.msra.mxu0 %v1532
        %1563 = vmatprep.subr.mxu0 0.0
        %1564 = vmatpush1.msra.mxu0 %v1531
        %1565 = vmatprep.subr.mxu0 0.0
        %1566 = vmatpush1.msra.mxu0 %v1530
        %1567 = vmatprep.subr.mxu0 0.0
        %1568 = vmatpush1.msra.mxu0 %v1529
        %1569 = vmatprep.subr.mxu0 0.0
        %1570 = vmatpush1.msra.mxu0 %v1528
        %1571 = vmatprep.subr.mxu0 0.0
        %1572 = vmatpush1.msra.mxu0 %v1527
        %1573 = vmatprep.subr.mxu0 0.0
        %1574 = vmatpush1.msra.mxu0 %v1526
        %1575 = vmatprep.subr.mxu0 0.0
        %1576 = vmatpush1.msra.mxu0 %v1525
        %1577 = vmatprep.subr.mxu0 0.0
        %1578 = vmatpush1.msra.mxu0 %v1524
        %1579 = vmatprep.subr.mxu0 0.0
        %1580 = vmatpush2.msra.mxu0 0.0
        %1581 = vmatprep.subr.mxu0 0.0
        %1582 = vmatpush2.msra.mxu0 0.0
        %1583 = vmatprep.subr.mxu0 0.0
        %1584 = vmatpush2.msra.mxu0 0.0
        %1585 = vmatprep.subr.mxu0 0.0
        %1586 = vmatpush2.msra.mxu0 0.0
        %1587 = vmatprep.subr.mxu0 0.0
        %1588 = vmatpush2.msra.mxu0 0.0
        %1589 = vmatprep.subr.mxu0 0.0
        %1590 = vmatpush2.msra.mxu0 0.0
        %1591 = vmatprep.subr.mxu0 0.0
        %1592 = vmatpush2.msra.mxu0 0.0
        %1593 = vmatprep.subr.mxu0 0.0
        %1594 = vmatpush2.msra.mxu0 0.0
        %1595 = vmatprep.subr.mxu0 0.0
        %1596 = vmatpush2.msra.mxu0 0.0
        %1597 = vmatprep.subr.mxu0 0.0
        %1598 = vmatpush2.msra.mxu0 0.0
        %1599 = vmatprep.subr.mxu0 0.0
        %1600 = vmatpush2.msra.mxu0 0.0
        %1601 = vmatprep.subr.mxu0 0.0
        %1602 = vmatpush2.msra.mxu0 0.0
        %1603 = vmatprep.subr.mxu0 0.0
        %1604 = vmatpush2.msra.mxu0 0.0
        %1605 = vmatprep.subr.mxu0 0.0
        %1606 = vmatpush2.msra.mxu0 0.0
        %1607 = vmatprep.subr.mxu0 0.0
        %1608 = vmatpush2.msra.mxu0 0.0
        %1609 = vmatprep.subr.mxu0 0.0
        %1610 = vmatpush2.msra.mxu0 0.0
        %1611 = vmatprep.mubr.f32.mxu0 0.0
        %1612 = vmatmul.mubr.f32.gmra.mxu0 %v1492
        %v1613 = vpop.f32.mrf.mxu0
        %v1614 = vadd.f32 %v1545, %v1613
        %v1615 = vpop.f32.mrf.mxu0
        %1616 = vmatprep.mubr.f32.mxu0 0.0
        %1617 = vmatmul.mubr.f32.gmra.mxu0 %v1493
        %v1618 = vpop.f32.mrf.mxu0
        %v1619 = vadd.f32 %v1545, %v1618
        %v1620 = vpop.f32.mrf.mxu0
        %1621 = vmatprep.mubr.f32.mxu0 0.0
        %1622 = vmatmul.mubr.f32.gmra.mxu0 %v1494
        %v1623 = vpop.f32.mrf.mxu0
        %v1624 = vadd.f32 %v1545, %v1623
        %v1625 = vpop.f32.mrf.mxu0
        %1626 = vmatprep.mubr.f32.mxu0 0.0
        %1627 = vmatmul.mubr.f32.gmra.mxu0 %v1495
        %v1628 = vpop.f32.mrf.mxu0
        %v1629 = vadd.f32 %v1545, %v1628
        %v1630 = vpop.f32.mrf.mxu0
        %1631 = vmatprep.mubr.f32.mxu0 0.0
        %1632 = vmatmul.mubr.f32.gmra.mxu0 %v1496
        %v1633 = vpop.f32.mrf.mxu0
        %v1634 = vadd.f32 %v1545, %v1633
        %v1635 = vpop.f32.mrf.mxu0
        %1636 = vmatprep.mubr.f32.mxu0 0.0
        %1637 = vmatmul.mubr.f32.gmra.mxu0 %v1497
        %v1638 = vpop.f32.mrf.mxu0
        %v1639 = vadd.f32 %v1545, %v1638
        %v1640 = vpop.f32.mrf.mxu0
        %1641 = vmatprep.mubr.f32.mxu0 0.0
        %1642 = vmatmul.mubr.f32.gmra.mxu0 %v1498
        %v1643 = vpop.f32.mrf.mxu0
        %v1644 = vadd.f32 %v1545, %v1643
        %v1645 = vpop.f32.mrf.mxu0
        %1646 = vmatprep.mubr.f32.mxu0 0.0
        %1647 = vmatmul.mubr.f32.gmra.mxu0 %v1499
        %v1648 = vpop.f32.mrf.mxu0
        %v1649 = vadd.f32 %v1545, %v1648
        %v1650 = vpop.f32.mrf.mxu0
        %1651 = vmatprep.mubr.f32.mxu0 0.0
        %1652 = vmatmul.mubr.f32.gmra.mxu0 %v1500
        %v1653 = vpop.f32.mrf.mxu0
        %v1654 = vadd.f32 %v1545, %v1653
        %v1655 = vpop.f32.mrf.mxu0
        %1656 = vmatprep.mubr.f32.mxu0 0.0
        %1657 = vmatmul.mubr.f32.gmra.mxu0 %v1501
        %v1658 = vpop.f32.mrf.mxu0
        %v1659 = vadd.f32 %v1545, %v1658
        %v1660 = vpop.f32.mrf.mxu0
        %1661 = vmatprep.mubr.f32.mxu0 0.0
        %1662 = vmatmul.mubr.f32.gmra.mxu0 %v1502
        %v1663 = vpop.f32.mrf.mxu0
        %v1664 = vadd.f32 %v1545, %v1663
        %v1665 = vpop.f32.mrf.mxu0
        %1666 = vmatprep.mubr.f32.mxu0 0.0
        %1667 = vmatmul.mubr.f32.gmra.mxu0 %v1503
        %v1668 = vpop.f32.mrf.mxu0
        %v1669 = vadd.f32 %v1545, %v1668
        %v1670 = vpop.f32.mrf.mxu0
        %1671 = vmatprep.mubr.f32.mxu0 0.0
        %1672 = vmatmul.mubr.f32.gmra.mxu0 %v1504
        %v1673 = vpop.f32.mrf.mxu0
        %v1674 = vadd.f32 %v1545, %v1673
        %v1675 = vpop.f32.mrf.mxu0
        %1676 = vmatprep.mubr.f32.mxu0 0.0
        %1677 = vmatmul.mubr.f32.gmra.mxu0 %v1505
        %v1678 = vpop.f32.mrf.mxu0
        %v1679 = vadd.f32 %v1545, %v1678
        %v1680 = vpop.f32.mrf.mxu0
        %1681 = vmatprep.mubr.f32.mxu0 0.0
        %1682 = vmatmul.mubr.f32.gmra.mxu0 %v1506
        %v1683 = vpop.f32.mrf.mxu0
        %v1684 = vadd.f32 %v1545, %v1683
        %v1685 = vpop.f32.mrf.mxu0
        %1686 = vmatprep.mubr.f32.mxu0 0.0
        %1687 = vmatmul.mubr.f32.gmra.mxu0 %v1507
        %v1688 = vpop.f32.mrf.mxu0
        %v1689 = vadd.f32 %v1545, %v1688
        %v1690 = vpop.f32.mrf.mxu0
        %1691 = vmatprep.mubr.f32.mxu0 0.0
        %1692 = vmatmul.mubr.f32.gmra.mxu0 %v1508
        %v1693 = vpop.f32.mrf.mxu0
        %v1694 = vadd.f32 %v1545, %v1693
        %v1695 = vpop.f32.mrf.mxu0
        %1696 = vmatprep.mubr.f32.mxu0 0.0
        %1697 = vmatmul.mubr.f32.gmra.mxu0 %v1509
        %v1698 = vpop.f32.mrf.mxu0
        %v1699 = vadd.f32 %v1545, %v1698
        %v1700 = vpop.f32.mrf.mxu0
        %1701 = vmatprep.mubr.f32.mxu0 0.0
        %1702 = vmatmul.mubr.f32.gmra.mxu0 %v1510
        %v1703 = vpop.f32.mrf.mxu0
        %v1704 = vadd.f32 %v1545, %v1703
        %v1705 = vpop.f32.mrf.mxu0
        %1706 = vmatprep.mubr.f32.mxu0 0.0
        %1707 = vmatmul.mubr.f32.gmra.mxu0 %v1511
        %v1708 = vpop.f32.mrf.mxu0
        %v1709 = vadd.f32 %v1545, %v1708
        %v1710 = vpop.f32.mrf.mxu0
        %1711 = vmatprep.mubr.f32.mxu0 0.0
        %1712 = vmatmul.mubr.f32.gmra.mxu0 %v1512
        %v1713 = vpop.f32.mrf.mxu0
        %v1714 = vadd.f32 %v1545, %v1713
        %v1715 = vpop.f32.mrf.mxu0
        %1716 = vmatprep.mubr.f32.mxu0 0.0
        %1717 = vmatmul.mubr.f32.gmra.mxu0 %v1513
        %v1718 = vpop.f32.mrf.mxu0
        %v1719 = vadd.f32 %v1545, %v1718
        %v1720 = vpop.f32.mrf.mxu0
        %1721 = vmatprep.mubr.f32.mxu0 0.0
        %1722 = vmatmul.mubr.f32.gmra.mxu0 %v1514
        %v1723 = vpop.f32.mrf.mxu0
        %v1724 = vadd.f32 %v1545, %v1723
        %v1725 = vpop.f32.mrf.mxu0
        %1726 = vmatprep.mubr.f32.mxu0 0.0
        %1727 = vmatmul.mubr.f32.gmra.mxu0 %v1515
        %v1728 = vpop.f32.mrf.mxu0
        %v1729 = vadd.f32 %v1545, %v1728
        %v1730 = vpop.f32.mrf.mxu0
        %1731 = vmatprep.mubr.f32.mxu0 0.0
        %1732 = vmatmul.mubr.f32.gmra.mxu0 %v1516
        %v1733 = vpop.f32.mrf.mxu0
        %v1734 = vadd.f32 %v1545, %v1733
        %v1735 = vpop.f32.mrf.mxu0
        %1736 = vmatprep.mubr.f32.mxu0 0.0
        %1737 = vmatmul.mubr.f32.gmra.mxu0 %v1517
        %v1738 = vpop.f32.mrf.mxu0
        %v1739 = vadd.f32 %v1545, %v1738
        %v1740 = vpop.f32.mrf.mxu0
        %1741 = vmatprep.mubr.f32.mxu0 0.0
        %1742 = vmatmul.mubr.f32.gmra.mxu0 %v1518
        %v1743 = vpop.f32.mrf.mxu0
        %v1744 = vadd.f32 %v1545, %v1743
        %v1745 = vpop.f32.mrf.mxu0
        %1746 = vmatprep.mubr.f32.mxu0 0.0
        %1747 = vmatmul.mubr.f32.gmra.mxu0 %v1519
        %v1748 = vpop.f32.mrf.mxu0
        %v1749 = vadd.f32 %v1545, %v1748
        %v1750 = vpop.f32.mrf.mxu0
        %1751 = vmatprep.mubr.f32.mxu0 0.0
        %1752 = vmatmul.mubr.f32.gmra.mxu0 %v1520
        %v1753 = vpop.f32.mrf.mxu0
        %v1754 = vadd.f32 %v1545, %v1753
        %v1755 = vpop.f32.mrf.mxu0
        %1756 = vmatprep.mubr.f32.mxu0 0.0
        %1757 = vmatmul.mubr.f32.gmra.mxu0 %v1521
        %v1758 = vpop.f32.mrf.mxu0
        %v1759 = vadd.f32 %v1545, %v1758
        %v1760 = vpop.f32.mrf.mxu0
        %1761 = vmatprep.mubr.f32.mxu0 0.0
        %1762 = vmatmul.mubr.f32.gmra.mxu0 %v1522
        %v1763 = vpop.f32.mrf.mxu0
        %v1764 = vadd.f32 %v1545, %v1763
        %v1765 = vpop.f32.mrf.mxu0
        %1766 = vmatprep.mubr.f32.mxu0 0.0
        %1767 = vmatmul.mubr.f32.gmra.mxu0 %v1523
        %v1768 = vpop.f32.mrf.mxu0
        %v1769 = vadd.f32 %v1545, %v1768
        %v1770 = vpop.f32.mrf.mxu0
        %1771 = vdwg.mxu0
        %v1772 = vadd.f32 %v1020, %v1614
        %v1773 = vadd.f32 %v1021, %v1619
        %v1774 = vadd.f32 %v1022, %v1624
        %v1775 = vadd.f32 %v1023, %v1629
        %v1776 = vadd.f32 %v1024, %v1634
        %v1777 = vadd.f32 %v1025, %v1639
        %v1778 = vadd.f32 %v1026, %v1644
        %v1779 = vadd.f32 %v1027, %v1649
        %v1780 = vadd.f32 %v1028, %v1654
        %v1781 = vadd.f32 %v1029, %v1659
        %v1782 = vadd.f32 %v1030, %v1664
        %v1783 = vadd.f32 %v1031, %v1669
        %v1784 = vadd.f32 %v1032, %v1674
        %v1785 = vadd.f32 %v1033, %v1679
        %v1786 = vadd.f32 %v1034, %v1684
        %v1787 = vadd.f32 %v1035, %v1689
        %v1788 = vadd.f32 %v1036, %v1694
        %v1789 = vadd.f32 %v1037, %v1699
        %v1790 = vadd.f32 %v1038, %v1704
        %v1791 = vadd.f32 %v1039, %v1709
        %v1792 = vadd.f32 %v1040, %v1714
        %v1793 = vadd.f32 %v1041, %v1719
        %v1794 = vadd.f32 %v1042, %v1724
        %v1795 = vadd.f32 %v1043, %v1729
        %v1796 = vadd.f32 %v1044, %v1734
        %v1797 = vadd.f32 %v1045, %v1739
        %v1798 = vadd.f32 %v1046, %v1744
        %v1799 = vadd.f32 %v1047, %v1749
        %v1800 = vadd.f32 %v1048, %v1754
        %v1801 = vadd.f32 %v1049, %v1759
        %v1802 = vadd.f32 %v1050, %v1764
        %v1803 = vadd.f32 %v1051, %v1769
        %v1804 = vxor.u32 %v1772, 2147483648
        %v1805 = vxor.u32 %v1773, 2147483648
        %v1806 = vxor.u32 %v1774, 2147483648
        %v1807 = vxor.u32 %v1775, 2147483648
        %v1808 = vxor.u32 %v1776, 2147483648
        %v1809 = vxor.u32 %v1777, 2147483648
        %v1810 = vxor.u32 %v1778, 2147483648
        %v1811 = vxor.u32 %v1779, 2147483648
        %v1812 = vxor.u32 %v1780, 2147483648
        %v1813 = vxor.u32 %v1781, 2147483648
        %v1814 = vxor.u32 %v1782, 2147483648
        %v1815 = vxor.u32 %v1783, 2147483648
        %v1816 = vxor.u32 %v1784, 2147483648
        %v1817 = vxor.u32 %v1785, 2147483648
        %v1818 = vxor.u32 %v1786, 2147483648
        %v1819 = vxor.u32 %v1787, 2147483648
        %v1820 = vxor.u32 %v1788, 2147483648
        %v1821 = vxor.u32 %v1789, 2147483648
        %v1822 = vxor.u32 %v1790, 2147483648
        %v1823 = vxor.u32 %v1791, 2147483648
        %v1824 = vxor.u32 %v1792, 2147483648
        %v1825 = vxor.u32 %v1793, 2147483648
        %v1826 = vxor.u32 %v1794, 2147483648
        %v1827 = vxor.u32 %v1795, 2147483648
        %v1828 = vxor.u32 %v1796, 2147483648
        %v1829 = vxor.u32 %v1797, 2147483648
        %v1830 = vxor.u32 %v1798, 2147483648
        %v1831 = vxor.u32 %v1799, 2147483648
        %v1832 = vxor.u32 %v1800, 2147483648
        %v1833 = vxor.u32 %v1801, 2147483648
        %v1834 = vxor.u32 %v1802, 2147483648
        %v1835 = vxor.u32 %v1803, 2147483648
        %v1836 = vmul.f32 %v1804, 1.442695
        %v1837 = vpow.pop %v1836
        %v1838 = vmul.f32 %v1805, 1.442695
        %v1839 = vpow.pop %v1838
        %v1840 = vmul.f32 %v1806, 1.442695
        %v1841 = vpow.pop %v1840
        %v1842 = vmul.f32 %v1807, 1.442695
        %v1843 = vpow.pop %v1842
        %v1844 = vmul.f32 %v1808, 1.442695
        %v1845 = vpow.pop %v1844
        %v1846 = vmul.f32 %v1809, 1.442695
        %v1847 = vpow.pop %v1846
        %v1848 = vmul.f32 %v1810, 1.442695
        %v1849 = vpow.pop %v1848
        %v1850 = vmul.f32 %v1811, 1.442695
        %v1851 = vpow.pop %v1850
        %v1852 = vmul.f32 %v1812, 1.442695
        %v1853 = vpow.pop %v1852
        %v1854 = vmul.f32 %v1813, 1.442695
        %v1855 = vpow.pop %v1854
        %v1856 = vmul.f32 %v1814, 1.442695
        %v1857 = vpow.pop %v1856
        %v1858 = vmul.f32 %v1815, 1.442695
        %v1859 = vpow.pop %v1858
        %v1860 = vmul.f32 %v1816, 1.442695
        %v1861 = vpow.pop %v1860
        %v1862 = vmul.f32 %v1817, 1.442695
        %v1863 = vpow.pop %v1862
        %v1864 = vmul.f32 %v1818, 1.442695
        %v1865 = vpow.pop %v1864
        %v1866 = vmul.f32 %v1819, 1.442695
        %v1867 = vpow.pop %v1866
        %v1868 = vmul.f32 %v1820, 1.442695
        %v1869 = vpow.pop %v1868
        %v1870 = vmul.f32 %v1821, 1.442695
        %v1871 = vpow.pop %v1870
        %v1872 = vmul.f32 %v1822, 1.442695
        %v1873 = vpow.pop %v1872
        %v1874 = vmul.f32 %v1823, 1.442695
        %v1875 = vpow.pop %v1874
        %v1876 = vmul.f32 %v1824, 1.442695
        %v1877 = vpow.pop %v1876
        %v1878 = vmul.f32 %v1825, 1.442695
        %v1879 = vpow.pop %v1878
        %v1880 = vmul.f32 %v1826, 1.442695
        %v1881 = vpow.pop %v1880
        %v1882 = vmul.f32 %v1827, 1.442695
        %v1883 = vpow.pop %v1882
        %v1884 = vmul.f32 %v1828, 1.442695
        %v1885 = vpow.pop %v1884
        %v1886 = vmul.f32 %v1829, 1.442695
        %v1887 = vpow.pop %v1886
        %v1888 = vmul.f32 %v1830, 1.442695
        %v1889 = vpow.pop %v1888
        %v1890 = vmul.f32 %v1831, 1.442695
        %v1891 = vpow.pop %v1890
        %v1892 = vmul.f32 %v1832, 1.442695
        %v1893 = vpow.pop %v1892
        %v1894 = vmul.f32 %v1833, 1.442695
        %v1895 = vpow.pop %v1894
        %v1896 = vmul.f32 %v1834, 1.442695
        %v1897 = vpow.pop %v1896
        %v1898 = vmul.f32 %v1835, 1.442695
        %v1899 = vpow.pop %v1898
        %v1900 = vadd.f32 %v1837, 1.0
        %v1901 = vadd.f32 %v1839, 1.0
        %v1902 = vadd.f32 %v1841, 1.0
        %v1903 = vadd.f32 %v1843, 1.0
        %v1904 = vadd.f32 %v1845, 1.0
        %v1905 = vadd.f32 %v1847, 1.0
        %v1906 = vadd.f32 %v1849, 1.0
        %v1907 = vadd.f32 %v1851, 1.0
        %v1908 = vadd.f32 %v1853, 1.0
        %v1909 = vadd.f32 %v1855, 1.0
        %v1910 = vadd.f32 %v1857, 1.0
        %v1911 = vadd.f32 %v1859, 1.0
        %v1912 = vadd.f32 %v1861, 1.0
        %v1913 = vadd.f32 %v1863, 1.0
        %v1914 = vadd.f32 %v1865, 1.0
        %v1915 = vadd.f32 %v1867, 1.0
        %v1916 = vadd.f32 %v1869, 1.0
        %v1917 = vadd.f32 %v1871, 1.0
        %v1918 = vadd.f32 %v1873, 1.0
        %v1919 = vadd.f32 %v1875, 1.0
        %v1920 = vadd.f32 %v1877, 1.0
        %v1921 = vadd.f32 %v1879, 1.0
        %v1922 = vadd.f32 %v1881, 1.0
        %v1923 = vadd.f32 %v1883, 1.0
        %v1924 = vadd.f32 %v1885, 1.0
        %v1925 = vadd.f32 %v1887, 1.0
        %v1926 = vadd.f32 %v1889, 1.0
        %v1927 = vadd.f32 %v1891, 1.0
        %v1928 = vadd.f32 %v1893, 1.0
        %v1929 = vadd.f32 %v1895, 1.0
        %v1930 = vadd.f32 %v1897, 1.0
        %v1931 = vadd.f32 %v1899, 1.0
        %v1932 = vrcp.pop %v1900
        %v1933 = vmul.f32 1.0, %v1932
        %v1934 = vrcp.pop %v1901
        %v1935 = vmul.f32 1.0, %v1934
        %v1936 = vrcp.pop %v1902
        %v1937 = vmul.f32 1.0, %v1936
        %v1938 = vrcp.pop %v1903
        %v1939 = vmul.f32 1.0, %v1938
        %v1940 = vrcp.pop %v1904
        %v1941 = vmul.f32 1.0, %v1940
        %v1942 = vrcp.pop %v1905
        %v1943 = vmul.f32 1.0, %v1942
        %v1944 = vrcp.pop %v1906
        %v1945 = vmul.f32 1.0, %v1944
        %v1946 = vrcp.pop %v1907
        %v1947 = vmul.f32 1.0, %v1946
        %v1948 = vrcp.pop %v1908
        %v1949 = vmul.f32 1.0, %v1948
        %v1950 = vrcp.pop %v1909
        %v1951 = vmul.f32 1.0, %v1950
        %v1952 = vrcp.pop %v1910
        %v1953 = vmul.f32 1.0, %v1952
        %v1954 = vrcp.pop %v1911
        %v1955 = vmul.f32 1.0, %v1954
        %v1956 = vrcp.pop %v1912
        %v1957 = vmul.f32 1.0, %v1956
        %v1958 = vrcp.pop %v1913
        %v1959 = vmul.f32 1.0, %v1958
        %v1960 = vrcp.pop %v1914
        %v1961 = vmul.f32 1.0, %v1960
        %v1962 = vrcp.pop %v1915
        %v1963 = vmul.f32 1.0, %v1962
        %v1964 = vrcp.pop %v1916
        %v1965 = vmul.f32 1.0, %v1964
        %v1966 = vrcp.pop %v1917
        %v1967 = vmul.f32 1.0, %v1966
        %v1968 = vrcp.pop %v1918
        %v1969 = vmul.f32 1.0, %v1968
        %v1970 = vrcp.pop %v1919
        %v1971 = vmul.f32 1.0, %v1970
        %v1972 = vrcp.pop %v1920
        %v1973 = vmul.f32 1.0, %v1972
        %v1974 = vrcp.pop %v1921
        %v1975 = vmul.f32 1.0, %v1974
        %v1976 = vrcp.pop %v1922
        %v1977 = vmul.f32 1.0, %v1976
        %v1978 = vrcp.pop %v1923
        %v1979 = vmul.f32 1.0, %v1978
        %v1980 = vrcp.pop %v1924
        %v1981 = vmul.f32 1.0, %v1980
        %v1982 = vrcp.pop %v1925
        %v1983 = vmul.f32 1.0, %v1982
        %v1984 = vrcp.pop %v1926
        %v1985 = vmul.f32 1.0, %v1984
        %v1986 = vrcp.pop %v1927
        %v1987 = vmul.f32 1.0, %v1986
        %v1988 = vrcp.pop %v1928
        %v1989 = vmul.f32 1.0, %v1988
        %v1990 = vrcp.pop %v1929
        %v1991 = vmul.f32 1.0, %v1990
        %v1992 = vrcp.pop %v1930
        %v1993 = vmul.f32 1.0, %v1992
        %v1994 = vrcp.pop %v1931
        %v1995 = vmul.f32 1.0, %v1994
        %v1996 = vmul.f32 %v1772, %v1933
        %v1997 = vmul.f32 %v1773, %v1935
        %v1998 = vmul.f32 %v1774, %v1937
        %v1999 = vmul.f32 %v1775, %v1939
        %v2000 = vmul.f32 %v1776, %v1941
        %v2001 = vmul.f32 %v1777, %v1943
        %v2002 = vmul.f32 %v1778, %v1945
        %v2003 = vmul.f32 %v1779, %v1947
        %v2004 = vmul.f32 %v1780, %v1949
        %v2005 = vmul.f32 %v1781, %v1951
        %v2006 = vmul.f32 %v1782, %v1953
        %v2007 = vmul.f32 %v1783, %v1955
        %v2008 = vmul.f32 %v1784, %v1957
        %v2009 = vmul.f32 %v1785, %v1959
        %v2010 = vmul.f32 %v1786, %v1961
        %v2011 = vmul.f32 %v1787, %v1963
        %v2012 = vmul.f32 %v1788, %v1965
        %v2013 = vmul.f32 %v1789, %v1967
        %v2014 = vmul.f32 %v1790, %v1969
        %v2015 = vmul.f32 %v1791, %v1971
        %v2016 = vmul.f32 %v1792, %v1973
        %v2017 = vmul.f32 %v1793, %v1975
        %v2018 = vmul.f32 %v1794, %v1977
        %v2019 = vmul.f32 %v1795, %v1979
        %v2020 = vmul.f32 %v1796, %v1981
        %v2021 = vmul.f32 %v1797, %v1983
        %v2022 = vmul.f32 %v1798, %v1985
        %v2023 = vmul.f32 %v1799, %v1987
        %v2024 = vmul.f32 %v1800, %v1989
        %v2025 = vmul.f32 %v1801, %v1991
        %v2026 = vmul.f32 %v1802, %v1993
        %v2027 = vmul.f32 %v1803, %v1995
        %v2028 = vld [vmem:[#allocation10] sm:$0xff]
        %v2029 = vld [vmem:[#allocation10 + $0x8] sm:$0xff]
        %v2030 = vld [vmem:[#allocation10 + $0x10] sm:$0xff]
        %v2031 = vld [vmem:[#allocation10 + $0x18] sm:$0xff]
        %v2032 = vld [vmem:[#allocation10 + $0x20] sm:$0xff]
        %v2033 = vld [vmem:[#allocation10 + $0x28] sm:$0xff]
        %v2034 = vld [vmem:[#allocation10 + $0x30] sm:$0xff]
        %v2035 = vld [vmem:[#allocation10 + $0x38] sm:$0xff]
        %v2036 = vld [vmem:[#allocation10 + $0x40] sm:$0xff]
        %v2037 = vld [vmem:[#allocation10 + $0x48] sm:$0xff]
        %v2038 = vld [vmem:[#allocation10 + $0x50] sm:$0xff]
        %v2039 = vld [vmem:[#allocation10 + $0x58] sm:$0xff]
        %v2040 = vld [vmem:[#allocation10 + $0x60] sm:$0xff]
        %v2041 = vld [vmem:[#allocation10 + $0x68] sm:$0xff]
        %v2042 = vld [vmem:[#allocation10 + $0x70] sm:$0xff]
        %v2043 = vld [vmem:[#allocation10 + $0x78] sm:$0xff]
        %v2044 = vld [vmem:[%s8] sm:$0x1]
        %v2046 = vlaneseq
        %v2047 = vshrl.u32 %v2046, 7
        %v2048 = vsub.s32 0, %v2047
        %v2049 = vrot.slane %v2044, %v2048
        %2051 = vmatprep.subr.mxu0 0.0
        %2052 = vmatpush1.msra.mxu0 %v2043
        %2053 = vmatprep.subr.mxu0 0.0
        %2054 = vmatpush1.msra.mxu0 %v2042
        %2055 = vmatprep.subr.mxu0 0.0
        %2056 = vmatpush1.msra.mxu0 %v2041
        %2057 = vmatprep.subr.mxu0 0.0
        %2058 = vmatpush1.msra.mxu0 %v2040
        %2059 = vmatprep.subr.mxu0 0.0
        %2060 = vmatpush1.msra.mxu0 %v2039
        %2061 = vmatprep.subr.mxu0 0.0
        %2062 = vmatpush1.msra.mxu0 %v2038
        %2063 = vmatprep.subr.mxu0 0.0
        %2064 = vmatpush1.msra.mxu0 %v2037
        %2065 = vmatprep.subr.mxu0 0.0
        %2066 = vmatpush1.msra.mxu0 %v2036
        %2067 = vmatprep.subr.mxu0 0.0
        %2068 = vmatpush1.msra.mxu0 %v2035
        %2069 = vmatprep.subr.mxu0 0.0
        %2070 = vmatpush1.msra.mxu0 %v2034
        %2071 = vmatprep.subr.mxu0 0.0
        %2072 = vmatpush1.msra.mxu0 %v2033
        %2073 = vmatprep.subr.mxu0 0.0
        %2074 = vmatpush1.msra.mxu0 %v2032
        %2075 = vmatprep.subr.mxu0 0.0
        %2076 = vmatpush1.msra.mxu0 %v2031
        %2077 = vmatprep.subr.mxu0 0.0
        %2078 = vmatpush1.msra.mxu0 %v2030
        %2079 = vmatprep.subr.mxu0 0.0
        %2080 = vmatpush1.msra.mxu0 %v2029
        %2081 = vmatprep.subr.mxu0 0.0
        %2082 = vmatpush1.msra.mxu0 %v2028
        %2083 = vmatprep.subr.mxu0 0.0
        %2084 = vmatpush2.msra.mxu0 0.0
        %2085 = vmatprep.subr.mxu0 0.0
        %2086 = vmatpush2.msra.mxu0 0.0
        %2087 = vmatprep.subr.mxu0 0.0
        %2088 = vmatpush2.msra.mxu0 0.0
        %2089 = vmatprep.subr.mxu0 0.0
        %2090 = vmatpush2.msra.mxu0 0.0
        %2091 = vmatprep.subr.mxu0 0.0
        %2092 = vmatpush2.msra.mxu0 0.0
        %2093 = vmatprep.subr.mxu0 0.0
        %2094 = vmatpush2.msra.mxu0 0.0
        %2095 = vmatprep.subr.mxu0 0.0
        %2096 = vmatpush2.msra.mxu0 0.0
        %2097 = vmatprep.subr.mxu0 0.0
        %2098 = vmatpush2.msra.mxu0 0.0
        %2099 = vmatprep.subr.mxu0 0.0
        %2100 = vmatpush2.msra.mxu0 0.0
        %2101 = vmatprep.subr.mxu0 0.0
        %2102 = vmatpush2.msra.mxu0 0.0
        %2103 = vmatprep.subr.mxu0 0.0
        %2104 = vmatpush2.msra.mxu0 0.0
        %2105 = vmatprep.subr.mxu0 0.0
        %2106 = vmatpush2.msra.mxu0 0.0
        %2107 = vmatprep.subr.mxu0 0.0
        %2108 = vmatpush2.msra.mxu0 0.0
        %2109 = vmatprep.subr.mxu0 0.0
        %2110 = vmatpush2.msra.mxu0 0.0
        %2111 = vmatprep.subr.mxu0 0.0
        %2112 = vmatpush2.msra.mxu0 0.0
        %2113 = vmatprep.subr.mxu0 0.0
        %2114 = vmatpush2.msra.mxu0 0.0
        %2115 = vmatprep.mubr.f32.mxu0 0.0
        %2116 = vmatmul.mubr.f32.gmra.mxu0 %v1996
        %v2117 = vpop.f32.mrf.mxu0
        %v2118 = vadd.f32 %v2049, %v2117
        %v2119 = vpop.f32.mrf.mxu0
        %2120 = vmatprep.mubr.f32.mxu0 0.0
        %2121 = vmatmul.mubr.f32.gmra.mxu0 %v1997
        %v2122 = vpop.f32.mrf.mxu0
        %v2123 = vadd.f32 %v2049, %v2122
        %v2124 = vpop.f32.mrf.mxu0
        %2125 = vmatprep.mubr.f32.mxu0 0.0
        %2126 = vmatmul.mubr.f32.gmra.mxu0 %v1998
        %v2127 = vpop.f32.mrf.mxu0
        %v2128 = vadd.f32 %v2049, %v2127
        %v2129 = vpop.f32.mrf.mxu0
        %2130 = vmatprep.mubr.f32.mxu0 0.0
        %2131 = vmatmul.mubr.f32.gmra.mxu0 %v1999
        %v2132 = vpop.f32.mrf.mxu0
        %v2133 = vadd.f32 %v2049, %v2132
        %v2134 = vpop.f32.mrf.mxu0
        %2135 = vmatprep.mubr.f32.mxu0 0.0
        %2136 = vmatmul.mubr.f32.gmra.mxu0 %v2000
        %v2137 = vpop.f32.mrf.mxu0
        %v2138 = vadd.f32 %v2049, %v2137
        %v2139 = vpop.f32.mrf.mxu0
        %2140 = vmatprep.mubr.f32.mxu0 0.0
        %2141 = vmatmul.mubr.f32.gmra.mxu0 %v2001
        %v2142 = vpop.f32.mrf.mxu0
        %v2143 = vadd.f32 %v2049, %v2142
        %v2144 = vpop.f32.mrf.mxu0
        %2145 = vmatprep.mubr.f32.mxu0 0.0
        %2146 = vmatmul.mubr.f32.gmra.mxu0 %v2002
        %v2147 = vpop.f32.mrf.mxu0
        %v2148 = vadd.f32 %v2049, %v2147
        %v2149 = vpop.f32.mrf.mxu0
        %2150 = vmatprep.mubr.f32.mxu0 0.0
        %2151 = vmatmul.mubr.f32.gmra.mxu0 %v2003
        %v2152 = vpop.f32.mrf.mxu0
        %v2153 = vadd.f32 %v2049, %v2152
        %v2154 = vpop.f32.mrf.mxu0
        %2155 = vmatprep.mubr.f32.mxu0 0.0
        %2156 = vmatmul.mubr.f32.gmra.mxu0 %v2004
        %v2157 = vpop.f32.mrf.mxu0
        %v2158 = vadd.f32 %v2049, %v2157
        %v2159 = vpop.f32.mrf.mxu0
        %2160 = vmatprep.mubr.f32.mxu0 0.0
        %2161 = vmatmul.mubr.f32.gmra.mxu0 %v2005
        %v2162 = vpop.f32.mrf.mxu0
        %v2163 = vadd.f32 %v2049, %v2162
        %v2164 = vpop.f32.mrf.mxu0
        %2165 = vmatprep.mubr.f32.mxu0 0.0
        %2166 = vmatmul.mubr.f32.gmra.mxu0 %v2006
        %v2167 = vpop.f32.mrf.mxu0
        %v2168 = vadd.f32 %v2049, %v2167
        %v2169 = vpop.f32.mrf.mxu0
        %2170 = vmatprep.mubr.f32.mxu0 0.0
        %2171 = vmatmul.mubr.f32.gmra.mxu0 %v2007
        %v2172 = vpop.f32.mrf.mxu0
        %v2173 = vadd.f32 %v2049, %v2172
        %v2174 = vpop.f32.mrf.mxu0
        %2175 = vmatprep.mubr.f32.mxu0 0.0
        %2176 = vmatmul.mubr.f32.gmra.mxu0 %v2008
        %v2177 = vpop.f32.mrf.mxu0
        %v2178 = vadd.f32 %v2049, %v2177
        %v2179 = vpop.f32.mrf.mxu0
        %2180 = vmatprep.mubr.f32.mxu0 0.0
        %2181 = vmatmul.mubr.f32.gmra.mxu0 %v2009
        %v2182 = vpop.f32.mrf.mxu0
        %v2183 = vadd.f32 %v2049, %v2182
        %v2184 = vpop.f32.mrf.mxu0
        %2185 = vmatprep.mubr.f32.mxu0 0.0
        %2186 = vmatmul.mubr.f32.gmra.mxu0 %v2010
        %v2187 = vpop.f32.mrf.mxu0
        %v2188 = vadd.f32 %v2049, %v2187
        %v2189 = vpop.f32.mrf.mxu0
        %2190 = vmatprep.mubr.f32.mxu0 0.0
        %2191 = vmatmul.mubr.f32.gmra.mxu0 %v2011
        %v2192 = vpop.f32.mrf.mxu0
        %v2193 = vadd.f32 %v2049, %v2192
        %v2194 = vpop.f32.mrf.mxu0
        %2195 = vmatprep.mubr.f32.mxu0 0.0
        %2196 = vmatmul.mubr.f32.gmra.mxu0 %v2012
        %v2197 = vpop.f32.mrf.mxu0
        %v2198 = vadd.f32 %v2049, %v2197
        %v2199 = vpop.f32.mrf.mxu0
        %2200 = vmatprep.mubr.f32.mxu0 0.0
        %2201 = vmatmul.mubr.f32.gmra.mxu0 %v2013
        %v2202 = vpop.f32.mrf.mxu0
        %v2203 = vadd.f32 %v2049, %v2202
        %v2204 = vpop.f32.mrf.mxu0
        %2205 = vmatprep.mubr.f32.mxu0 0.0
        %2206 = vmatmul.mubr.f32.gmra.mxu0 %v2014
        %v2207 = vpop.f32.mrf.mxu0
        %v2208 = vadd.f32 %v2049, %v2207
        %v2209 = vpop.f32.mrf.mxu0
        %2210 = vmatprep.mubr.f32.mxu0 0.0
        %2211 = vmatmul.mubr.f32.gmra.mxu0 %v2015
        %v2212 = vpop.f32.mrf.mxu0
        %v2213 = vadd.f32 %v2049, %v2212
        %v2214 = vpop.f32.mrf.mxu0
        %2215 = vmatprep.mubr.f32.mxu0 0.0
        %2216 = vmatmul.mubr.f32.gmra.mxu0 %v2016
        %v2217 = vpop.f32.mrf.mxu0
        %v2218 = vadd.f32 %v2049, %v2217
        %v2219 = vpop.f32.mrf.mxu0
        %2220 = vmatprep.mubr.f32.mxu0 0.0
        %2221 = vmatmul.mubr.f32.gmra.mxu0 %v2017
        %v2222 = vpop.f32.mrf.mxu0
        %v2223 = vadd.f32 %v2049, %v2222
        %v2224 = vpop.f32.mrf.mxu0
        %2225 = vmatprep.mubr.f32.mxu0 0.0
        %2226 = vmatmul.mubr.f32.gmra.mxu0 %v2018
        %v2227 = vpop.f32.mrf.mxu0
        %v2228 = vadd.f32 %v2049, %v2227
        %v2229 = vpop.f32.mrf.mxu0
        %2230 = vmatprep.mubr.f32.mxu0 0.0
        %2231 = vmatmul.mubr.f32.gmra.mxu0 %v2019
        %v2232 = vpop.f32.mrf.mxu0
        %v2233 = vadd.f32 %v2049, %v2232
        %v2234 = vpop.f32.mrf.mxu0
        %2235 = vmatprep.mubr.f32.mxu0 0.0
        %2236 = vmatmul.mubr.f32.gmra.mxu0 %v2020
        %v2237 = vpop.f32.mrf.mxu0
        %v2238 = vadd.f32 %v2049, %v2237
        %v2239 = vpop.f32.mrf.mxu0
        %2240 = vmatprep.mubr.f32.mxu0 0.0
        %2241 = vmatmul.mubr.f32.gmra.mxu0 %v2021
        %v2242 = vpop.f32.mrf.mxu0
        %v2243 = vadd.f32 %v2049, %v2242
        %v2244 = vpop.f32.mrf.mxu0
        %2245 = vmatprep.mubr.f32.mxu0 0.0
        %2246 = vmatmul.mubr.f32.gmra.mxu0 %v2022
        %v2247 = vpop.f32.mrf.mxu0
        %v2248 = vadd.f32 %v2049, %v2247
        %v2249 = vpop.f32.mrf.mxu0
        %2250 = vmatprep.mubr.f32.mxu0 0.0
        %2251 = vmatmul.mubr.f32.gmra.mxu0 %v2023
        %v2252 = vpop.f32.mrf.mxu0
        %v2253 = vadd.f32 %v2049, %v2252
        %v2254 = vpop.f32.mrf.mxu0
        %2255 = vmatprep.mubr.f32.mxu0 0.0
        %2256 = vmatmul.mubr.f32.gmra.mxu0 %v2024
        %v2257 = vpop.f32.mrf.mxu0
        %v2258 = vadd.f32 %v2049, %v2257
        %v2259 = vpop.f32.mrf.mxu0
        %2260 = vmatprep.mubr.f32.mxu0 0.0
        %2261 = vmatmul.mubr.f32.gmra.mxu0 %v2025
        %v2262 = vpop.f32.mrf.mxu0
        %v2263 = vadd.f32 %v2049, %v2262
        %v2264 = vpop.f32.mrf.mxu0
        %2265 = vmatprep.mubr.f32.mxu0 0.0
        %2266 = vmatmul.mubr.f32.gmra.mxu0 %v2026
        %v2267 = vpop.f32.mrf.mxu0
        %v2268 = vadd.f32 %v2049, %v2267
        %v2269 = vpop.f32.mrf.mxu0
        %2270 = vmatprep.mubr.f32.mxu0 0.0
        %2271 = vmatmul.mubr.f32.gmra.mxu0 %v2027
        %v2272 = vpop.f32.mrf.mxu0
        %v2273 = vadd.f32 %v2049, %v2272
        %v2274 = vpop.f32.mrf.mxu0
        %2275 = vdwg.mxu0
        %v2276 = vxor.u32 %v2118, 2147483648
        %v2277 = vxor.u32 %v2123, 2147483648
        %v2278 = vxor.u32 %v2128, 2147483648
        %v2279 = vxor.u32 %v2133, 2147483648
        %v2280 = vxor.u32 %v2138, 2147483648
        %v2281 = vxor.u32 %v2143, 2147483648
        %v2282 = vxor.u32 %v2148, 2147483648
        %v2283 = vxor.u32 %v2153, 2147483648
        %v2284 = vxor.u32 %v2158, 2147483648
        %v2285 = vxor.u32 %v2163, 2147483648
        %v2286 = vxor.u32 %v2168, 2147483648
        %v2287 = vxor.u32 %v2173, 2147483648
        %v2288 = vxor.u32 %v2178, 2147483648
        %v2289 = vxor.u32 %v2183, 2147483648
        %v2290 = vxor.u32 %v2188, 2147483648
        %v2291 = vxor.u32 %v2193, 2147483648
        %v2292 = vxor.u32 %v2198, 2147483648
        %v2293 = vxor.u32 %v2203, 2147483648
        %v2294 = vxor.u32 %v2208, 2147483648
        %v2295 = vxor.u32 %v2213, 2147483648
        %v2296 = vxor.u32 %v2218, 2147483648
        %v2297 = vxor.u32 %v2223, 2147483648
        %v2298 = vxor.u32 %v2228, 2147483648
        %v2299 = vxor.u32 %v2233, 2147483648
        %v2300 = vxor.u32 %v2238, 2147483648
        %v2301 = vxor.u32 %v2243, 2147483648
        %v2302 = vxor.u32 %v2248, 2147483648
        %v2303 = vxor.u32 %v2253, 2147483648
        %v2304 = vxor.u32 %v2258, 2147483648
        %v2305 = vxor.u32 %v2263, 2147483648
        %v2306 = vxor.u32 %v2268, 2147483648
        %v2307 = vxor.u32 %v2273, 2147483648
        %v2308 = vmul.f32 %v2276, 1.442695
        %v2309 = vpow.pop %v2308
        %v2310 = vmul.f32 %v2277, 1.442695
        %v2311 = vpow.pop %v2310
        %v2312 = vmul.f32 %v2278, 1.442695
        %v2313 = vpow.pop %v2312
        %v2314 = vmul.f32 %v2279, 1.442695
        %v2315 = vpow.pop %v2314
        %v2316 = vmul.f32 %v2280, 1.442695
        %v2317 = vpow.pop %v2316
        %v2318 = vmul.f32 %v2281, 1.442695
        %v2319 = vpow.pop %v2318
        %v2320 = vmul.f32 %v2282, 1.442695
        %v2321 = vpow.pop %v2320
        %v2322 = vmul.f32 %v2283, 1.442695
        %v2323 = vpow.pop %v2322
        %v2324 = vmul.f32 %v2284, 1.442695
        %v2325 = vpow.pop %v2324
        %v2326 = vmul.f32 %v2285, 1.442695
        %v2327 = vpow.pop %v2326
        %v2328 = vmul.f32 %v2286, 1.442695
        %v2329 = vpow.pop %v2328
        %v2330 = vmul.f32 %v2287, 1.442695
        %v2331 = vpow.pop %v2330
        %v2332 = vmul.f32 %v2288, 1.442695
        %v2333 = vpow.pop %v2332
        %v2334 = vmul.f32 %v2289, 1.442695
        %v2335 = vpow.pop %v2334
        %v2336 = vmul.f32 %v2290, 1.442695
        %v2337 = vpow.pop %v2336
        %v2338 = vmul.f32 %v2291, 1.442695
        %v2339 = vpow.pop %v2338
        %v2340 = vmul.f32 %v2292, 1.442695
        %v2341 = vpow.pop %v2340
        %v2342 = vmul.f32 %v2293, 1.442695
        %v2343 = vpow.pop %v2342
        %v2344 = vmul.f32 %v2294, 1.442695
        %v2345 = vpow.pop %v2344
        %v2346 = vmul.f32 %v2295, 1.442695
        %v2347 = vpow.pop %v2346
        %v2348 = vmul.f32 %v2296, 1.442695
        %v2349 = vpow.pop %v2348
        %v2350 = vmul.f32 %v2297, 1.442695
        %v2351 = vpow.pop %v2350
        %v2352 = vmul.f32 %v2298, 1.442695
        %v2353 = vpow.pop %v2352
        %v2354 = vmul.f32 %v2299, 1.442695
        %v2355 = vpow.pop %v2354
        %v2356 = vmul.f32 %v2300, 1.442695
        %v2357 = vpow.pop %v2356
        %v2358 = vmul.f32 %v2301, 1.442695
        %v2359 = vpow.pop %v2358
        %v2360 = vmul.f32 %v2302, 1.442695
        %v2361 = vpow.pop %v2360
        %v2362 = vmul.f32 %v2303, 1.442695
        %v2363 = vpow.pop %v2362
        %v2364 = vmul.f32 %v2304, 1.442695
        %v2365 = vpow.pop %v2364
        %v2366 = vmul.f32 %v2305, 1.442695
        %v2367 = vpow.pop %v2366
        %v2368 = vmul.f32 %v2306, 1.442695
        %v2369 = vpow.pop %v2368
        %v2370 = vmul.f32 %v2307, 1.442695
        %v2371 = vpow.pop %v2370
        %v2372 = vadd.f32 %v2309, 1.0
        %v2373 = vadd.f32 %v2311, 1.0
        %v2374 = vadd.f32 %v2313, 1.0
        %v2375 = vadd.f32 %v2315, 1.0
        %v2376 = vadd.f32 %v2317, 1.0
        %v2377 = vadd.f32 %v2319, 1.0
        %v2378 = vadd.f32 %v2321, 1.0
        %v2379 = vadd.f32 %v2323, 1.0
        %v2380 = vadd.f32 %v2325, 1.0
        %v2381 = vadd.f32 %v2327, 1.0
        %v2382 = vadd.f32 %v2329, 1.0
        %v2383 = vadd.f32 %v2331, 1.0
        %v2384 = vadd.f32 %v2333, 1.0
        %v2385 = vadd.f32 %v2335, 1.0
        %v2386 = vadd.f32 %v2337, 1.0
        %v2387 = vadd.f32 %v2339, 1.0
        %v2388 = vadd.f32 %v2341, 1.0
        %v2389 = vadd.f32 %v2343, 1.0
        %v2390 = vadd.f32 %v2345, 1.0
        %v2391 = vadd.f32 %v2347, 1.0
        %v2392 = vadd.f32 %v2349, 1.0
        %v2393 = vadd.f32 %v2351, 1.0
        %v2394 = vadd.f32 %v2353, 1.0
        %v2395 = vadd.f32 %v2355, 1.0
        %v2396 = vadd.f32 %v2357, 1.0
        %v2397 = vadd.f32 %v2359, 1.0
        %v2398 = vadd.f32 %v2361, 1.0
        %v2399 = vadd.f32 %v2363, 1.0
        %v2400 = vadd.f32 %v2365, 1.0
        %v2401 = vadd.f32 %v2367, 1.0
        %v2402 = vadd.f32 %v2369, 1.0
        %v2403 = vadd.f32 %v2371, 1.0
        %v2404 = vrcp.pop %v2372
        %v2405 = vmul.f32 1.0, %v2404
        %v2406 = vrcp.pop %v2373
        %v2407 = vmul.f32 1.0, %v2406
        %v2408 = vrcp.pop %v2374
        %v2409 = vmul.f32 1.0, %v2408
        %v2410 = vrcp.pop %v2375
        %v2411 = vmul.f32 1.0, %v2410
        %v2412 = vrcp.pop %v2376
        %v2413 = vmul.f32 1.0, %v2412
        %v2414 = vrcp.pop %v2377
        %v2415 = vmul.f32 1.0, %v2414
        %v2416 = vrcp.pop %v2378
        %v2417 = vmul.f32 1.0, %v2416
        %v2418 = vrcp.pop %v2379
        %v2419 = vmul.f32 1.0, %v2418
        %v2420 = vrcp.pop %v2380
        %v2421 = vmul.f32 1.0, %v2420
        %v2422 = vrcp.pop %v2381
        %v2423 = vmul.f32 1.0, %v2422
        %v2424 = vrcp.pop %v2382
        %v2425 = vmul.f32 1.0, %v2424
        %v2426 = vrcp.pop %v2383
        %v2427 = vmul.f32 1.0, %v2426
        %v2428 = vrcp.pop %v2384
        %v2429 = vmul.f32 1.0, %v2428
        %v2430 = vrcp.pop %v2385
        %v2431 = vmul.f32 1.0, %v2430
        %v2432 = vrcp.pop %v2386
        %v2433 = vmul.f32 1.0, %v2432
        %v2434 = vrcp.pop %v2387
        %v2435 = vmul.f32 1.0, %v2434
        %v2436 = vrcp.pop %v2388
        %v2437 = vmul.f32 1.0, %v2436
        %v2438 = vrcp.pop %v2389
        %v2439 = vmul.f32 1.0, %v2438
        %v2440 = vrcp.pop %v2390
        %v2441 = vmul.f32 1.0, %v2440
        %v2442 = vrcp.pop %v2391
        %v2443 = vmul.f32 1.0, %v2442
        %v2444 = vrcp.pop %v2392
        %v2445 = vmul.f32 1.0, %v2444
        %v2446 = vrcp.pop %v2393
        %v2447 = vmul.f32 1.0, %v2446
        %v2448 = vrcp.pop %v2394
        %v2449 = vmul.f32 1.0, %v2448
        %v2450 = vrcp.pop %v2395
        %v2451 = vmul.f32 1.0, %v2450
        %v2452 = vrcp.pop %v2396
        %v2453 = vmul.f32 1.0, %v2452
        %v2454 = vrcp.pop %v2397
        %v2455 = vmul.f32 1.0, %v2454
        %v2456 = vrcp.pop %v2398
        %v2457 = vmul.f32 1.0, %v2456
        %v2458 = vrcp.pop %v2399
        %v2459 = vmul.f32 1.0, %v2458
        %v2460 = vrcp.pop %v2400
        %v2461 = vmul.f32 1.0, %v2460
        %v2462 = vrcp.pop %v2401
        %v2463 = vmul.f32 1.0, %v2462
        %v2464 = vrcp.pop %v2402
        %v2465 = vmul.f32 1.0, %v2464
        %v2466 = vrcp.pop %v2403
        %v2467 = vmul.f32 1.0, %v2466
        %v2468 = vmul.f32 %v2118, %v2405
        %v2469 = vmul.f32 %v2123, %v2407
        %v2470 = vmul.f32 %v2128, %v2409
        %v2471 = vmul.f32 %v2133, %v2411
        %v2472 = vmul.f32 %v2138, %v2413
        %v2473 = vmul.f32 %v2143, %v2415
        %v2474 = vmul.f32 %v2148, %v2417
        %v2475 = vmul.f32 %v2153, %v2419
        %v2476 = vmul.f32 %v2158, %v2421
        %v2477 = vmul.f32 %v2163, %v2423
        %v2478 = vmul.f32 %v2168, %v2425
        %v2479 = vmul.f32 %v2173, %v2427
        %v2480 = vmul.f32 %v2178, %v2429
        %v2481 = vmul.f32 %v2183, %v2431
        %v2482 = vmul.f32 %v2188, %v2433
        %v2483 = vmul.f32 %v2193, %v2435
        %v2484 = vmul.f32 %v2198, %v2437
        %v2485 = vmul.f32 %v2203, %v2439
        %v2486 = vmul.f32 %v2208, %v2441
        %v2487 = vmul.f32 %v2213, %v2443
        %v2488 = vmul.f32 %v2218, %v2445
        %v2489 = vmul.f32 %v2223, %v2447
        %v2490 = vmul.f32 %v2228, %v2449
        %v2491 = vmul.f32 %v2233, %v2451
        %v2492 = vmul.f32 %v2238, %v2453
        %v2493 = vmul.f32 %v2243, %v2455
        %v2494 = vmul.f32 %v2248, %v2457
        %v2495 = vmul.f32 %v2253, %v2459
        %v2496 = vmul.f32 %v2258, %v2461
        %v2497 = vmul.f32 %v2263, %v2463
        %v2498 = vmul.f32 %v2268, %v2465
        %v2499 = vmul.f32 %v2273, %v2467
        %v2500 = vld [vmem:[#allocation11] sm:$0xff]
        %v2501 = vld [vmem:[#allocation11 + $0x8] sm:$0xff]
        %v2502 = vld [vmem:[#allocation11 + $0x10] sm:$0xff]
        %v2503 = vld [vmem:[#allocation11 + $0x18] sm:$0xff]
        %v2504 = vld [vmem:[#allocation11 + $0x20] sm:$0xff]
        %v2505 = vld [vmem:[#allocation11 + $0x28] sm:$0xff]
        %v2506 = vld [vmem:[#allocation11 + $0x30] sm:$0xff]
        %v2507 = vld [vmem:[#allocation11 + $0x38] sm:$0xff]
        %v2508 = vld [vmem:[#allocation11 + $0x40] sm:$0xff]
        %v2509 = vld [vmem:[#allocation11 + $0x48] sm:$0xff]
        %v2510 = vld [vmem:[#allocation11 + $0x50] sm:$0xff]
        %v2511 = vld [vmem:[#allocation11 + $0x58] sm:$0xff]
        %v2512 = vld [vmem:[#allocation11 + $0x60] sm:$0xff]
        %v2513 = vld [vmem:[#allocation11 + $0x68] sm:$0xff]
        %v2514 = vld [vmem:[#allocation11 + $0x70] sm:$0xff]
        %v2515 = vld [vmem:[#allocation11 + $0x78] sm:$0xff]
        %v2516 = vld [vmem:[%s10] sm:$0x1]
        %v2518 = vlaneseq
        %v2519 = vshrl.u32 %v2518, 7
        %v2520 = vsub.s32 0, %v2519
        %v2521 = vrot.slane %v2516, %v2520
        %2523 = vmatprep.subr.mxu0 0.0
        %2524 = vmatpush1.msra.mxu0 %v2515
        %2525 = vmatprep.subr.mxu0 0.0
        %2526 = vmatpush1.msra.mxu0 %v2514
        %2527 = vmatprep.subr.mxu0 0.0
        %2528 = vmatpush1.msra.mxu0 %v2513
        %2529 = vmatprep.subr.mxu0 0.0
        %2530 = vmatpush1.msra.mxu0 %v2512
        %2531 = vmatprep.subr.mxu0 0.0
        %2532 = vmatpush1.msra.mxu0 %v2511
        %2533 = vmatprep.subr.mxu0 0.0
        %2534 = vmatpush1.msra.mxu0 %v2510
        %2535 = vmatprep.subr.mxu0 0.0
        %2536 = vmatpush1.msra.mxu0 %v2509
        %2537 = vmatprep.subr.mxu0 0.0
        %2538 = vmatpush1.msra.mxu0 %v2508
        %2539 = vmatprep.subr.mxu0 0.0
        %2540 = vmatpush1.msra.mxu0 %v2507
        %2541 = vmatprep.subr.mxu0 0.0
        %2542 = vmatpush1.msra.mxu0 %v2506
        %2543 = vmatprep.subr.mxu0 0.0
        %2544 = vmatpush1.msra.mxu0 %v2505
        %2545 = vmatprep.subr.mxu0 0.0
        %2546 = vmatpush1.msra.mxu0 %v2504
        %2547 = vmatprep.subr.mxu0 0.0
        %2548 = vmatpush1.msra.mxu0 %v2503
        %2549 = vmatprep.subr.mxu0 0.0
        %2550 = vmatpush1.msra.mxu0 %v2502
        %2551 = vmatprep.subr.mxu0 0.0
        %2552 = vmatpush1.msra.mxu0 %v2501
        %2553 = vmatprep.subr.mxu0 0.0
        %2554 = vmatpush1.msra.mxu0 %v2500
        %2555 = vmatprep.subr.mxu0 0.0
        %2556 = vmatpush2.msra.mxu0 0.0
        %2557 = vmatprep.subr.mxu0 0.0
        %2558 = vmatpush2.msra.mxu0 0.0
        %2559 = vmatprep.subr.mxu0 0.0
        %2560 = vmatpush2.msra.mxu0 0.0
        %2561 = vmatprep.subr.mxu0 0.0
        %2562 = vmatpush2.msra.mxu0 0.0
        %2563 = vmatprep.subr.mxu0 0.0
        %2564 = vmatpush2.msra.mxu0 0.0
        %2565 = vmatprep.subr.mxu0 0.0
        %2566 = vmatpush2.msra.mxu0 0.0
        %2567 = vmatprep.subr.mxu0 0.0
        %2568 = vmatpush2.msra.mxu0 0.0
        %2569 = vmatprep.subr.mxu0 0.0
        %2570 = vmatpush2.msra.mxu0 0.0
        %2571 = vmatprep.subr.mxu0 0.0
        %2572 = vmatpush2.msra.mxu0 0.0
        %2573 = vmatprep.subr.mxu0 0.0
        %2574 = vmatpush2.msra.mxu0 0.0
        %2575 = vmatprep.subr.mxu0 0.0
        %2576 = vmatpush2.msra.mxu0 0.0
        %2577 = vmatprep.subr.mxu0 0.0
        %2578 = vmatpush2.msra.mxu0 0.0
        %2579 = vmatprep.subr.mxu0 0.0
        %2580 = vmatpush2.msra.mxu0 0.0
        %2581 = vmatprep.subr.mxu0 0.0
        %2582 = vmatpush2.msra.mxu0 0.0
        %2583 = vmatprep.subr.mxu0 0.0
        %2584 = vmatpush2.msra.mxu0 0.0
        %2585 = vmatprep.subr.mxu0 0.0
        %2586 = vmatpush2.msra.mxu0 0.0
        %2587 = vmatprep.mubr.f32.mxu0 0.0
        %2588 = vmatmul.mubr.f32.gmra.mxu0 %v2468
        %v2589 = vpop.f32.mrf.mxu0
        %v2590 = vadd.f32 %v2521, %v2589
        %v2591 = vpop.f32.mrf.mxu0
        %2592 = vmatprep.mubr.f32.mxu0 0.0
        %2593 = vmatmul.mubr.f32.gmra.mxu0 %v2469
        %v2594 = vpop.f32.mrf.mxu0
        %v2595 = vadd.f32 %v2521, %v2594
        %v2596 = vpop.f32.mrf.mxu0
        %2597 = vmatprep.mubr.f32.mxu0 0.0
        %2598 = vmatmul.mubr.f32.gmra.mxu0 %v2470
        %v2599 = vpop.f32.mrf.mxu0
        %v2600 = vadd.f32 %v2521, %v2599
        %v2601 = vpop.f32.mrf.mxu0
        %2602 = vmatprep.mubr.f32.mxu0 0.0
        %2603 = vmatmul.mubr.f32.gmra.mxu0 %v2471
        %v2604 = vpop.f32.mrf.mxu0
        %v2605 = vadd.f32 %v2521, %v2604
        %v2606 = vpop.f32.mrf.mxu0
        %2607 = vmatprep.mubr.f32.mxu0 0.0
        %2608 = vmatmul.mubr.f32.gmra.mxu0 %v2472
        %v2609 = vpop.f32.mrf.mxu0
        %v2610 = vadd.f32 %v2521, %v2609
        %v2611 = vpop.f32.mrf.mxu0
        %2612 = vmatprep.mubr.f32.mxu0 0.0
        %2613 = vmatmul.mubr.f32.gmra.mxu0 %v2473
        %v2614 = vpop.f32.mrf.mxu0
        %v2615 = vadd.f32 %v2521, %v2614
        %v2616 = vpop.f32.mrf.mxu0
        %2617 = vmatprep.mubr.f32.mxu0 0.0
        %2618 = vmatmul.mubr.f32.gmra.mxu0 %v2474
        %v2619 = vpop.f32.mrf.mxu0
        %v2620 = vadd.f32 %v2521, %v2619
        %v2621 = vpop.f32.mrf.mxu0
        %2622 = vmatprep.mubr.f32.mxu0 0.0
        %2623 = vmatmul.mubr.f32.gmra.mxu0 %v2475
        %v2624 = vpop.f32.mrf.mxu0
        %v2625 = vadd.f32 %v2521, %v2624
        %v2626 = vpop.f32.mrf.mxu0
        %2627 = vmatprep.mubr.f32.mxu0 0.0
        %2628 = vmatmul.mubr.f32.gmra.mxu0 %v2476
        %v2629 = vpop.f32.mrf.mxu0
        %v2630 = vadd.f32 %v2521, %v2629
        %v2631 = vpop.f32.mrf.mxu0
        %2632 = vmatprep.mubr.f32.mxu0 0.0
        %2633 = vmatmul.mubr.f32.gmra.mxu0 %v2477
        %v2634 = vpop.f32.mrf.mxu0
        %v2635 = vadd.f32 %v2521, %v2634
        %v2636 = vpop.f32.mrf.mxu0
        %2637 = vmatprep.mubr.f32.mxu0 0.0
        %2638 = vmatmul.mubr.f32.gmra.mxu0 %v2478
        %v2639 = vpop.f32.mrf.mxu0
        %v2640 = vadd.f32 %v2521, %v2639
        %v2641 = vpop.f32.mrf.mxu0
        %2642 = vmatprep.mubr.f32.mxu0 0.0
        %2643 = vmatmul.mubr.f32.gmra.mxu0 %v2479
        %v2644 = vpop.f32.mrf.mxu0
        %v2645 = vadd.f32 %v2521, %v2644
        %v2646 = vpop.f32.mrf.mxu0
        %2647 = vmatprep.mubr.f32.mxu0 0.0
        %2648 = vmatmul.mubr.f32.gmra.mxu0 %v2480
        %v2649 = vpop.f32.mrf.mxu0
        %v2650 = vadd.f32 %v2521, %v2649
        %v2651 = vpop.f32.mrf.mxu0
        %2652 = vmatprep.mubr.f32.mxu0 0.0
        %2653 = vmatmul.mubr.f32.gmra.mxu0 %v2481
        %v2654 = vpop.f32.mrf.mxu0
        %v2655 = vadd.f32 %v2521, %v2654
        %v2656 = vpop.f32.mrf.mxu0
        %2657 = vmatprep.mubr.f32.mxu0 0.0
        %2658 = vmatmul.mubr.f32.gmra.mxu0 %v2482
        %v2659 = vpop.f32.mrf.mxu0
        %v2660 = vadd.f32 %v2521, %v2659
        %v2661 = vpop.f32.mrf.mxu0
        %2662 = vmatprep.mubr.f32.mxu0 0.0
        %2663 = vmatmul.mubr.f32.gmra.mxu0 %v2483
        %v2664 = vpop.f32.mrf.mxu0
        %v2665 = vadd.f32 %v2521, %v2664
        %v2666 = vpop.f32.mrf.mxu0
        %2667 = vmatprep.mubr.f32.mxu0 0.0
        %2668 = vmatmul.mubr.f32.gmra.mxu0 %v2484
        %v2669 = vpop.f32.mrf.mxu0
        %v2670 = vadd.f32 %v2521, %v2669
        %v2671 = vpop.f32.mrf.mxu0
        %2672 = vmatprep.mubr.f32.mxu0 0.0
        %2673 = vmatmul.mubr.f32.gmra.mxu0 %v2485
        %v2674 = vpop.f32.mrf.mxu0
        %v2675 = vadd.f32 %v2521, %v2674
        %v2676 = vpop.f32.mrf.mxu0
        %2677 = vmatprep.mubr.f32.mxu0 0.0
        %2678 = vmatmul.mubr.f32.gmra.mxu0 %v2486
        %v2679 = vpop.f32.mrf.mxu0
        %v2680 = vadd.f32 %v2521, %v2679
        %v2681 = vpop.f32.mrf.mxu0
        %2682 = vmatprep.mubr.f32.mxu0 0.0
        %2683 = vmatmul.mubr.f32.gmra.mxu0 %v2487
        %v2684 = vpop.f32.mrf.mxu0
        %v2685 = vadd.f32 %v2521, %v2684
        %v2686 = vpop.f32.mrf.mxu0
        %2687 = vmatprep.mubr.f32.mxu0 0.0
        %2688 = vmatmul.mubr.f32.gmra.mxu0 %v2488
        %v2689 = vpop.f32.mrf.mxu0
        %v2690 = vadd.f32 %v2521, %v2689
        %v2691 = vpop.f32.mrf.mxu0
        %2692 = vmatprep.mubr.f32.mxu0 0.0
        %2693 = vmatmul.mubr.f32.gmra.mxu0 %v2489
        %v2694 = vpop.f32.mrf.mxu0
        %v2695 = vadd.f32 %v2521, %v2694
        %v2696 = vpop.f32.mrf.mxu0
        %2697 = vmatprep.mubr.f32.mxu0 0.0
        %2698 = vmatmul.mubr.f32.gmra.mxu0 %v2490
        %v2699 = vpop.f32.mrf.mxu0
        %v2700 = vadd.f32 %v2521, %v2699
        %v2701 = vpop.f32.mrf.mxu0
        %2702 = vmatprep.mubr.f32.mxu0 0.0
        %2703 = vmatmul.mubr.f32.gmra.mxu0 %v2491
        %v2704 = vpop.f32.mrf.mxu0
        %v2705 = vadd.f32 %v2521, %v2704
        %v2706 = vpop.f32.mrf.mxu0
        %2707 = vmatprep.mubr.f32.mxu0 0.0
        %2708 = vmatmul.mubr.f32.gmra.mxu0 %v2492
        %v2709 = vpop.f32.mrf.mxu0
        %v2710 = vadd.f32 %v2521, %v2709
        %v2711 = vpop.f32.mrf.mxu0
        %2712 = vmatprep.mubr.f32.mxu0 0.0
        %2713 = vmatmul.mubr.f32.gmra.mxu0 %v2493
        %v2714 = vpop.f32.mrf.mxu0
        %v2715 = vadd.f32 %v2521, %v2714
        %v2716 = vpop.f32.mrf.mxu0
        %2717 = vmatprep.mubr.f32.mxu0 0.0
        %2718 = vmatmul.mubr.f32.gmra.mxu0 %v2494
        %v2719 = vpop.f32.mrf.mxu0
        %v2720 = vadd.f32 %v2521, %v2719
        %v2721 = vpop.f32.mrf.mxu0
        %2722 = vmatprep.mubr.f32.mxu0 0.0
        %2723 = vmatmul.mubr.f32.gmra.mxu0 %v2495
        %v2724 = vpop.f32.mrf.mxu0
        %v2725 = vadd.f32 %v2521, %v2724
        %v2726 = vpop.f32.mrf.mxu0
        %2727 = vmatprep.mubr.f32.mxu0 0.0
        %2728 = vmatmul.mubr.f32.gmra.mxu0 %v2496
        %v2729 = vpop.f32.mrf.mxu0
        %v2730 = vadd.f32 %v2521, %v2729
        %v2731 = vpop.f32.mrf.mxu0
        %2732 = vmatprep.mubr.f32.mxu0 0.0
        %2733 = vmatmul.mubr.f32.gmra.mxu0 %v2497
        %v2734 = vpop.f32.mrf.mxu0
        %v2735 = vadd.f32 %v2521, %v2734
        %v2736 = vpop.f32.mrf.mxu0
        %2737 = vmatprep.mubr.f32.mxu0 0.0
        %2738 = vmatmul.mubr.f32.gmra.mxu0 %v2498
        %v2739 = vpop.f32.mrf.mxu0
        %v2740 = vadd.f32 %v2521, %v2739
        %v2741 = vpop.f32.mrf.mxu0
        %2742 = vmatprep.mubr.f32.mxu0 0.0
        %2743 = vmatmul.mubr.f32.gmra.mxu0 %v2499
        %v2744 = vpop.f32.mrf.mxu0
        %v2745 = vadd.f32 %v2521, %v2744
        %v2746 = vpop.f32.mrf.mxu0
        %2747 = vdwg.mxu0
        %v2748 = vadd.f32 %v1996, %v2590
        %v2749 = vadd.f32 %v1997, %v2595
        %v2750 = vadd.f32 %v1998, %v2600
        %v2751 = vadd.f32 %v1999, %v2605
        %v2752 = vadd.f32 %v2000, %v2610
        %v2753 = vadd.f32 %v2001, %v2615
        %v2754 = vadd.f32 %v2002, %v2620
        %v2755 = vadd.f32 %v2003, %v2625
        %v2756 = vadd.f32 %v2004, %v2630
        %v2757 = vadd.f32 %v2005, %v2635
        %v2758 = vadd.f32 %v2006, %v2640
        %v2759 = vadd.f32 %v2007, %v2645
        %v2760 = vadd.f32 %v2008, %v2650
        %v2761 = vadd.f32 %v2009, %v2655
        %v2762 = vadd.f32 %v2010, %v2660
        %v2763 = vadd.f32 %v2011, %v2665
        %v2764 = vadd.f32 %v2012, %v2670
        %v2765 = vadd.f32 %v2013, %v2675
        %v2766 = vadd.f32 %v2014, %v2680
        %v2767 = vadd.f32 %v2015, %v2685
        %v2768 = vadd.f32 %v2016, %v2690
        %v2769 = vadd.f32 %v2017, %v2695
        %v2770 = vadd.f32 %v2018, %v2700
        %v2771 = vadd.f32 %v2019, %v2705
        %v2772 = vadd.f32 %v2020, %v2710
        %v2773 = vadd.f32 %v2021, %v2715
        %v2774 = vadd.f32 %v2022, %v2720
        %v2775 = vadd.f32 %v2023, %v2725
        %v2776 = vadd.f32 %v2024, %v2730
        %v2777 = vadd.f32 %v2025, %v2735
        %v2778 = vadd.f32 %v2026, %v2740
        %v2779 = vadd.f32 %v2027, %v2745
        %v2780 = vxor.u32 %v2748, 2147483648
        %v2781 = vxor.u32 %v2749, 2147483648
        %v2782 = vxor.u32 %v2750, 2147483648
        %v2783 = vxor.u32 %v2751, 2147483648
        %v2784 = vxor.u32 %v2752, 2147483648
        %v2785 = vxor.u32 %v2753, 2147483648
        %v2786 = vxor.u32 %v2754, 2147483648
        %v2787 = vxor.u32 %v2755, 2147483648
        %v2788 = vxor.u32 %v2756, 2147483648
        %v2789 = vxor.u32 %v2757, 2147483648
        %v2790 = vxor.u32 %v2758, 2147483648
        %v2791 = vxor.u32 %v2759, 2147483648
        %v2792 = vxor.u32 %v2760, 2147483648
        %v2793 = vxor.u32 %v2761, 2147483648
        %v2794 = vxor.u32 %v2762, 2147483648
        %v2795 = vxor.u32 %v2763, 2147483648
        %v2796 = vxor.u32 %v2764, 2147483648
        %v2797 = vxor.u32 %v2765, 2147483648
        %v2798 = vxor.u32 %v2766, 2147483648
        %v2799 = vxor.u32 %v2767, 2147483648
        %v2800 = vxor.u32 %v2768, 2147483648
        %v2801 = vxor.u32 %v2769, 2147483648
        %v2802 = vxor.u32 %v2770, 2147483648
        %v2803 = vxor.u32 %v2771, 2147483648
        %v2804 = vxor.u32 %v2772, 2147483648
        %v2805 = vxor.u32 %v2773, 2147483648
        %v2806 = vxor.u32 %v2774, 2147483648
        %v2807 = vxor.u32 %v2775, 2147483648
        %v2808 = vxor.u32 %v2776, 2147483648
        %v2809 = vxor.u32 %v2777, 2147483648
        %v2810 = vxor.u32 %v2778, 2147483648
        %v2811 = vxor.u32 %v2779, 2147483648
        %v2812 = vmul.f32 %v2780, 1.442695
        %v2813 = vpow.pop %v2812
        %v2814 = vmul.f32 %v2781, 1.442695
        %v2815 = vpow.pop %v2814
        %v2816 = vmul.f32 %v2782, 1.442695
        %v2817 = vpow.pop %v2816
        %v2818 = vmul.f32 %v2783, 1.442695
        %v2819 = vpow.pop %v2818
        %v2820 = vmul.f32 %v2784, 1.442695
        %v2821 = vpow.pop %v2820
        %v2822 = vmul.f32 %v2785, 1.442695
        %v2823 = vpow.pop %v2822
        %v2824 = vmul.f32 %v2786, 1.442695
        %v2825 = vpow.pop %v2824
        %v2826 = vmul.f32 %v2787, 1.442695
        %v2827 = vpow.pop %v2826
        %v2828 = vmul.f32 %v2788, 1.442695
        %v2829 = vpow.pop %v2828
        %v2830 = vmul.f32 %v2789, 1.442695
        %v2831 = vpow.pop %v2830
        %v2832 = vmul.f32 %v2790, 1.442695
        %v2833 = vpow.pop %v2832
        %v2834 = vmul.f32 %v2791, 1.442695
        %v2835 = vpow.pop %v2834
        %v2836 = vmul.f32 %v2792, 1.442695
        %v2837 = vpow.pop %v2836
        %v2838 = vmul.f32 %v2793, 1.442695
        %v2839 = vpow.pop %v2838
        %v2840 = vmul.f32 %v2794, 1.442695
        %v2841 = vpow.pop %v2840
        %v2842 = vmul.f32 %v2795, 1.442695
        %v2843 = vpow.pop %v2842
        %v2844 = vmul.f32 %v2796, 1.442695
        %v2845 = vpow.pop %v2844
        %v2846 = vmul.f32 %v2797, 1.442695
        %v2847 = vpow.pop %v2846
        %v2848 = vmul.f32 %v2798, 1.442695
        %v2849 = vpow.pop %v2848
        %v2850 = vmul.f32 %v2799, 1.442695
        %v2851 = vpow.pop %v2850
        %v2852 = vmul.f32 %v2800, 1.442695
        %v2853 = vpow.pop %v2852
        %v2854 = vmul.f32 %v2801, 1.442695
        %v2855 = vpow.pop %v2854
        %v2856 = vmul.f32 %v2802, 1.442695
        %v2857 = vpow.pop %v2856
        %v2858 = vmul.f32 %v2803, 1.442695
        %v2859 = vpow.pop %v2858
        %v2860 = vmul.f32 %v2804, 1.442695
        %v2861 = vpow.pop %v2860
        %v2862 = vmul.f32 %v2805, 1.442695
        %v2863 = vpow.pop %v2862
        %v2864 = vmul.f32 %v2806, 1.442695
        %v2865 = vpow.pop %v2864
        %v2866 = vmul.f32 %v2807, 1.442695
        %v2867 = vpow.pop %v2866
        %v2868 = vmul.f32 %v2808, 1.442695
        %v2869 = vpow.pop %v2868
        %v2870 = vmul.f32 %v2809, 1.442695
        %v2871 = vpow.pop %v2870
        %v2872 = vmul.f32 %v2810, 1.442695
        %v2873 = vpow.pop %v2872
        %v2874 = vmul.f32 %v2811, 1.442695
        %v2875 = vpow.pop %v2874
        %v2876 = vadd.f32 %v2813, 1.0
        %v2877 = vadd.f32 %v2815, 1.0
        %v2878 = vadd.f32 %v2817, 1.0
        %v2879 = vadd.f32 %v2819, 1.0
        %v2880 = vadd.f32 %v2821, 1.0
        %v2881 = vadd.f32 %v2823, 1.0
        %v2882 = vadd.f32 %v2825, 1.0
        %v2883 = vadd.f32 %v2827, 1.0
        %v2884 = vadd.f32 %v2829, 1.0
        %v2885 = vadd.f32 %v2831, 1.0
        %v2886 = vadd.f32 %v2833, 1.0
        %v2887 = vadd.f32 %v2835, 1.0
        %v2888 = vadd.f32 %v2837, 1.0
        %v2889 = vadd.f32 %v2839, 1.0
        %v2890 = vadd.f32 %v2841, 1.0
        %v2891 = vadd.f32 %v2843, 1.0
        %v2892 = vadd.f32 %v2845, 1.0
        %v2893 = vadd.f32 %v2847, 1.0
        %v2894 = vadd.f32 %v2849, 1.0
        %v2895 = vadd.f32 %v2851, 1.0
        %v2896 = vadd.f32 %v2853, 1.0
        %v2897 = vadd.f32 %v2855, 1.0
        %v2898 = vadd.f32 %v2857, 1.0
        %v2899 = vadd.f32 %v2859, 1.0
        %v2900 = vadd.f32 %v2861, 1.0
        %v2901 = vadd.f32 %v2863, 1.0
        %v2902 = vadd.f32 %v2865, 1.0
        %v2903 = vadd.f32 %v2867, 1.0
        %v2904 = vadd.f32 %v2869, 1.0
        %v2905 = vadd.f32 %v2871, 1.0
        %v2906 = vadd.f32 %v2873, 1.0
        %v2907 = vadd.f32 %v2875, 1.0
        %v2908 = vrcp.pop %v2876
        %v2909 = vmul.f32 1.0, %v2908
        %v2910 = vrcp.pop %v2877
        %v2911 = vmul.f32 1.0, %v2910
        %v2912 = vrcp.pop %v2878
        %v2913 = vmul.f32 1.0, %v2912
        %v2914 = vrcp.pop %v2879
        %v2915 = vmul.f32 1.0, %v2914
        %v2916 = vrcp.pop %v2880
        %v2917 = vmul.f32 1.0, %v2916
        %v2918 = vrcp.pop %v2881
        %v2919 = vmul.f32 1.0, %v2918
        %v2920 = vrcp.pop %v2882
        %v2921 = vmul.f32 1.0, %v2920
        %v2922 = vrcp.pop %v2883
        %v2923 = vmul.f32 1.0, %v2922
        %v2924 = vrcp.pop %v2884
        %v2925 = vmul.f32 1.0, %v2924
        %v2926 = vrcp.pop %v2885
        %v2927 = vmul.f32 1.0, %v2926
        %v2928 = vrcp.pop %v2886
        %v2929 = vmul.f32 1.0, %v2928
        %v2930 = vrcp.pop %v2887
        %v2931 = vmul.f32 1.0, %v2930
        %v2932 = vrcp.pop %v2888
        %v2933 = vmul.f32 1.0, %v2932
        %v2934 = vrcp.pop %v2889
        %v2935 = vmul.f32 1.0, %v2934
        %v2936 = vrcp.pop %v2890
        %v2937 = vmul.f32 1.0, %v2936
        %v2938 = vrcp.pop %v2891
        %v2939 = vmul.f32 1.0, %v2938
        %v2940 = vrcp.pop %v2892
        %v2941 = vmul.f32 1.0, %v2940
        %v2942 = vrcp.pop %v2893
        %v2943 = vmul.f32 1.0, %v2942
        %v2944 = vrcp.pop %v2894
        %v2945 = vmul.f32 1.0, %v2944
        %v2946 = vrcp.pop %v2895
        %v2947 = vmul.f32 1.0, %v2946
        %v2948 = vrcp.pop %v2896
        %v2949 = vmul.f32 1.0, %v2948
        %v2950 = vrcp.pop %v2897
        %v2951 = vmul.f32 1.0, %v2950
        %v2952 = vrcp.pop %v2898
        %v2953 = vmul.f32 1.0, %v2952
        %v2954 = vrcp.pop %v2899
        %v2955 = vmul.f32 1.0, %v2954
        %v2956 = vrcp.pop %v2900
        %v2957 = vmul.f32 1.0, %v2956
        %v2958 = vrcp.pop %v2901
        %v2959 = vmul.f32 1.0, %v2958
        %v2960 = vrcp.pop %v2902
        %v2961 = vmul.f32 1.0, %v2960
        %v2962 = vrcp.pop %v2903
        %v2963 = vmul.f32 1.0, %v2962
        %v2964 = vrcp.pop %v2904
        %v2965 = vmul.f32 1.0, %v2964
        %v2966 = vrcp.pop %v2905
        %v2967 = vmul.f32 1.0, %v2966
        %v2968 = vrcp.pop %v2906
        %v2969 = vmul.f32 1.0, %v2968
        %v2970 = vrcp.pop %v2907
        %v2971 = vmul.f32 1.0, %v2970
        %v2972 = vmul.f32 %v2748, %v2909
        %v2973 = vmul.f32 %v2749, %v2911
        %v2974 = vmul.f32 %v2750, %v2913
        %v2975 = vmul.f32 %v2751, %v2915
        %v2976 = vmul.f32 %v2752, %v2917
        %v2977 = vmul.f32 %v2753, %v2919
        %v2978 = vmul.f32 %v2754, %v2921
        %v2979 = vmul.f32 %v2755, %v2923
        %v2980 = vmul.f32 %v2756, %v2925
        %v2981 = vmul.f32 %v2757, %v2927
        %v2982 = vmul.f32 %v2758, %v2929
        %v2983 = vmul.f32 %v2759, %v2931
        %v2984 = vmul.f32 %v2760, %v2933
        %v2985 = vmul.f32 %v2761, %v2935
        %v2986 = vmul.f32 %v2762, %v2937
        %v2987 = vmul.f32 %v2763, %v2939
        %v2988 = vmul.f32 %v2764, %v2941
        %v2989 = vmul.f32 %v2765, %v2943
        %v2990 = vmul.f32 %v2766, %v2945
        %v2991 = vmul.f32 %v2767, %v2947
        %v2992 = vmul.f32 %v2768, %v2949
        %v2993 = vmul.f32 %v2769, %v2951
        %v2994 = vmul.f32 %v2770, %v2953
        %v2995 = vmul.f32 %v2771, %v2955
        %v2996 = vmul.f32 %v2772, %v2957
        %v2997 = vmul.f32 %v2773, %v2959
        %v2998 = vmul.f32 %v2774, %v2961
        %v2999 = vmul.f32 %v2775, %v2963
        %v3000 = vmul.f32 %v2776, %v2965
        %v3001 = vmul.f32 %v2777, %v2967
        %v3002 = vmul.f32 %v2778, %v2969
        %v3003 = vmul.f32 %v2779, %v2971
        %v3004 = vld [vmem:[#allocation13] sm:$0xff]
        %v3005 = vld [vmem:[#allocation13 + $0x8] sm:$0xff]
        %v3006 = vld [vmem:[#allocation13 + $0x10] sm:$0xff]
        %v3007 = vld [vmem:[#allocation13 + $0x18] sm:$0xff]
        %v3008 = vld [vmem:[#allocation13 + $0x20] sm:$0xff]
        %v3009 = vld [vmem:[#allocation13 + $0x28] sm:$0xff]
        %v3010 = vld [vmem:[#allocation13 + $0x30] sm:$0xff]
        %v3011 = vld [vmem:[#allocation13 + $0x38] sm:$0xff]
        %v3012 = vld [vmem:[#allocation13 + $0x40] sm:$0xff]
        %v3013 = vld [vmem:[#allocation13 + $0x48] sm:$0xff]
        %v3014 = vld [vmem:[#allocation13 + $0x50] sm:$0xff]
        %v3015 = vld [vmem:[#allocation13 + $0x58] sm:$0xff]
        %v3016 = vld [vmem:[#allocation13 + $0x60] sm:$0xff]
        %v3017 = vld [vmem:[#allocation13 + $0x68] sm:$0xff]
        %v3018 = vld [vmem:[#allocation13 + $0x70] sm:$0xff]
        %v3019 = vld [vmem:[#allocation13 + $0x78] sm:$0xff]
        %v3020 = vld [vmem:[%s12] sm:$0x1]
        %v3022 = vlaneseq
        %v3023 = vshrl.u32 %v3022, 7
        %v3024 = vsub.s32 0, %v3023
        %v3025 = vrot.slane %v3020, %v3024
        %3027 = vmatprep.subr.mxu0 0.0
        %3028 = vmatpush1.msra.mxu0 %v3019
        %3029 = vmatprep.subr.mxu0 0.0
        %3030 = vmatpush1.msra.mxu0 %v3018
        %3031 = vmatprep.subr.mxu0 0.0
        %3032 = vmatpush1.msra.mxu0 %v3017
        %3033 = vmatprep.subr.mxu0 0.0
        %3034 = vmatpush1.msra.mxu0 %v3016
        %3035 = vmatprep.subr.mxu0 0.0
        %3036 = vmatpush1.msra.mxu0 %v3015
        %3037 = vmatprep.subr.mxu0 0.0
        %3038 = vmatpush1.msra.mxu0 %v3014
        %3039 = vmatprep.subr.mxu0 0.0
        %3040 = vmatpush1.msra.mxu0 %v3013
        %3041 = vmatprep.subr.mxu0 0.0
        %3042 = vmatpush1.msra.mxu0 %v3012
        %3043 = vmatprep.subr.mxu0 0.0
        %3044 = vmatpush1.msra.mxu0 %v3011
        %3045 = vmatprep.subr.mxu0 0.0
        %3046 = vmatpush1.msra.mxu0 %v3010
        %3047 = vmatprep.subr.mxu0 0.0
        %3048 = vmatpush1.msra.mxu0 %v3009
        %3049 = vmatprep.subr.mxu0 0.0
        %3050 = vmatpush1.msra.mxu0 %v3008
        %3051 = vmatprep.subr.mxu0 0.0
        %3052 = vmatpush1.msra.mxu0 %v3007
        %3053 = vmatprep.subr.mxu0 0.0
        %3054 = vmatpush1.msra.mxu0 %v3006
        %3055 = vmatprep.subr.mxu0 0.0
        %3056 = vmatpush1.msra.mxu0 %v3005
        %3057 = vmatprep.subr.mxu0 0.0
        %3058 = vmatpush1.msra.mxu0 %v3004
        %3059 = vmatprep.subr.mxu0 0.0
        %3060 = vmatpush2.msra.mxu0 0.0
        %3061 = vmatprep.subr.mxu0 0.0
        %3062 = vmatpush2.msra.mxu0 0.0
        %3063 = vmatprep.subr.mxu0 0.0
        %3064 = vmatpush2.msra.mxu0 0.0
        %3065 = vmatprep.subr.mxu0 0.0
        %3066 = vmatpush2.msra.mxu0 0.0
        %3067 = vmatprep.subr.mxu0 0.0
        %3068 = vmatpush2.msra.mxu0 0.0
        %3069 = vmatprep.subr.mxu0 0.0
        %3070 = vmatpush2.msra.mxu0 0.0
        %3071 = vmatprep.subr.mxu0 0.0
        %3072 = vmatpush2.msra.mxu0 0.0
        %3073 = vmatprep.subr.mxu0 0.0
        %3074 = vmatpush2.msra.mxu0 0.0
        %3075 = vmatprep.subr.mxu0 0.0
        %3076 = vmatpush2.msra.mxu0 0.0
        %3077 = vmatprep.subr.mxu0 0.0
        %3078 = vmatpush2.msra.mxu0 0.0
        %3079 = vmatprep.subr.mxu0 0.0
        %3080 = vmatpush2.msra.mxu0 0.0
        %3081 = vmatprep.subr.mxu0 0.0
        %3082 = vmatpush2.msra.mxu0 0.0
        %3083 = vmatprep.subr.mxu0 0.0
        %3084 = vmatpush2.msra.mxu0 0.0
        %3085 = vmatprep.subr.mxu0 0.0
        %3086 = vmatpush2.msra.mxu0 0.0
        %3087 = vmatprep.subr.mxu0 0.0
        %3088 = vmatpush2.msra.mxu0 0.0
        %3089 = vmatprep.subr.mxu0 0.0
        %3090 = vmatpush2.msra.mxu0 0.0
        %3091 = vmatprep.mubr.f32.mxu0 0.0
        %3092 = vmatmul.mubr.f32.gmra.mxu0 %v2972
        %v3093 = vpop.f32.mrf.mxu0
        %v3094 = vadd.f32 %v3025, %v3093
        %v3095 = vpop.f32.mrf.mxu0
        %3096 = vmatprep.mubr.f32.mxu0 0.0
        %3097 = vmatmul.mubr.f32.gmra.mxu0 %v2973
        %v3098 = vpop.f32.mrf.mxu0
        %v3099 = vadd.f32 %v3025, %v3098
        %v3100 = vpop.f32.mrf.mxu0
        %3101 = vmatprep.mubr.f32.mxu0 0.0
        %3102 = vmatmul.mubr.f32.gmra.mxu0 %v2974
        %v3103 = vpop.f32.mrf.mxu0
        %v3104 = vadd.f32 %v3025, %v3103
        %v3105 = vpop.f32.mrf.mxu0
        %3106 = vmatprep.mubr.f32.mxu0 0.0
        %3107 = vmatmul.mubr.f32.gmra.mxu0 %v2975
        %v3108 = vpop.f32.mrf.mxu0
        %v3109 = vadd.f32 %v3025, %v3108
        %v3110 = vpop.f32.mrf.mxu0
        %3111 = vmatprep.mubr.f32.mxu0 0.0
        %3112 = vmatmul.mubr.f32.gmra.mxu0 %v2976
        %v3113 = vpop.f32.mrf.mxu0
        %v3114 = vadd.f32 %v3025, %v3113
        %v3115 = vpop.f32.mrf.mxu0
        %3116 = vmatprep.mubr.f32.mxu0 0.0
        %3117 = vmatmul.mubr.f32.gmra.mxu0 %v2977
        %v3118 = vpop.f32.mrf.mxu0
        %v3119 = vadd.f32 %v3025, %v3118
        %v3120 = vpop.f32.mrf.mxu0
        %3121 = vmatprep.mubr.f32.mxu0 0.0
        %3122 = vmatmul.mubr.f32.gmra.mxu0 %v2978
        %v3123 = vpop.f32.mrf.mxu0
        %v3124 = vadd.f32 %v3025, %v3123
        %v3125 = vpop.f32.mrf.mxu0
        %3126 = vmatprep.mubr.f32.mxu0 0.0
        %3127 = vmatmul.mubr.f32.gmra.mxu0 %v2979
        %v3128 = vpop.f32.mrf.mxu0
        %v3129 = vadd.f32 %v3025, %v3128
        %v3130 = vpop.f32.mrf.mxu0
        %3131 = vmatprep.mubr.f32.mxu0 0.0
        %3132 = vmatmul.mubr.f32.gmra.mxu0 %v2980
        %v3133 = vpop.f32.mrf.mxu0
        %v3134 = vadd.f32 %v3025, %v3133
        %v3135 = vpop.f32.mrf.mxu0
        %3136 = vmatprep.mubr.f32.mxu0 0.0
        %3137 = vmatmul.mubr.f32.gmra.mxu0 %v2981
        %v3138 = vpop.f32.mrf.mxu0
        %v3139 = vadd.f32 %v3025, %v3138
        %v3140 = vpop.f32.mrf.mxu0
        %3141 = vmatprep.mubr.f32.mxu0 0.0
        %3142 = vmatmul.mubr.f32.gmra.mxu0 %v2982
        %v3143 = vpop.f32.mrf.mxu0
        %v3144 = vadd.f32 %v3025, %v3143
        %v3145 = vpop.f32.mrf.mxu0
        %3146 = vmatprep.mubr.f32.mxu0 0.0
        %3147 = vmatmul.mubr.f32.gmra.mxu0 %v2983
        %v3148 = vpop.f32.mrf.mxu0
        %v3149 = vadd.f32 %v3025, %v3148
        %v3150 = vpop.f32.mrf.mxu0
        %3151 = vmatprep.mubr.f32.mxu0 0.0
        %3152 = vmatmul.mubr.f32.gmra.mxu0 %v2984
        %v3153 = vpop.f32.mrf.mxu0
        %v3154 = vadd.f32 %v3025, %v3153
        %v3155 = vpop.f32.mrf.mxu0
        %3156 = vmatprep.mubr.f32.mxu0 0.0
        %3157 = vmatmul.mubr.f32.gmra.mxu0 %v2985
        %v3158 = vpop.f32.mrf.mxu0
        %v3159 = vadd.f32 %v3025, %v3158
        %v3160 = vpop.f32.mrf.mxu0
        %3161 = vmatprep.mubr.f32.mxu0 0.0
        %3162 = vmatmul.mubr.f32.gmra.mxu0 %v2986
        %v3163 = vpop.f32.mrf.mxu0
        %v3164 = vadd.f32 %v3025, %v3163
        %v3165 = vpop.f32.mrf.mxu0
        %3166 = vmatprep.mubr.f32.mxu0 0.0
        %3167 = vmatmul.mubr.f32.gmra.mxu0 %v2987
        %v3168 = vpop.f32.mrf.mxu0
        %v3169 = vadd.f32 %v3025, %v3168
        %v3170 = vpop.f32.mrf.mxu0
        %3171 = vmatprep.mubr.f32.mxu0 0.0
        %3172 = vmatmul.mubr.f32.gmra.mxu0 %v2988
        %v3173 = vpop.f32.mrf.mxu0
        %v3174 = vadd.f32 %v3025, %v3173
        %v3175 = vpop.f32.mrf.mxu0
        %3176 = vmatprep.mubr.f32.mxu0 0.0
        %3177 = vmatmul.mubr.f32.gmra.mxu0 %v2989
        %v3178 = vpop.f32.mrf.mxu0
        %v3179 = vadd.f32 %v3025, %v3178
        %v3180 = vpop.f32.mrf.mxu0
        %3181 = vmatprep.mubr.f32.mxu0 0.0
        %3182 = vmatmul.mubr.f32.gmra.mxu0 %v2990
        %v3183 = vpop.f32.mrf.mxu0
        %v3184 = vadd.f32 %v3025, %v3183
        %v3185 = vpop.f32.mrf.mxu0
        %3186 = vmatprep.mubr.f32.mxu0 0.0
        %3187 = vmatmul.mubr.f32.gmra.mxu0 %v2991
        %v3188 = vpop.f32.mrf.mxu0
        %v3189 = vadd.f32 %v3025, %v3188
        %v3190 = vpop.f32.mrf.mxu0
        %3191 = vmatprep.mubr.f32.mxu0 0.0
        %3192 = vmatmul.mubr.f32.gmra.mxu0 %v2992
        %v3193 = vpop.f32.mrf.mxu0
        %v3194 = vadd.f32 %v3025, %v3193
        %v3195 = vpop.f32.mrf.mxu0
        %3196 = vmatprep.mubr.f32.mxu0 0.0
        %3197 = vmatmul.mubr.f32.gmra.mxu0 %v2993
        %v3198 = vpop.f32.mrf.mxu0
        %v3199 = vadd.f32 %v3025, %v3198
        %v3200 = vpop.f32.mrf.mxu0
        %3201 = vmatprep.mubr.f32.mxu0 0.0
        %3202 = vmatmul.mubr.f32.gmra.mxu0 %v2994
        %v3203 = vpop.f32.mrf.mxu0
        %v3204 = vadd.f32 %v3025, %v3203
        %v3205 = vpop.f32.mrf.mxu0
        %3206 = vmatprep.mubr.f32.mxu0 0.0
        %3207 = vmatmul.mubr.f32.gmra.mxu0 %v2995
        %v3208 = vpop.f32.mrf.mxu0
        %v3209 = vadd.f32 %v3025, %v3208
        %v3210 = vpop.f32.mrf.mxu0
        %3211 = vmatprep.mubr.f32.mxu0 0.0
        %3212 = vmatmul.mubr.f32.gmra.mxu0 %v2996
        %v3213 = vpop.f32.mrf.mxu0
        %v3214 = vadd.f32 %v3025, %v3213
        %v3215 = vpop.f32.mrf.mxu0
        %3216 = vmatprep.mubr.f32.mxu0 0.0
        %3217 = vmatmul.mubr.f32.gmra.mxu0 %v2997
        %v3218 = vpop.f32.mrf.mxu0
        %v3219 = vadd.f32 %v3025, %v3218
        %v3220 = vpop.f32.mrf.mxu0
        %3221 = vmatprep.mubr.f32.mxu0 0.0
        %3222 = vmatmul.mubr.f32.gmra.mxu0 %v2998
        %v3223 = vpop.f32.mrf.mxu0
        %v3224 = vadd.f32 %v3025, %v3223
        %v3225 = vpop.f32.mrf.mxu0
        %3226 = vmatprep.mubr.f32.mxu0 0.0
        %3227 = vmatmul.mubr.f32.gmra.mxu0 %v2999
        %v3228 = vpop.f32.mrf.mxu0
        %v3229 = vadd.f32 %v3025, %v3228
        %v3230 = vpop.f32.mrf.mxu0
        %3231 = vmatprep.mubr.f32.mxu0 0.0
        %3232 = vmatmul.mubr.f32.gmra.mxu0 %v3000
        %v3233 = vpop.f32.mrf.mxu0
        %v3234 = vadd.f32 %v3025, %v3233
        %v3235 = vpop.f32.mrf.mxu0
        %3236 = vmatprep.mubr.f32.mxu0 0.0
        %3237 = vmatmul.mubr.f32.gmra.mxu0 %v3001
        %v3238 = vpop.f32.mrf.mxu0
        %v3239 = vadd.f32 %v3025, %v3238
        %v3240 = vpop.f32.mrf.mxu0
        %3241 = vmatprep.mubr.f32.mxu0 0.0
        %3242 = vmatmul.mubr.f32.gmra.mxu0 %v3002
        %v3243 = vpop.f32.mrf.mxu0
        %v3244 = vadd.f32 %v3025, %v3243
        %v3245 = vpop.f32.mrf.mxu0
        %3246 = vmatprep.mubr.f32.mxu0 0.0
        %3247 = vmatmul.mubr.f32.gmra.mxu0 %v3003
        %v3248 = vpop.f32.mrf.mxu0
        %v3249 = vadd.f32 %v3025, %v3248
        %v3250 = vpop.f32.mrf.mxu0
        %3251 = vdwg.mxu0
        %3252 = vst [vmem:[%s545] sm:$0xff] %v3094
        %3253 = vst [vmem:[%s545 + $0x8] sm:$0xff] %v3099
        %3254 = vst [vmem:[%s545 + $0x10] sm:$0xff] %v3104
        %3255 = vst [vmem:[%s545 + $0x18] sm:$0xff] %v3109
        %3256 = vst [vmem:[%s545 + $0x20] sm:$0xff] %v3114
        %3257 = vst [vmem:[%s545 + $0x28] sm:$0xff] %v3119
        %3258 = vst [vmem:[%s545 + $0x30] sm:$0xff] %v3124
        %3259 = vst [vmem:[%s545 + $0x38] sm:$0xff] %v3129
        %3260 = vst [vmem:[%s545 + $0x40] sm:$0xff] %v3134
        %3261 = vst [vmem:[%s545 + $0x48] sm:$0xff] %v3139
        %3262 = vst [vmem:[%s545 + $0x50] sm:$0xff] %v3144
        %3263 = vst [vmem:[%s545 + $0x58] sm:$0xff] %v3149
        %3264 = vst [vmem:[%s545 + $0x60] sm:$0xff] %v3154
        %3265 = vst [vmem:[%s545 + $0x68] sm:$0xff] %v3159
        %3266 = vst [vmem:[%s545 + $0x70] sm:$0xff] %v3164
        %3267 = vst [vmem:[%s545 + $0x78] sm:$0xff] %v3169
        %3268 = vst [vmem:[%s545 + $0x80] sm:$0xff] %v3174
        %3269 = vst [vmem:[%s545 + $0x88] sm:$0xff] %v3179
        %3270 = vst [vmem:[%s545 + $0x90] sm:$0xff] %v3184
        %3271 = vst [vmem:[%s545 + $0x98] sm:$0xff] %v3189
        %3272 = vst [vmem:[%s545 + $0xa0] sm:$0xff] %v3194
        %3273 = vst [vmem:[%s545 + $0xa8] sm:$0xff] %v3199
        %3274 = vst [vmem:[%s545 + $0xb0] sm:$0xff] %v3204
        %3275 = vst [vmem:[%s545 + $0xb8] sm:$0xff] %v3209
        %3276 = vst [vmem:[%s545 + $0xc0] sm:$0xff] %v3214
        %3277 = vst [vmem:[%s545 + $0xc8] sm:$0xff] %v3219
        %3278 = vst [vmem:[%s545 + $0xd0] sm:$0xff] %v3224
        %3279 = vst [vmem:[%s545 + $0xd8] sm:$0xff] %v3229
        %3280 = vst [vmem:[%s545 + $0xe0] sm:$0xff] %v3234
        %3281 = vst [vmem:[%s545 + $0xe8] sm:$0xff] %v3239
        %3282 = vst [vmem:[%s545 + $0xf0] sm:$0xff] %v3244
        %3283 = vst [vmem:[%s545 + $0xf8] sm:$0xff] %v3249
        %s3284 = sand.u32 %s319, 1
        %s3285 = scalar_lea.sflag [#allocation4], %s3284
        %s3286 = sand.u32 %s319, 1
        %s3287 = smul.addr %s3286, 256
        %s3288 = scalar_lea.vmem [#allocation14], %s3287
        // Predicated region
        $region101: #{tpu_custom_call.1} parent=71 // pred_check
          %p3289 = pneg %p329
        $region102: #{tpu_custom_call.1} parent=71 // pred_check_branch
          %3291 = sbr.rel (%p3289) target = $region104
        $region103: #{tpu_custom_call.1} parent=71 // pred_region
          %s3292 = smul.u32 32, %s33
          %s3294 = ssub.s32 4096, 4096
          %3295 = vsyncadd %s3285, %s3294
          %s3296 = smul.addr %s3292, 128
          %s3297 = scalar_lea.hbm %s13, %s3296
          %s3298 = sshll.u32 %s3288, 4
          %s3299 = int_to_ptr.vmem [resolvable:$true] %s3298
          %3304 = dma.vmem_to_hbm [thread:$0]  %s3299, 4096, %s3297, %s3285, 128, 128, 8
        $region104: #{tpu_custom_call.1} parent=71 // pred_fallthru
          _
      $region72: #{tpu_custom_call.1} parent=5 // pred_fallthru
        _
      %p3305 = scmp.le.s32.totalorder 2, %s28
      // Predicated region
      $region105: #{tpu_custom_call.1} parent=5 // pred_check
        %p3306 = pneg %p3305
      $region106: #{tpu_custom_call.1} parent=5 // pred_check_branch
        %3308 = sbr.rel (%p3306) target = $region108
      $region107: #{tpu_custom_call.1} parent=5 // pred_region
        %s3309 = ssub.s32 %s28, 2
        // Predicated region
        $region109: #{tpu_custom_call.1} parent=107 // pred_check
          %p3310 = pneg %p335
        $region110: #{tpu_custom_call.1} parent=107 // pred_check_branch
          %3312 = sbr.rel (%p3310) target = $region112
        $region111: #{tpu_custom_call.1} parent=107 // pred_region
          %s3313 = sand.u32 %s320, 1
          %s3314 = scalar_lea.sflag [#allocation4], %s3313
          %s3315 = sand.u32 %s320, 1
          %s3316 = smul.addr %s3315, 256
          %s3317 = scalar_lea.vmem [#allocation14], %s3316
          %3318 = dma.done %s3314, 4096
        $region112: #{tpu_custom_call.1} parent=107 // pred_fallthru
          _
      $region108: #{tpu_custom_call.1} parent=5 // pred_fallthru
        _
    $region6: #{tpu_custom_call.1} parent=1 // loop_footer
      %s32 = sadd.s32 1, %s28
    $region7: #{tpu_custom_call.1} parent=1 // loop_footer_branch
      %27 = sbr.rel target = $region3
    $region8: #{tpu_custom_call.1} parent=1 // loop_exit
      _
    %3319 = vsyncpa [#allocation3], 1
    %s3320 = scalar_lea.sflag [#allocation3], 1
    %3321 = vsyncpa %s3320, 1
    %3322 = vsyncpa [#allocation6], 1
    %3323 = vsyncpa [#allocation9], 1
    %3324 = vsyncpa [#allocation12], 1
    %3325 = vsyncpa [#allocation4], 1
    %s3326 = scalar_lea.sflag [#allocation4], 1
    %3327 = vsyncpa %s3326, 1

</llo_original>
